<compile_context>
chip_gen: v7x
topology: tpu7x:2x2x1
jax: 0.10.0
libtpu: 0.0.40
codegen_flags: <defaults>
</compile_context>

<pallas_src>
import functools

import jax
import jax.numpy as jnp
from jax.experimental import pallas as pl
from jax.experimental.pallas import tpu as pltpu


_PAD_MODE = {"reflection": "reflect", "zero": "constant",
             "replication": "edge", "circular": "wrap"}

_NUM_ACC = 4  # independent f32 accumulators (VPU latency hiding)


def _round_up(v, m):
    return ((v + m - 1) // m) * m


def _tree_sum(vals):
    while len(vals) > 1:
        nxt = [vals[i] + vals[i + 1] for i in range(0, len(vals) - 1, 2)]
        if len(vals) % 2:
            nxt.append(vals[-1])
        vals = nxt
    return vals[0]


def _vmem_limit_bytes():
    """Per-core VMEM budget with headroom, derived from the device."""
    cap = 64 * 1024 * 1024  # conservative (v7x-sized) fallback
    try:
        info = pltpu.get_tpu_info()
        for name in ("vmem_capacity_bytes", "vmem_size_bytes", "vmem_bytes"):
            v = getattr(info, name, None)
            if isinstance(v, (int, float)) and v > 0:
                cap = int(v)
                break
    except Exception:
        pass
    return max(32 * 1024 * 1024, min(cap - 16 * 1024 * 1024, 112 * 1024 * 1024))


def _shifted_patch(slab, dx, W, W_pp):
    """slab[:, dx:dx+W] via an XLU lane-roll (no unaligned lane-offset load)."""
    if dx == 0:
        return slab[:, :W]
    return pltpu.roll(slab, W_pp - dx, 1)[:, :W]


# ------------------------- spatially-varying kernels ------------------------

def _sv_blur_kernel(pad_ref, k_ref, out_ref, *scratch, H, W, l, W_pp, precast):
    # grid (B, C): m = tap group (outer, "parallel"), j = plane within group.
    # pad_ref : (1, H_p, W_pp) x.dtype   padded plane n = m + j*B
    # k_ref   : (1, l*l, H, W) tap dtype resident across j (one HBM DMA per m)
    # out_ref : (1, H, W)      x.dtype
    # scratch : optional (l*l, H, W) f32 -- taps pre-cast once per group
    ll = l * l
    if precast:
        tap_f32 = scratch[0]

        @pl.when(pl.program_id(1) == 0)          # first plane of the tap group
        def _():
            for t in range(ll):
                tap_f32[t] = k_ref[0, t].astype(jnp.float32)

        def get_tap(t):
            return tap_f32[t]
    else:
        def get_tap(t):
            return k_ref[0, t].astype(jnp.float32)

    accs = [jnp.zeros((H, W), jnp.float32) for _ in range(_NUM_ACC)]
    for dy in range(l):
        # one aligned slab load per dy (lane offset 0), reused for all l dx
        slab = pad_ref[0, pl.ds(dy, H), :].astype(jnp.float32)
        for dx in range(l):
            t = dy * l + dx
            patch = _shifted_patch(slab, dx, W, W_pp)
            accs[t % _NUM_ACC] = accs[t % _NUM_ACC] + patch * get_tap(t)
    out_ref[0] = _tree_sum(accs).astype(out_ref.dtype)


def _sv_blur_chunked_kernel(pad_ref, k_ref, out_ref, acc_ref, *, H, W, l, W_pp):
    # Size-robust fallback: grid (N, l); q = kernel row dy (innermost reduction
    # axis).  Only the (l, H, W) taps of one dy are VMEM-resident at a time.
    # pad/out block indices are constant across q -> fetched/written once per n.
    q = pl.program_id(1)

    @pl.when(q == 0)
    def _():
        acc_ref[...] = jnp.zeros_like(acc_ref)

    slab = pad_ref[0, pl.ds(q, H), :].astype(jnp.float32)   # dynamic row start
    acc = acc_ref[...]
    for dx in range(l):
        patch = _shifted_patch(slab, dx, W, W_pp)
        acc = acc + patch * k_ref[0, dx].astype(jnp.float32)
    acc_ref[...] = acc

    @pl.when(q == l - 1)
    def _():
        out_ref[0] = acc.astype(out_ref.dtype)


# ------------------------------ uniform kernel ------------------------------

def _uniform_blur_kernel(pad_ref, bands_ref, out_ref, *, H, W, l):
    # MXU formulation: out = sum_dy pad[dy:dy+H, :] @ Band_dy, where Band_dy is
    # a (W_pp, W) banded matrix built from kernel row dy.  bf16 operands (exact
    # products), f32 accumulation -- frees the VPU on v6e/v7x.
    acc = jnp.zeros((H, W), jnp.float32)
    for dy in range(l):
        slab = pad_ref[0, pl.ds(dy, H), :].astype(jnp.bfloat16)
        acc = acc + jnp.dot(slab, bands_ref[dy],
                            preferred_element_type=jnp.float32)
    out_ref[0] = acc.astype(out_ref.dtype)


# --------------------------------- wrapper ----------------------------------

def batch_blur_sv(x, kernel, l=7, padmode="reflection", *,
                  kernel_layout="auto", tap_dtype=jnp.bfloat16, chunked=None):
    """Pallas implementation of BatchBlur_SV.forward.

    x      : (B, C, H, W)
    kernel : (l, l)                   -> uniform blur (F.conv2d path)
             (B, H*W, l, l) "torch"   -> spatially-varying (unfold/fold path)
             (B, l*l, H, W) "planes"  -> same SV branch, pre-transposed taps
    kernel_layout : "auto" | "torch" | "planes"  (explicit override for the
                    SV tap layout; "auto" prefers the torch layout if ambiguous)
    tap_dtype     : dtype the SV taps are streamed in (bf16 default; pass
                    jnp.float32 for precision-sensitive callers)
    chunked       : None (auto by VMEM budget) | True | False
    returns (B, C, H, W) in x.dtype
    """
    B, C, H, W = x.shape
    p = l // 2
    pads = (p, p) if l % 2 == 1 else (p, p - 1)
    # pad in x.dtype (no f32 up-cast pre-pass), then constant-pad the last axis
    # up to a 128-lane multiple (unstrided DMA rows, cheap in-kernel lane rolls)
    padded = jnp.pad(x, ((0, 0), (0, 0), pads, pads), mode=_PAD_MODE[padmode])
    H_p, W_p = padded.shape[-2], padded.shape[-1]
    W_pp = _round_up(W_p, 128)
    if W_pp != W_p:
        padded = jnp.pad(padded, ((0, 0), (0, 0), (0, 0), (0, W_pp - W_p)))
    N = B * C
    pad_flat = padded.reshape(N, H_p, W_pp)
    ll = l * l

    vmem_limit = _vmem_limit_bytes()

    def cparams(sem):
        return pltpu.CompilerParams(dimension_semantics=sem,
                                    vmem_limit_bytes=vmem_limit)

    xb = jnp.dtype(x.dtype).itemsize
    pad_blk = _round_up(H_p, 8) * W_pp * xb
    out_blk = _round_up(H, 8) * _round_up(W, 128) * xb

    # ------------------------- uniform kernel branch -------------------------
    if kernel.ndim == 2:
        assert kernel.shape == (l, l)
        kf = kernel.astype(jnp.float32)
        wp_idx = jnp.arange(W_pp)[:, None]
        w_idx = jnp.arange(W)[None, :]
        d = wp_idx - w_idx                                   # (W_pp, W)
        valid = (d >= 0) & (d < l)
        dd = jnp.clip(d, 0, l - 1)
        # bands[dy, w', w] = kernel[dy, w'-w] if 0 <= w'-w < l else 0
        bands = jnp.where(valid[None, :, :], kf[:, dd], 0.0).astype(jnp.bfloat16)

        out = pl.pallas_call(
            functools.partial(_uniform_blur_kernel, H=H, W=W, l=l),
            out_shape=jax.ShapeDtypeStruct((N, H, W), x.dtype),
            grid=(N,),
            in_specs=[
                pl.BlockSpec((1, H_p, W_pp), lambda n: (n, 0, 0)),
                pl.BlockSpec((l, W_pp, W), lambda n: (0, 0, 0)),   # resident
            ],
            out_specs=pl.BlockSpec((1, H, W), lambda n: (n, 0, 0)),
            compiler_params=cparams(("parallel",)),
            cost_estimate=pl.CostEstimate(
                flops=int(2 * N * H * W * W_pp * l), transcendentals=0,
                bytes_accessed=int(pad_flat.size * xb + N * H * W * xb
                                   + bands.size * 2)),
        )(pad_flat, bands)
        return out.reshape(B, C, H, W)

    # ------------------------ spatially-varying branch -----------------------
    assert C == 3, "original module's kernel.expand(3, ...) requires C == 3"
    if kernel_layout == "auto":
        if kernel.shape == (B, H * W, l, l):       # prefer torch layout if ambiguous
            kernel_layout = "torch"
        elif kernel.shape == (B, ll, H, W):
            kernel_layout = "planes"
        else:
            raise ValueError(f"unrecognized SV kernel shape {kernel.shape}")
    if kernel_layout == "torch":
        assert kernel.shape == (B, H * W, l, l)
        # single layout-change pre-pass, fused with the (optional) tap down-cast
        taps = (kernel.reshape(B, H, W, ll)
                .transpose(0, 3, 1, 2)
                .astype(tap_dtype))                           # (B, l*l, H, W)
    else:
        assert kernel.shape == (B, ll, H, W)
        taps = kernel.astype(tap_dtype)           # already in plane layout

    tb = jnp.dtype(taps.dtype).itemsize
    tap_blk = ll * _round_up(H, 8) * _round_up(W, 128) * tb
    tap_f32_blk = ll * _round_up(H, 8) * _round_up(W, 128) * 4
    budget = int(0.7 * vmem_limit)
    resident_need = 2 * tap_blk + 2 * pad_blk + 2 * out_blk
    if chunked is None:
        chunked = resident_need > budget
    flops = int(2 * ll * N * H * W)

    if not chunked:
        precast = (jnp.dtype(tap_dtype) != jnp.dtype(jnp.float32)
                   and resident_need + tap_f32_blk <= budget)
        scratch = [pltpu.VMEM((ll, H, W), jnp.float32)] if precast else []
        out = pl.pallas_call(
            functools.partial(_sv_blur_kernel, H=H, W=W, l=l, W_pp=W_pp,
                              precast=precast),
            out_shape=jax.ShapeDtypeStruct((N, H, W), x.dtype),
            # grid (m, j): m = tap group (= n % B), j enumerates the C planes
            # sharing that group; image/output row n = m + j*B.
            grid=(B, C),
            in_specs=[
                pl.BlockSpec((1, H_p, W_pp), lambda m, j: (m + j * B, 0, 0)),
                pl.BlockSpec((1, ll, H, W), lambda m, j: (m, 0, 0, 0)),  # resident
            ],
            out_specs=pl.BlockSpec((1, H, W), lambda m, j: (m + j * B, 0, 0)),
            scratch_shapes=scratch,
            compiler_params=cparams(("parallel", "arbitrary")),
            cost_estimate=pl.CostEstimate(
                flops=flops, transcendentals=0,
                bytes_accessed=int(taps.size * tb + pad_flat.size * xb
                                   + N * H * W * xb)),
        )(pad_flat, taps)
    else:
        # TODO(synk): beyond this, very large planes need halo'd H-tiling too.
        out = pl.pallas_call(
            functools.partial(_sv_blur_chunked_kernel, H=H, W=W, l=l, W_pp=W_pp),
            out_shape=jax.ShapeDtypeStruct((N, H, W), x.dtype),
            grid=(N, l),
            in_specs=[
                pl.BlockSpec((1, H_p, W_pp), lambda n, q: (n, 0, 0)),
                pl.BlockSpec((1, l, H, W), lambda n, q: (n % B, q, 0, 0)),
            ],
            out_specs=pl.BlockSpec((1, H, W), lambda n, q: (n, 0, 0)),
            scratch_shapes=[pltpu.VMEM((H, W), jnp.float32)],
            compiler_params=cparams(("parallel", "arbitrary")),
            cost_estimate=pl.CostEstimate(
                flops=flops, transcendentals=0,
                bytes_accessed=int(C * taps.size * tb + pad_flat.size * xb
                                   + N * H * W * xb)),
        )(pad_flat, taps)
    return out.reshape(B, C, H, W)


# ----------------------------- pure-JAX references --------------------------

def _reference_sv(x, kernel, l, padmode="reflection", bf16_taps=False):
    B, C, H, W = x.shape
    p = l // 2
    pads = (p, p) if l % 2 == 1 else (p, p - 1)
    padded = jnp.pad(x.astype(jnp.float32), ((0, 0), (0, 0), pads, pads),
                     mode=_PAD_MODE[padmode])
    H_p, W_p = padded.shape[-2:]
    N = B * C
    pf = padded.reshape(N, H_p, W_p)
    patches = jnp.stack([pf[:, dy:dy + H, dx:dx + W]
                         for dy in range(l) for dx in range(l)], axis=-1)
    kf = kernel.reshape(B, H * W, l * l).astype(jnp.float32)
    if bf16_taps:
        kf = kf.astype(jnp.bfloat16).astype(jnp.float32)
    kf = jnp.broadcast_to(kf[None], (3, B, H * W, l * l)).reshape(N, H, W, l * l)
    return (patches * kf).sum(-1).reshape(B, C, H, W)


def _reference_uniform(x, kernel, l, padmode="reflection", bf16=False):
    B, C, H, W = x.shape
    p = l // 2
    pads = (p, p) if l % 2 == 1 else (p, p - 1)
    padded = jnp.pad(x.astype(jnp.float32), ((0, 0), (0, 0), pads, pads),
                     mode=_PAD_MODE[padmode])
    pf = padded.reshape(B * C, *padded.shape[-2:])
    kf = kernel.astype(jnp.float32)
    if bf16:
        pf = pf.astype(jnp.bfloat16).astype(jnp.float32)
        kf = kf.astype(jnp.bfloat16).astype(jnp.float32)
    out = sum(pf[:, dy:dy + H, dx:dx + W] * kf[dy, dx]
              for dy in range(l) for dx in range(l))
    return out.reshape(B, C, H, W)


if __name__ == "__main__":
    B, C, H, W = 2, 3, 16, 16     # C must be 3 (module hardcodes expand(3, ...))
    L = 7

    key = jax.random.PRNGKey(0)
    kx, kk, ku, ke = jax.random.split(key, 4)
    x = jax.random.normal(kx, (B, C, H, W), dtype=jnp.float32)

    # --- spatially-varying branch (odd l), resident-tap path ---
    raw = jax.random.uniform(kk, (B, H * W, L, L), dtype=jnp.float32)
    sv_kernel = raw / raw.sum(axis=(-2, -1), keepdims=True)
    out_sv = jax.block_until_ready(batch_blur_sv(x, sv_kernel, l=L))
    assert out_sv.shape == (B, C, H, W)
    ref_bf = _reference_sv(x, sv_kernel, L, bf16_taps=True)    # same tap precision
    ref_f32 = _reference_sv(x, sv_kernel, L, bf16_taps=False)
    assert jnp.allclose(out_sv, ref_bf, atol=1e-3, rtol=1e-3)
    assert jnp.allclose(out_sv, ref_f32, atol=2e-2, rtol=2e-2)

    # --- SV branch, forced chunked-reduction fallback (size-robust path) ---
    out_sv_c = jax.block_until_ready(batch_blur_sv(x, sv_kernel, l=L, chunked=True))
    assert jnp.allclose(out_sv_c, ref_bf, atol=1e-3, rtol=1e-3)

    # --- SV branch with f32 taps (precision-sensitive option) ---
    out_sv_f = jax.block_until_ready(
        batch_blur_sv(x, sv_kernel, l=L, tap_dtype=jnp.float32))
    assert jnp.allclose(out_sv_f, ref_f32, atol=1e-4, rtol=1e-4)

    # --- uniform kernel branch (MXU banded matmul, bf16 operands / f32 acc) ---
    uk = jax.random.uniform(ku, (L, L), dtype=jnp.float32)
    uk = uk / uk.sum()
    out_u = jax.block_until_ready(batch_blur_sv(x, uk, l=L))
    assert jnp.allclose(out_u, _reference_uniform(x, uk, L, bf16=True),
                        atol=1e-3, rtol=1e-3)
    assert jnp.allclose(out_u, _reference_uniform(x, uk, L, bf16=False),
                        atol=2e-2, rtol=2e-2)

    # --- spatially-varying branch, even l (asymmetric padding path) ---
    L2 = 4
    raw2 = jax.random.uniform(ke, (B, H * W, L2, L2), dtype=jnp.float32)
    sv2 = raw2 / raw2.sum(axis=(-2, -1), keepdims=True)
    out2 = jax.block_until_ready(batch_blur_sv(x, sv2, l=L2))
    assert jnp.allclose(out2, _reference_sv(x, sv2, L2, bf16_taps=True),
                        atol=1e-3, rtol=1e-3)

    print("KERNEL_OK")
</pallas_src>

<mosaic_0001>
module attributes {stable_mosaic.version = 11 : i64} {
  func.func @_sv_blur_kernel(%arg0: i32, %arg1: i32, %arg2: memref<1x22x128xf32, #tpu.memory_space<vmem>>, %arg3: memref<1x49x16x16xbf16, #tpu.memory_space<vmem>>, %arg4: memref<1x16x16xf32, #tpu.memory_space<vmem>>, %arg5: memref<49x16x16xf32, #tpu.memory_space<vmem>>) attributes {dimension_semantics = [#tpu.dimension_semantics<parallel>, #tpu.dimension_semantics<arbitrary>], iteration_bounds = array<i64: 2, 3>, scalar_prefetch = 0 : i64, scratch_operands = 1 : i64, tpu.core_type = #tpu.core_type<tc>, window_params = [{transform_indices = @transform_0, window_bounds = array<i64: 1, 22, 128>}, {transform_indices = @transform_1, window_bounds = array<i64: 1, 49, 16, 16>}, {transform_indices = @transform_2, window_bounds = array<i64: 1, 16, 16>}]} {
    %c0_i32 = arith.constant 0 : i32
    %0 = arith.cmpi eq, %arg1, %c0_i32 : i32
    %1 = arith.extui %0 : i1 to i32
    %c0_i32_0 = arith.constant 0 : i32
    %2 = arith.cmpi ne, %1, %c0_i32_0 : i32
    scf.if %2 {
      %c0_162 = arith.constant 0 : index
      %c0_163 = arith.constant 0 : index
      %c0_164 = arith.constant 0 : index
      %c0_165 = arith.constant 0 : index
      %314 = vector.load %arg3[%c0_162, %c0_163, %c0_164, %c0_165] : memref<1x49x16x16xbf16, #tpu.memory_space<vmem>>, vector<1x1x16x16xbf16>
      %315 = vector.shape_cast %314 : vector<1x1x16x16xbf16> to vector<16x16xbf16>
      %316 = arith.extf %315 : vector<16x16xbf16> to vector<16x16xf32>
      %c0_166 = arith.constant 0 : index
      %c0_167 = arith.constant 0 : index
      %c0_168 = arith.constant 0 : index
      %317 = vector.load %arg5[%c0_166, %c0_167, %c0_168] : memref<49x16x16xf32, #tpu.memory_space<vmem>>, vector<1x16x16xf32>
      %318 = vector.shape_cast %317 : vector<1x16x16xf32> to vector<16x16xf32>
      %319 = vector.shape_cast %316 : vector<16x16xf32> to vector<1x16x16xf32>
      tpu.vector_store %arg5[%c0_166, %c0_167, %c0_168], %319 {strides = array<i32>} : memref<49x16x16xf32, #tpu.memory_space<vmem>>, vector<1x16x16xf32>,
      %c0_169 = arith.constant 0 : index
      %c1_170 = arith.constant 1 : index
      %c0_171 = arith.constant 0 : index
      %c0_172 = arith.constant 0 : index
      %320 = vector.load %arg3[%c0_169, %c1_170, %c0_171, %c0_172] : memref<1x49x16x16xbf16, #tpu.memory_space<vmem>>, vector<1x1x16x16xbf16>
      %321 = vector.shape_cast %320 : vector<1x1x16x16xbf16> to vector<16x16xbf16>
      %322 = arith.extf %321 : vector<16x16xbf16> to vector<16x16xf32>
      %c1_173 = arith.constant 1 : index
      %c0_174 = arith.constant 0 : index
      %c0_175 = arith.constant 0 : index
      %323 = vector.load %arg5[%c1_173, %c0_174, %c0_175] : memref<49x16x16xf32, #tpu.memory_space<vmem>>, vector<1x16x16xf32>
      %324 = vector.shape_cast %323 : vector<1x16x16xf32> to vector<16x16xf32>
      %325 = vector.shape_cast %322 : vector<16x16xf32> to vector<1x16x16xf32>
      tpu.vector_store %arg5[%c1_173, %c0_174, %c0_175], %325 {strides = array<i32>} : memref<49x16x16xf32, #tpu.memory_space<vmem>>, vector<1x16x16xf32>,
      %c0_176 = arith.constant 0 : index
      %c2_177 = arith.constant 2 : index
      %c0_178 = arith.constant 0 : index
      %c0_179 = arith.constant 0 : index
      %326 = vector.load %arg3[%c0_176, %c2_177, %c0_178, %c0_179] : memref<1x49x16x16xbf16, #tpu.memory_space<vmem>>, vector<1x1x16x16xbf16>
      %327 = vector.shape_cast %326 : vector<1x1x16x16xbf16> to vector<16x16xbf16>
      %328 = arith.extf %327 : vector<16x16xbf16> to vector<16x16xf32>
      %c2_180 = arith.constant 2 : index
      %c0_181 = arith.constant 0 : index
      %c0_182 = arith.constant 0 : index
      %329 = vector.load %arg5[%c2_180, %c0_181, %c0_182] : memref<49x16x16xf32, #tpu.memory_space<vmem>>, vector<1x16x16xf32>
      %330 = vector.shape_cast %329 : vector<1x16x16xf32> to vector<16x16xf32>
      %331 = vector.shape_cast %328 : vector<16x16xf32> to vector<1x16x16xf32>
      tpu.vector_store %arg5[%c2_180, %c0_181, %c0_182], %331 {strides = array<i32>} : memref<49x16x16xf32, #tpu.memory_space<vmem>>, vector<1x16x16xf32>,
      %c0_183 = arith.constant 0 : index
      %c3_184 = arith.constant 3 : index
      %c0_185 = arith.constant 0 : index
      %c0_186 = arith.constant 0 : index
      %332 = vector.load %arg3[%c0_183, %c3_184, %c0_185, %c0_186] : memref<1x49x16x16xbf16, #tpu.memory_space<vmem>>, vector<1x1x16x16xbf16>
      %333 = vector.shape_cast %332 : vector<1x1x16x16xbf16> to vector<16x16xbf16>
      %334 = arith.extf %333 : vector<16x16xbf16> to vector<16x16xf32>
      %c3_187 = arith.constant 3 : index
      %c0_188 = arith.constant 0 : index
      %c0_189 = arith.constant 0 : index
      %335 = vector.load %arg5[%c3_187, %c0_188, %c0_189] : memref<49x16x16xf32, #tpu.memory_space<vmem>>, vector<1x16x16xf32>
      %336 = vector.shape_cast %335 : vector<1x16x16xf32> to vector<16x16xf32>
      %337 = vector.shape_cast %334 : vector<16x16xf32> to vector<1x16x16xf32>
      tpu.vector_store %arg5[%c3_187, %c0_188, %c0_189], %337 {strides = array<i32>} : memref<49x16x16xf32, #tpu.memory_space<vmem>>, vector<1x16x16xf32>,
      %c0_190 = arith.constant 0 : index
      %c4_191 = arith.constant 4 : index
      %c0_192 = arith.constant 0 : index
      %c0_193 = arith.constant 0 : index
      %338 = vector.load %arg3[%c0_190, %c4_191, %c0_192, %c0_193] : memref<1x49x16x16xbf16, #tpu.memory_space<vmem>>, vector<1x1x16x16xbf16>
      %339 = vector.shape_cast %338 : vector<1x1x16x16xbf16> to vector<16x16xbf16>
      %340 = arith.extf %339 : vector<16x16xbf16> to vector<16x16xf32>
      %c4_194 = arith.constant 4 : index
      %c0_195 = arith.constant 0 : index
      %c0_196 = arith.constant 0 : index
      %341 = vector.load %arg5[%c4_194, %c0_195, %c0_196] : memref<49x16x16xf32, #tpu.memory_space<vmem>>, vector<1x16x16xf32>
      %342 = vector.shape_cast %341 : vector<1x16x16xf32> to vector<16x16xf32>
      %343 = vector.shape_cast %340 : vector<16x16xf32> to vector<1x16x16xf32>
      tpu.vector_store %arg5[%c4_194, %c0_195, %c0_196], %343 {strides = array<i32>} : memref<49x16x16xf32, #tpu.memory_space<vmem>>, vector<1x16x16xf32>,
      %c0_197 = arith.constant 0 : index
      %c5_198 = arith.constant 5 : index
      %c0_199 = arith.constant 0 : index
      %c0_200 = arith.constant 0 : index
      %344 = vector.load %arg3[%c0_197, %c5_198, %c0_199, %c0_200] : memref<1x49x16x16xbf16, #tpu.memory_space<vmem>>, vector<1x1x16x16xbf16>
      %345 = vector.shape_cast %344 : vector<1x1x16x16xbf16> to vector<16x16xbf16>
      %346 = arith.extf %345 : vector<16x16xbf16> to vector<16x16xf32>
      %c5_201 = arith.constant 5 : index
      %c0_202 = arith.constant 0 : index
      %c0_203 = arith.constant 0 : index
      %347 = vector.load %arg5[%c5_201, %c0_202, %c0_203] : memref<49x16x16xf32, #tpu.memory_space<vmem>>, vector<1x16x16xf32>
      %348 = vector.shape_cast %347 : vector<1x16x16xf32> to vector<16x16xf32>
      %349 = vector.shape_cast %346 : vector<16x16xf32> to vector<1x16x16xf32>
      tpu.vector_store %arg5[%c5_201, %c0_202, %c0_203], %349 {strides = array<i32>} : memref<49x16x16xf32, #tpu.memory_space<vmem>>, vector<1x16x16xf32>,
      %c0_204 = arith.constant 0 : index
      %c6_205 = arith.constant 6 : index
      %c0_206 = arith.constant 0 : index
      %c0_207 = arith.constant 0 : index
      %350 = vector.load %arg3[%c0_204, %c6_205, %c0_206, %c0_207] : memref<1x49x16x16xbf16, #tpu.memory_space<vmem>>, vector<1x1x16x16xbf16>
      %351 = vector.shape_cast %350 : vector<1x1x16x16xbf16> to vector<16x16xbf16>
      %352 = arith.extf %351 : vector<16x16xbf16> to vector<16x16xf32>
      %c6_208 = arith.constant 6 : index
      %c0_209 = arith.constant 0 : index
      %c0_210 = arith.constant 0 : index
      %353 = vector.load %arg5[%c6_208, %c0_209, %c0_210] : memref<49x16x16xf32, #tpu.memory_space<vmem>>, vector<1x16x16xf32>
      %354 = vector.shape_cast %353 : vector<1x16x16xf32> to vector<16x16xf32>
      %355 = vector.shape_cast %352 : vector<16x16xf32> to vector<1x16x16xf32>
      tpu.vector_store %arg5[%c6_208, %c0_209, %c0_210], %355 {strides = array<i32>} : memref<49x16x16xf32, #tpu.memory_space<vmem>>, vector<1x16x16xf32>,
      %c0_211 = arith.constant 0 : index
      %c7_212 = arith.constant 7 : index
      %c0_213 = arith.constant 0 : index
      %c0_214 = arith.constant 0 : index
      %356 = vector.load %arg3[%c0_211, %c7_212, %c0_213, %c0_214] : memref<1x49x16x16xbf16, #tpu.memory_space<vmem>>, vector<1x1x16x16xbf16>
      %357 = vector.shape_cast %356 : vector<1x1x16x16xbf16> to vector<16x16xbf16>
      %358 = arith.extf %357 : vector<16x16xbf16> to vector<16x16xf32>
      %c7_215 = arith.constant 7 : index
      %c0_216 = arith.constant 0 : index
      %c0_217 = arith.constant 0 : index
      %359 = vector.load %arg5[%c7_215, %c0_216, %c0_217] : memref<49x16x16xf32, #tpu.memory_space<vmem>>, vector<1x16x16xf32>
      %360 = vector.shape_cast %359 : vector<1x16x16xf32> to vector<16x16xf32>
      %361 = vector.shape_cast %358 : vector<16x16xf32> to vector<1x16x16xf32>
      tpu.vector_store %arg5[%c7_215, %c0_216, %c0_217], %361 {strides = array<i32>} : memref<49x16x16xf32, #tpu.memory_space<vmem>>, vector<1x16x16xf32>,
      %c0_218 = arith.constant 0 : index
      %c8_219 = arith.constant 8 : index
      %c0_220 = arith.constant 0 : index
      %c0_221 = arith.constant 0 : index
      %362 = vector.load %arg3[%c0_218, %c8_219, %c0_220, %c0_221] : memref<1x49x16x16xbf16, #tpu.memory_space<vmem>>, vector<1x1x16x16xbf16>
      %363 = vector.shape_cast %362 : vector<1x1x16x16xbf16> to vector<16x16xbf16>
      %364 = arith.extf %363 : vector<16x16xbf16> to vector<16x16xf32>
      %c8_222 = arith.constant 8 : index
      %c0_223 = arith.constant 0 : index
      %c0_224 = arith.constant 0 : index
      %365 = vector.load %arg5[%c8_222, %c0_223, %c0_224] : memref<49x16x16xf32, #tpu.memory_space<vmem>>, vector<1x16x16xf32>
      %366 = vector.shape_cast %365 : vector<1x16x16xf32> to vector<16x16xf32>
      %367 = vector.shape_cast %364 : vector<16x16xf32> to vector<1x16x16xf32>
      tpu.vector_store %arg5[%c8_222, %c0_223, %c0_224], %367 {strides = array<i32>} : memref<49x16x16xf32, #tpu.memory_space<vmem>>, vector<1x16x16xf32>,
      %c0_225 = arith.constant 0 : index
      %c9_226 = arith.constant 9 : index
      %c0_227 = arith.constant 0 : index
      %c0_228 = arith.constant 0 : index
      %368 = vector.load %arg3[%c0_225, %c9_226, %c0_227, %c0_228] : memref<1x49x16x16xbf16, #tpu.memory_space<vmem>>, vector<1x1x16x16xbf16>
      %369 = vector.shape_cast %368 : vector<1x1x16x16xbf16> to vector<16x16xbf16>
      %370 = arith.extf %369 : vector<16x16xbf16> to vector<16x16xf32>
      %c9_229 = arith.constant 9 : index
      %c0_230 = arith.constant 0 : index
      %c0_231 = arith.constant 0 : index
      %371 = vector.load %arg5[%c9_229, %c0_230, %c0_231] : memref<49x16x16xf32, #tpu.memory_space<vmem>>, vector<1x16x16xf32>
      %372 = vector.shape_cast %371 : vector<1x16x16xf32> to vector<16x16xf32>
      %373 = vector.shape_cast %370 : vector<16x16xf32> to vector<1x16x16xf32>
      tpu.vector_store %arg5[%c9_229, %c0_230, %c0_231], %373 {strides = array<i32>} : memref<49x16x16xf32, #tpu.memory_space<vmem>>, vector<1x16x16xf32>,
      %c0_232 = arith.constant 0 : index
      %c10_233 = arith.constant 10 : index
      %c0_234 = arith.constant 0 : index
      %c0_235 = arith.constant 0 : index
      %374 = vector.load %arg3[%c0_232, %c10_233, %c0_234, %c0_235] : memref<1x49x16x16xbf16, #tpu.memory_space<vmem>>, vector<1x1x16x16xbf16>
      %375 = vector.shape_cast %374 : vector<1x1x16x16xbf16> to vector<16x16xbf16>
      %376 = arith.extf %375 : vector<16x16xbf16> to vector<16x16xf32>
      %c10_236 = arith.constant 10 : index
      %c0_237 = arith.constant 0 : index
      %c0_238 = arith.constant 0 : index
      %377 = vector.load %arg5[%c10_236, %c0_237, %c0_238] : memref<49x16x16xf32, #tpu.memory_space<vmem>>, vector<1x16x16xf32>
      %378 = vector.shape_cast %377 : vector<1x16x16xf32> to vector<16x16xf32>
      %379 = vector.shape_cast %376 : vector<16x16xf32> to vector<1x16x16xf32>
      tpu.vector_store %arg5[%c10_236, %c0_237, %c0_238], %379 {strides = array<i32>} : memref<49x16x16xf32, #tpu.memory_space<vmem>>, vector<1x16x16xf32>,
      %c0_239 = arith.constant 0 : index
      %c11_240 = arith.constant 11 : index
      %c0_241 = arith.constant 0 : index
      %c0_242 = arith.constant 0 : index
      %380 = vector.load %arg3[%c0_239, %c11_240, %c0_241, %c0_242] : memref<1x49x16x16xbf16, #tpu.memory_space<vmem>>, vector<1x1x16x16xbf16>
      %381 = vector.shape_cast %380 : vector<1x1x16x16xbf16> to vector<16x16xbf16>
      %382 = arith.extf %381 : vector<16x16xbf16> to vector<16x16xf32>
      %c11_243 = arith.constant 11 : index
      %c0_244 = arith.constant 0 : index
      %c0_245 = arith.constant 0 : index
      %383 = vector.load %arg5[%c11_243, %c0_244, %c0_245] : memref<49x16x16xf32, #tpu.memory_space<vmem>>, vector<1x16x16xf32>
      %384 = vector.shape_cast %383 : vector<1x16x16xf32> to vector<16x16xf32>
      %385 = vector.shape_cast %382 : vector<16x16xf32> to vector<1x16x16xf32>
      tpu.vector_store %arg5[%c11_243, %c0_244, %c0_245], %385 {strides = array<i32>} : memref<49x16x16xf32, #tpu.memory_space<vmem>>, vector<1x16x16xf32>,
      %c0_246 = arith.constant 0 : index
      %c12_247 = arith.constant 12 : index
      %c0_248 = arith.constant 0 : index
      %c0_249 = arith.constant 0 : index
      %386 = vector.load %arg3[%c0_246, %c12_247, %c0_248, %c0_249] : memref<1x49x16x16xbf16, #tpu.memory_space<vmem>>, vector<1x1x16x16xbf16>
      %387 = vector.shape_cast %386 : vector<1x1x16x16xbf16> to vector<16x16xbf16>
      %388 = arith.extf %387 : vector<16x16xbf16> to vector<16x16xf32>
      %c12_250 = arith.constant 12 : index
      %c0_251 = arith.constant 0 : index
      %c0_252 = arith.constant 0 : index
      %389 = vector.load %arg5[%c12_250, %c0_251, %c0_252] : memref<49x16x16xf32, #tpu.memory_space<vmem>>, vector<1x16x16xf32>
      %390 = vector.shape_cast %389 : vector<1x16x16xf32> to vector<16x16xf32>
      %391 = vector.shape_cast %388 : vector<16x16xf32> to vector<1x16x16xf32>
      tpu.vector_store %arg5[%c12_250, %c0_251, %c0_252], %391 {strides = array<i32>} : memref<49x16x16xf32, #tpu.memory_space<vmem>>, vector<1x16x16xf32>,
      %c0_253 = arith.constant 0 : index
      %c13_254 = arith.constant 13 : index
      %c0_255 = arith.constant 0 : index
      %c0_256 = arith.constant 0 : index
      %392 = vector.load %arg3[%c0_253, %c13_254, %c0_255, %c0_256] : memref<1x49x16x16xbf16, #tpu.memory_space<vmem>>, vector<1x1x16x16xbf16>
      %393 = vector.shape_cast %392 : vector<1x1x16x16xbf16> to vector<16x16xbf16>
      %394 = arith.extf %393 : vector<16x16xbf16> to vector<16x16xf32>
      %c13_257 = arith.constant 13 : index
      %c0_258 = arith.constant 0 : index
      %c0_259 = arith.constant 0 : index
      %395 = vector.load %arg5[%c13_257, %c0_258, %c0_259] : memref<49x16x16xf32, #tpu.memory_space<vmem>>, vector<1x16x16xf32>
      %396 = vector.shape_cast %395 : vector<1x16x16xf32> to vector<16x16xf32>
      %397 = vector.shape_cast %394 : vector<16x16xf32> to vector<1x16x16xf32>
      tpu.vector_store %arg5[%c13_257, %c0_258, %c0_259], %397 {strides = array<i32>} : memref<49x16x16xf32, #tpu.memory_space<vmem>>, vector<1x16x16xf32>,
      %c0_260 = arith.constant 0 : index
      %c14_261 = arith.constant 14 : index
      %c0_262 = arith.constant 0 : index
      %c0_263 = arith.constant 0 : index
      %398 = vector.load %arg3[%c0_260, %c14_261, %c0_262, %c0_263] : memref<1x49x16x16xbf16, #tpu.memory_space<vmem>>, vector<1x1x16x16xbf16>
      %399 = vector.shape_cast %398 : vector<1x1x16x16xbf16> to vector<16x16xbf16>
      %400 = arith.extf %399 : vector<16x16xbf16> to vector<16x16xf32>
      %c14_264 = arith.constant 14 : index
      %c0_265 = arith.constant 0 : index
      %c0_266 = arith.constant 0 : index
      %401 = vector.load %arg5[%c14_264, %c0_265, %c0_266] : memref<49x16x16xf32, #tpu.memory_space<vmem>>, vector<1x16x16xf32>
      %402 = vector.shape_cast %401 : vector<1x16x16xf32> to vector<16x16xf32>
      %403 = vector.shape_cast %400 : vector<16x16xf32> to vector<1x16x16xf32>
      tpu.vector_store %arg5[%c14_264, %c0_265, %c0_266], %403 {strides = array<i32>} : memref<49x16x16xf32, #tpu.memory_space<vmem>>, vector<1x16x16xf32>,
      %c0_267 = arith.constant 0 : index
      %c15_268 = arith.constant 15 : index
      %c0_269 = arith.constant 0 : index
      %c0_270 = arith.constant 0 : index
      %404 = vector.load %arg3[%c0_267, %c15_268, %c0_269, %c0_270] : memref<1x49x16x16xbf16, #tpu.memory_space<vmem>>, vector<1x1x16x16xbf16>
      %405 = vector.shape_cast %404 : vector<1x1x16x16xbf16> to vector<16x16xbf16>
      %406 = arith.extf %405 : vector<16x16xbf16> to vector<16x16xf32>
      %c15_271 = arith.constant 15 : index
      %c0_272 = arith.constant 0 : index
      %c0_273 = arith.constant 0 : index
      %407 = vector.load %arg5[%c15_271, %c0_272, %c0_273] : memref<49x16x16xf32, #tpu.memory_space<vmem>>, vector<1x16x16xf32>
      %408 = vector.shape_cast %407 : vector<1x16x16xf32> to vector<16x16xf32>
      %409 = vector.shape_cast %406 : vector<16x16xf32> to vector<1x16x16xf32>
      tpu.vector_store %arg5[%c15_271, %c0_272, %c0_273], %409 {strides = array<i32>} : memref<49x16x16xf32, #tpu.memory_space<vmem>>, vector<1x16x16xf32>,
      %c0_274 = arith.constant 0 : index
      %c16_275 = arith.constant 16 : index
      %c0_276 = arith.constant 0 : index
      %c0_277 = arith.constant 0 : index
      %410 = vector.load %arg3[%c0_274, %c16_275, %c0_276, %c0_277] : memref<1x49x16x16xbf16, #tpu.memory_space<vmem>>, vector<1x1x16x16xbf16>
      %411 = vector.shape_cast %410 : vector<1x1x16x16xbf16> to vector<16x16xbf16>
      %412 = arith.extf %411 : vector<16x16xbf16> to vector<16x16xf32>
      %c16_278 = arith.constant 16 : index
      %c0_279 = arith.constant 0 : index
      %c0_280 = arith.constant 0 : index
      %413 = vector.load %arg5[%c16_278, %c0_279, %c0_280] : memref<49x16x16xf32, #tpu.memory_space<vmem>>, vector<1x16x16xf32>
      %414 = vector.shape_cast %413 : vector<1x16x16xf32> to vector<16x16xf32>
      %415 = vector.shape_cast %412 : vector<16x16xf32> to vector<1x16x16xf32>
      tpu.vector_store %arg5[%c16_278, %c0_279, %c0_280], %415 {strides = array<i32>} : memref<49x16x16xf32, #tpu.memory_space<vmem>>, vector<1x16x16xf32>,
      %c0_281 = arith.constant 0 : index
      %c17_282 = arith.constant 17 : index
      %c0_283 = arith.constant 0 : index
      %c0_284 = arith.constant 0 : index
      %416 = vector.load %arg3[%c0_281, %c17_282, %c0_283, %c0_284] : memref<1x49x16x16xbf16, #tpu.memory_space<vmem>>, vector<1x1x16x16xbf16>
      %417 = vector.shape_cast %416 : vector<1x1x16x16xbf16> to vector<16x16xbf16>
      %418 = arith.extf %417 : vector<16x16xbf16> to vector<16x16xf32>
      %c17_285 = arith.constant 17 : index
      %c0_286 = arith.constant 0 : index
      %c0_287 = arith.constant 0 : index
      %419 = vector.load %arg5[%c17_285, %c0_286, %c0_287] : memref<49x16x16xf32, #tpu.memory_space<vmem>>, vector<1x16x16xf32>
      %420 = vector.shape_cast %419 : vector<1x16x16xf32> to vector<16x16xf32>
      %421 = vector.shape_cast %418 : vector<16x16xf32> to vector<1x16x16xf32>
      tpu.vector_store %arg5[%c17_285, %c0_286, %c0_287], %421 {strides = array<i32>} : memref<49x16x16xf32, #tpu.memory_space<vmem>>, vector<1x16x16xf32>,
      %c0_288 = arith.constant 0 : index
      %c18_289 = arith.constant 18 : index
      %c0_290 = arith.constant 0 : index
      %c0_291 = arith.constant 0 : index
      %422 = vector.load %arg3[%c0_288, %c18_289, %c0_290, %c0_291] : memref<1x49x16x16xbf16, #tpu.memory_space<vmem>>, vector<1x1x16x16xbf16>
      %423 = vector.shape_cast %422 : vector<1x1x16x16xbf16> to vector<16x16xbf16>
      %424 = arith.extf %423 : vector<16x16xbf16> to vector<16x16xf32>
      %c18_292 = arith.constant 18 : index
      %c0_293 = arith.constant 0 : index
      %c0_294 = arith.constant 0 : index
      %425 = vector.load %arg5[%c18_292, %c0_293, %c0_294] : memref<49x16x16xf32, #tpu.memory_space<vmem>>, vector<1x16x16xf32>
      %426 = vector.shape_cast %425 : vector<1x16x16xf32> to vector<16x16xf32>
      %427 = vector.shape_cast %424 : vector<16x16xf32> to vector<1x16x16xf32>
      tpu.vector_store %arg5[%c18_292, %c0_293, %c0_294], %427 {strides = array<i32>} : memref<49x16x16xf32, #tpu.memory_space<vmem>>, vector<1x16x16xf32>,
      %c0_295 = arith.constant 0 : index
      %c19_296 = arith.constant 19 : index
      %c0_297 = arith.constant 0 : index
      %c0_298 = arith.constant 0 : index
      %428 = vector.load %arg3[%c0_295, %c19_296, %c0_297, %c0_298] : memref<1x49x16x16xbf16, #tpu.memory_space<vmem>>, vector<1x1x16x16xbf16>
      %429 = vector.shape_cast %428 : vector<1x1x16x16xbf16> to vector<16x16xbf16>
      %430 = arith.extf %429 : vector<16x16xbf16> to vector<16x16xf32>
      %c19_299 = arith.constant 19 : index
      %c0_300 = arith.constant 0 : index
      %c0_301 = arith.constant 0 : index
      %431 = vector.load %arg5[%c19_299, %c0_300, %c0_301] : memref<49x16x16xf32, #tpu.memory_space<vmem>>, vector<1x16x16xf32>
      %432 = vector.shape_cast %431 : vector<1x16x16xf32> to vector<16x16xf32>
      %433 = vector.shape_cast %430 : vector<16x16xf32> to vector<1x16x16xf32>
      tpu.vector_store %arg5[%c19_299, %c0_300, %c0_301], %433 {strides = array<i32>} : memref<49x16x16xf32, #tpu.memory_space<vmem>>, vector<1x16x16xf32>,
      %c0_302 = arith.constant 0 : index
      %c20_303 = arith.constant 20 : index
      %c0_304 = arith.constant 0 : index
      %c0_305 = arith.constant 0 : index
      %434 = vector.load %arg3[%c0_302, %c20_303, %c0_304, %c0_305] : memref<1x49x16x16xbf16, #tpu.memory_space<vmem>>, vector<1x1x16x16xbf16>
      %435 = vector.shape_cast %434 : vector<1x1x16x16xbf16> to vector<16x16xbf16>
      %436 = arith.extf %435 : vector<16x16xbf16> to vector<16x16xf32>
      %c20_306 = arith.constant 20 : index
      %c0_307 = arith.constant 0 : index
      %c0_308 = arith.constant 0 : index
      %437 = vector.load %arg5[%c20_306, %c0_307, %c0_308] : memref<49x16x16xf32, #tpu.memory_space<vmem>>, vector<1x16x16xf32>
      %438 = vector.shape_cast %437 : vector<1x16x16xf32> to vector<16x16xf32>
      %439 = vector.shape_cast %436 : vector<16x16xf32> to vector<1x16x16xf32>
      tpu.vector_store %arg5[%c20_306, %c0_307, %c0_308], %439 {strides = array<i32>} : memref<49x16x16xf32, #tpu.memory_space<vmem>>, vector<1x16x16xf32>,
      %c0_309 = arith.constant 0 : index
      %c21_310 = arith.constant 21 : index
      %c0_311 = arith.constant 0 : index
      %c0_312 = arith.constant 0 : index
      %440 = vector.load %arg3[%c0_309, %c21_310, %c0_311, %c0_312] : memref<1x49x16x16xbf16, #tpu.memory_space<vmem>>, vector<1x1x16x16xbf16>
      %441 = vector.shape_cast %440 : vector<1x1x16x16xbf16> to vector<16x16xbf16>
      %442 = arith.extf %441 : vector<16x16xbf16> to vector<16x16xf32>
      %c21_313 = arith.constant 21 : index
      %c0_314 = arith.constant 0 : index
      %c0_315 = arith.constant 0 : index
      %443 = vector.load %arg5[%c21_313, %c0_314, %c0_315] : memref<49x16x16xf32, #tpu.memory_space<vmem>>, vector<1x16x16xf32>
      %444 = vector.shape_cast %443 : vector<1x16x16xf32> to vector<16x16xf32>
      %445 = vector.shape_cast %442 : vector<16x16xf32> to vector<1x16x16xf32>
      tpu.vector_store %arg5[%c21_313, %c0_314, %c0_315], %445 {strides = array<i32>} : memref<49x16x16xf32, #tpu.memory_space<vmem>>, vector<1x16x16xf32>,
      %c0_316 = arith.constant 0 : index
      %c22_317 = arith.constant 22 : index
      %c0_318 = arith.constant 0 : index
      %c0_319 = arith.constant 0 : index
      %446 = vector.load %arg3[%c0_316, %c22_317, %c0_318, %c0_319] : memref<1x49x16x16xbf16, #tpu.memory_space<vmem>>, vector<1x1x16x16xbf16>
      %447 = vector.shape_cast %446 : vector<1x1x16x16xbf16> to vector<16x16xbf16>
      %448 = arith.extf %447 : vector<16x16xbf16> to vector<16x16xf32>
      %c22_320 = arith.constant 22 : index
      %c0_321 = arith.constant 0 : index
      %c0_322 = arith.constant 0 : index
      %449 = vector.load %arg5[%c22_320, %c0_321, %c0_322] : memref<49x16x16xf32, #tpu.memory_space<vmem>>, vector<1x16x16xf32>
      %450 = vector.shape_cast %449 : vector<1x16x16xf32> to vector<16x16xf32>
      %451 = vector.shape_cast %448 : vector<16x16xf32> to vector<1x16x16xf32>
      tpu.vector_store %arg5[%c22_320, %c0_321, %c0_322], %451 {strides = array<i32>} : memref<49x16x16xf32, #tpu.memory_space<vmem>>, vector<1x16x16xf32>,
      %c0_323 = arith.constant 0 : index
      %c23_324 = arith.constant 23 : index
      %c0_325 = arith.constant 0 : index
      %c0_326 = arith.constant 0 : index
      %452 = vector.load %arg3[%c0_323, %c23_324, %c0_325, %c0_326] : memref<1x49x16x16xbf16, #tpu.memory_space<vmem>>, vector<1x1x16x16xbf16>
      %453 = vector.shape_cast %452 : vector<1x1x16x16xbf16> to vector<16x16xbf16>
      %454 = arith.extf %453 : vector<16x16xbf16> to vector<16x16xf32>
      %c23_327 = arith.constant 23 : index
      %c0_328 = arith.constant 0 : index
      %c0_329 = arith.constant 0 : index
      %455 = vector.load %arg5[%c23_327, %c0_328, %c0_329] : memref<49x16x16xf32, #tpu.memory_space<vmem>>, vector<1x16x16xf32>
      %456 = vector.shape_cast %455 : vector<1x16x16xf32> to vector<16x16xf32>
      %457 = vector.shape_cast %454 : vector<16x16xf32> to vector<1x16x16xf32>
      tpu.vector_store %arg5[%c23_327, %c0_328, %c0_329], %457 {strides = array<i32>} : memref<49x16x16xf32, #tpu.memory_space<vmem>>, vector<1x16x16xf32>,
      %c0_330 = arith.constant 0 : index
      %c24_331 = arith.constant 24 : index
      %c0_332 = arith.constant 0 : index
      %c0_333 = arith.constant 0 : index
      %458 = vector.load %arg3[%c0_330, %c24_331, %c0_332, %c0_333] : memref<1x49x16x16xbf16, #tpu.memory_space<vmem>>, vector<1x1x16x16xbf16>
      %459 = vector.shape_cast %458 : vector<1x1x16x16xbf16> to vector<16x16xbf16>
      %460 = arith.extf %459 : vector<16x16xbf16> to vector<16x16xf32>
      %c24_334 = arith.constant 24 : index
      %c0_335 = arith.constant 0 : index
      %c0_336 = arith.constant 0 : index
      %461 = vector.load %arg5[%c24_334, %c0_335, %c0_336] : memref<49x16x16xf32, #tpu.memory_space<vmem>>, vector<1x16x16xf32>
      %462 = vector.shape_cast %461 : vector<1x16x16xf32> to vector<16x16xf32>
      %463 = vector.shape_cast %460 : vector<16x16xf32> to vector<1x16x16xf32>
      tpu.vector_store %arg5[%c24_334, %c0_335, %c0_336], %463 {strides = array<i32>} : memref<49x16x16xf32, #tpu.memory_space<vmem>>, vector<1x16x16xf32>,
      %c0_337 = arith.constant 0 : index
      %c25_338 = arith.constant 25 : index
      %c0_339 = arith.constant 0 : index
      %c0_340 = arith.constant 0 : index
      %464 = vector.load %arg3[%c0_337, %c25_338, %c0_339, %c0_340] : memref<1x49x16x16xbf16, #tpu.memory_space<vmem>>, vector<1x1x16x16xbf16>
      %465 = vector.shape_cast %464 : vector<1x1x16x16xbf16> to vector<16x16xbf16>
      %466 = arith.extf %465 : vector<16x16xbf16> to vector<16x16xf32>
      %c25_341 = arith.constant 25 : index
      %c0_342 = arith.constant 0 : index
      %c0_343 = arith.constant 0 : index
      %467 = vector.load %arg5[%c25_341, %c0_342, %c0_343] : memref<49x16x16xf32, #tpu.memory_space<vmem>>, vector<1x16x16xf32>
      %468 = vector.shape_cast %467 : vector<1x16x16xf32> to vector<16x16xf32>
      %469 = vector.shape_cast %466 : vector<16x16xf32> to vector<1x16x16xf32>
      tpu.vector_store %arg5[%c25_341, %c0_342, %c0_343], %469 {strides = array<i32>} : memref<49x16x16xf32, #tpu.memory_space<vmem>>, vector<1x16x16xf32>,
      %c0_344 = arith.constant 0 : index
      %c26_345 = arith.constant 26 : index
      %c0_346 = arith.constant 0 : index
      %c0_347 = arith.constant 0 : index
      %470 = vector.load %arg3[%c0_344, %c26_345, %c0_346, %c0_347] : memref<1x49x16x16xbf16, #tpu.memory_space<vmem>>, vector<1x1x16x16xbf16>
      %471 = vector.shape_cast %470 : vector<1x1x16x16xbf16> to vector<16x16xbf16>
      %472 = arith.extf %471 : vector<16x16xbf16> to vector<16x16xf32>
      %c26_348 = arith.constant 26 : index
      %c0_349 = arith.constant 0 : index
      %c0_350 = arith.constant 0 : index
      %473 = vector.load %arg5[%c26_348, %c0_349, %c0_350] : memref<49x16x16xf32, #tpu.memory_space<vmem>>, vector<1x16x16xf32>
      %474 = vector.shape_cast %473 : vector<1x16x16xf32> to vector<16x16xf32>
      %475 = vector.shape_cast %472 : vector<16x16xf32> to vector<1x16x16xf32>
      tpu.vector_store %arg5[%c26_348, %c0_349, %c0_350], %475 {strides = array<i32>} : memref<49x16x16xf32, #tpu.memory_space<vmem>>, vector<1x16x16xf32>,
      %c0_351 = arith.constant 0 : index
      %c27_352 = arith.constant 27 : index
      %c0_353 = arith.constant 0 : index
      %c0_354 = arith.constant 0 : index
      %476 = vector.load %arg3[%c0_351, %c27_352, %c0_353, %c0_354] : memref<1x49x16x16xbf16, #tpu.memory_space<vmem>>, vector<1x1x16x16xbf16>
      %477 = vector.shape_cast %476 : vector<1x1x16x16xbf16> to vector<16x16xbf16>
      %478 = arith.extf %477 : vector<16x16xbf16> to vector<16x16xf32>
      %c27_355 = arith.constant 27 : index
      %c0_356 = arith.constant 0 : index
      %c0_357 = arith.constant 0 : index
      %479 = vector.load %arg5[%c27_355, %c0_356, %c0_357] : memref<49x16x16xf32, #tpu.memory_space<vmem>>, vector<1x16x16xf32>
      %480 = vector.shape_cast %479 : vector<1x16x16xf32> to vector<16x16xf32>
      %481 = vector.shape_cast %478 : vector<16x16xf32> to vector<1x16x16xf32>
      tpu.vector_store %arg5[%c27_355, %c0_356, %c0_357], %481 {strides = array<i32>} : memref<49x16x16xf32, #tpu.memory_space<vmem>>, vector<1x16x16xf32>,
      %c0_358 = arith.constant 0 : index
      %c28_359 = arith.constant 28 : index
      %c0_360 = arith.constant 0 : index
      %c0_361 = arith.constant 0 : index
      %482 = vector.load %arg3[%c0_358, %c28_359, %c0_360, %c0_361] : memref<1x49x16x16xbf16, #tpu.memory_space<vmem>>, vector<1x1x16x16xbf16>
      %483 = vector.shape_cast %482 : vector<1x1x16x16xbf16> to vector<16x16xbf16>
      %484 = arith.extf %483 : vector<16x16xbf16> to vector<16x16xf32>
      %c28_362 = arith.constant 28 : index
      %c0_363 = arith.constant 0 : index
      %c0_364 = arith.constant 0 : index
      %485 = vector.load %arg5[%c28_362, %c0_363, %c0_364] : memref<49x16x16xf32, #tpu.memory_space<vmem>>, vector<1x16x16xf32>
      %486 = vector.shape_cast %485 : vector<1x16x16xf32> to vector<16x16xf32>
      %487 = vector.shape_cast %484 : vector<16x16xf32> to vector<1x16x16xf32>
      tpu.vector_store %arg5[%c28_362, %c0_363, %c0_364], %487 {strides = array<i32>} : memref<49x16x16xf32, #tpu.memory_space<vmem>>, vector<1x16x16xf32>,
      %c0_365 = arith.constant 0 : index
      %c29_366 = arith.constant 29 : index
      %c0_367 = arith.constant 0 : index
      %c0_368 = arith.constant 0 : index
      %488 = vector.load %arg3[%c0_365, %c29_366, %c0_367, %c0_368] : memref<1x49x16x16xbf16, #tpu.memory_space<vmem>>, vector<1x1x16x16xbf16>
      %489 = vector.shape_cast %488 : vector<1x1x16x16xbf16> to vector<16x16xbf16>
      %490 = arith.extf %489 : vector<16x16xbf16> to vector<16x16xf32>
      %c29_369 = arith.constant 29 : index
      %c0_370 = arith.constant 0 : index
      %c0_371 = arith.constant 0 : index
      %491 = vector.load %arg5[%c29_369, %c0_370, %c0_371] : memref<49x16x16xf32, #tpu.memory_space<vmem>>, vector<1x16x16xf32>
      %492 = vector.shape_cast %491 : vector<1x16x16xf32> to vector<16x16xf32>
      %493 = vector.shape_cast %490 : vector<16x16xf32> to vector<1x16x16xf32>
      tpu.vector_store %arg5[%c29_369, %c0_370, %c0_371], %493 {strides = array<i32>} : memref<49x16x16xf32, #tpu.memory_space<vmem>>, vector<1x16x16xf32>,
      %c0_372 = arith.constant 0 : index
      %c30_373 = arith.constant 30 : index
      %c0_374 = arith.constant 0 : index
      %c0_375 = arith.constant 0 : index
      %494 = vector.load %arg3[%c0_372, %c30_373, %c0_374, %c0_375] : memref<1x49x16x16xbf16, #tpu.memory_space<vmem>>, vector<1x1x16x16xbf16>
      %495 = vector.shape_cast %494 : vector<1x1x16x16xbf16> to vector<16x16xbf16>
      %496 = arith.extf %495 : vector<16x16xbf16> to vector<16x16xf32>
      %c30_376 = arith.constant 30 : index
      %c0_377 = arith.constant 0 : index
      %c0_378 = arith.constant 0 : index
      %497 = vector.load %arg5[%c30_376, %c0_377, %c0_378] : memref<49x16x16xf32, #tpu.memory_space<vmem>>, vector<1x16x16xf32>
      %498 = vector.shape_cast %497 : vector<1x16x16xf32> to vector<16x16xf32>
      %499 = vector.shape_cast %496 : vector<16x16xf32> to vector<1x16x16xf32>
      tpu.vector_store %arg5[%c30_376, %c0_377, %c0_378], %499 {strides = array<i32>} : memref<49x16x16xf32, #tpu.memory_space<vmem>>, vector<1x16x16xf32>,
      %c0_379 = arith.constant 0 : index
      %c31_380 = arith.constant 31 : index
      %c0_381 = arith.constant 0 : index
      %c0_382 = arith.constant 0 : index
      %500 = vector.load %arg3[%c0_379, %c31_380, %c0_381, %c0_382] : memref<1x49x16x16xbf16, #tpu.memory_space<vmem>>, vector<1x1x16x16xbf16>
      %501 = vector.shape_cast %500 : vector<1x1x16x16xbf16> to vector<16x16xbf16>
      %502 = arith.extf %501 : vector<16x16xbf16> to vector<16x16xf32>
      %c31_383 = arith.constant 31 : index
      %c0_384 = arith.constant 0 : index
      %c0_385 = arith.constant 0 : index
      %503 = vector.load %arg5[%c31_383, %c0_384, %c0_385] : memref<49x16x16xf32, #tpu.memory_space<vmem>>, vector<1x16x16xf32>
      %504 = vector.shape_cast %503 : vector<1x16x16xf32> to vector<16x16xf32>
      %505 = vector.shape_cast %502 : vector<16x16xf32> to vector<1x16x16xf32>
      tpu.vector_store %arg5[%c31_383, %c0_384, %c0_385], %505 {strides = array<i32>} : memref<49x16x16xf32, #tpu.memory_space<vmem>>, vector<1x16x16xf32>,
      %c0_386 = arith.constant 0 : index
      %c32_387 = arith.constant 32 : index
      %c0_388 = arith.constant 0 : index
      %c0_389 = arith.constant 0 : index
      %506 = vector.load %arg3[%c0_386, %c32_387, %c0_388, %c0_389] : memref<1x49x16x16xbf16, #tpu.memory_space<vmem>>, vector<1x1x16x16xbf16>
      %507 = vector.shape_cast %506 : vector<1x1x16x16xbf16> to vector<16x16xbf16>
      %508 = arith.extf %507 : vector<16x16xbf16> to vector<16x16xf32>
      %c32_390 = arith.constant 32 : index
      %c0_391 = arith.constant 0 : index
      %c0_392 = arith.constant 0 : index
      %509 = vector.load %arg5[%c32_390, %c0_391, %c0_392] : memref<49x16x16xf32, #tpu.memory_space<vmem>>, vector<1x16x16xf32>
      %510 = vector.shape_cast %509 : vector<1x16x16xf32> to vector<16x16xf32>
      %511 = vector.shape_cast %508 : vector<16x16xf32> to vector<1x16x16xf32>
      tpu.vector_store %arg5[%c32_390, %c0_391, %c0_392], %511 {strides = array<i32>} : memref<49x16x16xf32, #tpu.memory_space<vmem>>, vector<1x16x16xf32>,
      %c0_393 = arith.constant 0 : index
      %c33_394 = arith.constant 33 : index
      %c0_395 = arith.constant 0 : index
      %c0_396 = arith.constant 0 : index
      %512 = vector.load %arg3[%c0_393, %c33_394, %c0_395, %c0_396] : memref<1x49x16x16xbf16, #tpu.memory_space<vmem>>, vector<1x1x16x16xbf16>
      %513 = vector.shape_cast %512 : vector<1x1x16x16xbf16> to vector<16x16xbf16>
      %514 = arith.extf %513 : vector<16x16xbf16> to vector<16x16xf32>
      %c33_397 = arith.constant 33 : index
      %c0_398 = arith.constant 0 : index
      %c0_399 = arith.constant 0 : index
      %515 = vector.load %arg5[%c33_397, %c0_398, %c0_399] : memref<49x16x16xf32, #tpu.memory_space<vmem>>, vector<1x16x16xf32>
      %516 = vector.shape_cast %515 : vector<1x16x16xf32> to vector<16x16xf32>
      %517 = vector.shape_cast %514 : vector<16x16xf32> to vector<1x16x16xf32>
      tpu.vector_store %arg5[%c33_397, %c0_398, %c0_399], %517 {strides = array<i32>} : memref<49x16x16xf32, #tpu.memory_space<vmem>>, vector<1x16x16xf32>,
      %c0_400 = arith.constant 0 : index
      %c34_401 = arith.constant 34 : index
      %c0_402 = arith.constant 0 : index
      %c0_403 = arith.constant 0 : index
      %518 = vector.load %arg3[%c0_400, %c34_401, %c0_402, %c0_403] : memref<1x49x16x16xbf16, #tpu.memory_space<vmem>>, vector<1x1x16x16xbf16>
      %519 = vector.shape_cast %518 : vector<1x1x16x16xbf16> to vector<16x16xbf16>
      %520 = arith.extf %519 : vector<16x16xbf16> to vector<16x16xf32>
      %c34_404 = arith.constant 34 : index
      %c0_405 = arith.constant 0 : index
      %c0_406 = arith.constant 0 : index
      %521 = vector.load %arg5[%c34_404, %c0_405, %c0_406] : memref<49x16x16xf32, #tpu.memory_space<vmem>>, vector<1x16x16xf32>
      %522 = vector.shape_cast %521 : vector<1x16x16xf32> to vector<16x16xf32>
      %523 = vector.shape_cast %520 : vector<16x16xf32> to vector<1x16x16xf32>
      tpu.vector_store %arg5[%c34_404, %c0_405, %c0_406], %523 {strides = array<i32>} : memref<49x16x16xf32, #tpu.memory_space<vmem>>, vector<1x16x16xf32>,
      %c0_407 = arith.constant 0 : index
      %c35_408 = arith.constant 35 : index
      %c0_409 = arith.constant 0 : index
      %c0_410 = arith.constant 0 : index
      %524 = vector.load %arg3[%c0_407, %c35_408, %c0_409, %c0_410] : memref<1x49x16x16xbf16, #tpu.memory_space<vmem>>, vector<1x1x16x16xbf16>
      %525 = vector.shape_cast %524 : vector<1x1x16x16xbf16> to vector<16x16xbf16>
      %526 = arith.extf %525 : vector<16x16xbf16> to vector<16x16xf32>
      %c35_411 = arith.constant 35 : index
      %c0_412 = arith.constant 0 : index
      %c0_413 = arith.constant 0 : index
      %527 = vector.load %arg5[%c35_411, %c0_412, %c0_413] : memref<49x16x16xf32, #tpu.memory_space<vmem>>, vector<1x16x16xf32>
      %528 = vector.shape_cast %527 : vector<1x16x16xf32> to vector<16x16xf32>
      %529 = vector.shape_cast %526 : vector<16x16xf32> to vector<1x16x16xf32>
      tpu.vector_store %arg5[%c35_411, %c0_412, %c0_413], %529 {strides = array<i32>} : memref<49x16x16xf32, #tpu.memory_space<vmem>>, vector<1x16x16xf32>,
      %c0_414 = arith.constant 0 : index
      %c36_415 = arith.constant 36 : index
      %c0_416 = arith.constant 0 : index
      %c0_417 = arith.constant 0 : index
      %530 = vector.load %arg3[%c0_414, %c36_415, %c0_416, %c0_417] : memref<1x49x16x16xbf16, #tpu.memory_space<vmem>>, vector<1x1x16x16xbf16>
      %531 = vector.shape_cast %530 : vector<1x1x16x16xbf16> to vector<16x16xbf16>
      %532 = arith.extf %531 : vector<16x16xbf16> to vector<16x16xf32>
      %c36_418 = arith.constant 36 : index
      %c0_419 = arith.constant 0 : index
      %c0_420 = arith.constant 0 : index
      %533 = vector.load %arg5[%c36_418, %c0_419, %c0_420] : memref<49x16x16xf32, #tpu.memory_space<vmem>>, vector<1x16x16xf32>
      %534 = vector.shape_cast %533 : vector<1x16x16xf32> to vector<16x16xf32>
      %535 = vector.shape_cast %532 : vector<16x16xf32> to vector<1x16x16xf32>
      tpu.vector_store %arg5[%c36_418, %c0_419, %c0_420], %535 {strides = array<i32>} : memref<49x16x16xf32, #tpu.memory_space<vmem>>, vector<1x16x16xf32>,
      %c0_421 = arith.constant 0 : index
      %c37_422 = arith.constant 37 : index
      %c0_423 = arith.constant 0 : index
      %c0_424 = arith.constant 0 : index
      %536 = vector.load %arg3[%c0_421, %c37_422, %c0_423, %c0_424] : memref<1x49x16x16xbf16, #tpu.memory_space<vmem>>, vector<1x1x16x16xbf16>
      %537 = vector.shape_cast %536 : vector<1x1x16x16xbf16> to vector<16x16xbf16>
      %538 = arith.extf %537 : vector<16x16xbf16> to vector<16x16xf32>
      %c37_425 = arith.constant 37 : index
      %c0_426 = arith.constant 0 : index
      %c0_427 = arith.constant 0 : index
      %539 = vector.load %arg5[%c37_425, %c0_426, %c0_427] : memref<49x16x16xf32, #tpu.memory_space<vmem>>, vector<1x16x16xf32>
      %540 = vector.shape_cast %539 : vector<1x16x16xf32> to vector<16x16xf32>
      %541 = vector.shape_cast %538 : vector<16x16xf32> to vector<1x16x16xf32>
      tpu.vector_store %arg5[%c37_425, %c0_426, %c0_427], %541 {strides = array<i32>} : memref<49x16x16xf32, #tpu.memory_space<vmem>>, vector<1x16x16xf32>,
      %c0_428 = arith.constant 0 : index
      %c38_429 = arith.constant 38 : index
      %c0_430 = arith.constant 0 : index
      %c0_431 = arith.constant 0 : index
      %542 = vector.load %arg3[%c0_428, %c38_429, %c0_430, %c0_431] : memref<1x49x16x16xbf16, #tpu.memory_space<vmem>>, vector<1x1x16x16xbf16>
      %543 = vector.shape_cast %542 : vector<1x1x16x16xbf16> to vector<16x16xbf16>
      %544 = arith.extf %543 : vector<16x16xbf16> to vector<16x16xf32>
      %c38_432 = arith.constant 38 : index
      %c0_433 = arith.constant 0 : index
      %c0_434 = arith.constant 0 : index
      %545 = vector.load %arg5[%c38_432, %c0_433, %c0_434] : memref<49x16x16xf32, #tpu.memory_space<vmem>>, vector<1x16x16xf32>
      %546 = vector.shape_cast %545 : vector<1x16x16xf32> to vector<16x16xf32>
      %547 = vector.shape_cast %544 : vector<16x16xf32> to vector<1x16x16xf32>
      tpu.vector_store %arg5[%c38_432, %c0_433, %c0_434], %547 {strides = array<i32>} : memref<49x16x16xf32, #tpu.memory_space<vmem>>, vector<1x16x16xf32>,
      %c0_435 = arith.constant 0 : index
      %c39_436 = arith.constant 39 : index
      %c0_437 = arith.constant 0 : index
      %c0_438 = arith.constant 0 : index
      %548 = vector.load %arg3[%c0_435, %c39_436, %c0_437, %c0_438] : memref<1x49x16x16xbf16, #tpu.memory_space<vmem>>, vector<1x1x16x16xbf16>
      %549 = vector.shape_cast %548 : vector<1x1x16x16xbf16> to vector<16x16xbf16>
      %550 = arith.extf %549 : vector<16x16xbf16> to vector<16x16xf32>
      %c39_439 = arith.constant 39 : index
      %c0_440 = arith.constant 0 : index
      %c0_441 = arith.constant 0 : index
      %551 = vector.load %arg5[%c39_439, %c0_440, %c0_441] : memref<49x16x16xf32, #tpu.memory_space<vmem>>, vector<1x16x16xf32>
      %552 = vector.shape_cast %551 : vector<1x16x16xf32> to vector<16x16xf32>
      %553 = vector.shape_cast %550 : vector<16x16xf32> to vector<1x16x16xf32>
      tpu.vector_store %arg5[%c39_439, %c0_440, %c0_441], %553 {strides = array<i32>} : memref<49x16x16xf32, #tpu.memory_space<vmem>>, vector<1x16x16xf32>,
      %c0_442 = arith.constant 0 : index
      %c40_443 = arith.constant 40 : index
      %c0_444 = arith.constant 0 : index
      %c0_445 = arith.constant 0 : index
      %554 = vector.load %arg3[%c0_442, %c40_443, %c0_444, %c0_445] : memref<1x49x16x16xbf16, #tpu.memory_space<vmem>>, vector<1x1x16x16xbf16>
      %555 = vector.shape_cast %554 : vector<1x1x16x16xbf16> to vector<16x16xbf16>
      %556 = arith.extf %555 : vector<16x16xbf16> to vector<16x16xf32>
      %c40_446 = arith.constant 40 : index
      %c0_447 = arith.constant 0 : index
      %c0_448 = arith.constant 0 : index
      %557 = vector.load %arg5[%c40_446, %c0_447, %c0_448] : memref<49x16x16xf32, #tpu.memory_space<vmem>>, vector<1x16x16xf32>
      %558 = vector.shape_cast %557 : vector<1x16x16xf32> to vector<16x16xf32>
      %559 = vector.shape_cast %556 : vector<16x16xf32> to vector<1x16x16xf32>
      tpu.vector_store %arg5[%c40_446, %c0_447, %c0_448], %559 {strides = array<i32>} : memref<49x16x16xf32, #tpu.memory_space<vmem>>, vector<1x16x16xf32>,
      %c0_449 = arith.constant 0 : index
      %c41_450 = arith.constant 41 : index
      %c0_451 = arith.constant 0 : index
      %c0_452 = arith.constant 0 : index
      %560 = vector.load %arg3[%c0_449, %c41_450, %c0_451, %c0_452] : memref<1x49x16x16xbf16, #tpu.memory_space<vmem>>, vector<1x1x16x16xbf16>
      %561 = vector.shape_cast %560 : vector<1x1x16x16xbf16> to vector<16x16xbf16>
      %562 = arith.extf %561 : vector<16x16xbf16> to vector<16x16xf32>
      %c41_453 = arith.constant 41 : index
      %c0_454 = arith.constant 0 : index
      %c0_455 = arith.constant 0 : index
      %563 = vector.load %arg5[%c41_453, %c0_454, %c0_455] : memref<49x16x16xf32, #tpu.memory_space<vmem>>, vector<1x16x16xf32>
      %564 = vector.shape_cast %563 : vector<1x16x16xf32> to vector<16x16xf32>
      %565 = vector.shape_cast %562 : vector<16x16xf32> to vector<1x16x16xf32>
      tpu.vector_store %arg5[%c41_453, %c0_454, %c0_455], %565 {strides = array<i32>} : memref<49x16x16xf32, #tpu.memory_space<vmem>>, vector<1x16x16xf32>,
      %c0_456 = arith.constant 0 : index
      %c42_457 = arith.constant 42 : index
      %c0_458 = arith.constant 0 : index
      %c0_459 = arith.constant 0 : index
      %566 = vector.load %arg3[%c0_456, %c42_457, %c0_458, %c0_459] : memref<1x49x16x16xbf16, #tpu.memory_space<vmem>>, vector<1x1x16x16xbf16>
      %567 = vector.shape_cast %566 : vector<1x1x16x16xbf16> to vector<16x16xbf16>
      %568 = arith.extf %567 : vector<16x16xbf16> to vector<16x16xf32>
      %c42_460 = arith.constant 42 : index
      %c0_461 = arith.constant 0 : index
      %c0_462 = arith.constant 0 : index
      %569 = vector.load %arg5[%c42_460, %c0_461, %c0_462] : memref<49x16x16xf32, #tpu.memory_space<vmem>>, vector<1x16x16xf32>
      %570 = vector.shape_cast %569 : vector<1x16x16xf32> to vector<16x16xf32>
      %571 = vector.shape_cast %568 : vector<16x16xf32> to vector<1x16x16xf32>
      tpu.vector_store %arg5[%c42_460, %c0_461, %c0_462], %571 {strides = array<i32>} : memref<49x16x16xf32, #tpu.memory_space<vmem>>, vector<1x16x16xf32>,
      %c0_463 = arith.constant 0 : index
      %c43_464 = arith.constant 43 : index
      %c0_465 = arith.constant 0 : index
      %c0_466 = arith.constant 0 : index
      %572 = vector.load %arg3[%c0_463, %c43_464, %c0_465, %c0_466] : memref<1x49x16x16xbf16, #tpu.memory_space<vmem>>, vector<1x1x16x16xbf16>
      %573 = vector.shape_cast %572 : vector<1x1x16x16xbf16> to vector<16x16xbf16>
      %574 = arith.extf %573 : vector<16x16xbf16> to vector<16x16xf32>
      %c43_467 = arith.constant 43 : index
      %c0_468 = arith.constant 0 : index
      %c0_469 = arith.constant 0 : index
      %575 = vector.load %arg5[%c43_467, %c0_468, %c0_469] : memref<49x16x16xf32, #tpu.memory_space<vmem>>, vector<1x16x16xf32>
      %576 = vector.shape_cast %575 : vector<1x16x16xf32> to vector<16x16xf32>
      %577 = vector.shape_cast %574 : vector<16x16xf32> to vector<1x16x16xf32>
      tpu.vector_store %arg5[%c43_467, %c0_468, %c0_469], %577 {strides = array<i32>} : memref<49x16x16xf32, #tpu.memory_space<vmem>>, vector<1x16x16xf32>,
      %c0_470 = arith.constant 0 : index
      %c44_471 = arith.constant 44 : index
      %c0_472 = arith.constant 0 : index
      %c0_473 = arith.constant 0 : index
      %578 = vector.load %arg3[%c0_470, %c44_471, %c0_472, %c0_473] : memref<1x49x16x16xbf16, #tpu.memory_space<vmem>>, vector<1x1x16x16xbf16>
      %579 = vector.shape_cast %578 : vector<1x1x16x16xbf16> to vector<16x16xbf16>
      %580 = arith.extf %579 : vector<16x16xbf16> to vector<16x16xf32>
      %c44_474 = arith.constant 44 : index
      %c0_475 = arith.constant 0 : index
      %c0_476 = arith.constant 0 : index
      %581 = vector.load %arg5[%c44_474, %c0_475, %c0_476] : memref<49x16x16xf32, #tpu.memory_space<vmem>>, vector<1x16x16xf32>
      %582 = vector.shape_cast %581 : vector<1x16x16xf32> to vector<16x16xf32>
      %583 = vector.shape_cast %580 : vector<16x16xf32> to vector<1x16x16xf32>
      tpu.vector_store %arg5[%c44_474, %c0_475, %c0_476], %583 {strides = array<i32>} : memref<49x16x16xf32, #tpu.memory_space<vmem>>, vector<1x16x16xf32>,
      %c0_477 = arith.constant 0 : index
      %c45_478 = arith.constant 45 : index
      %c0_479 = arith.constant 0 : index
      %c0_480 = arith.constant 0 : index
      %584 = vector.load %arg3[%c0_477, %c45_478, %c0_479, %c0_480] : memref<1x49x16x16xbf16, #tpu.memory_space<vmem>>, vector<1x1x16x16xbf16>
      %585 = vector.shape_cast %584 : vector<1x1x16x16xbf16> to vector<16x16xbf16>
      %586 = arith.extf %585 : vector<16x16xbf16> to vector<16x16xf32>
      %c45_481 = arith.constant 45 : index
      %c0_482 = arith.constant 0 : index
      %c0_483 = arith.constant 0 : index
      %587 = vector.load %arg5[%c45_481, %c0_482, %c0_483] : memref<49x16x16xf32, #tpu.memory_space<vmem>>, vector<1x16x16xf32>
      %588 = vector.shape_cast %587 : vector<1x16x16xf32> to vector<16x16xf32>
      %589 = vector.shape_cast %586 : vector<16x16xf32> to vector<1x16x16xf32>
      tpu.vector_store %arg5[%c45_481, %c0_482, %c0_483], %589 {strides = array<i32>} : memref<49x16x16xf32, #tpu.memory_space<vmem>>, vector<1x16x16xf32>,
      %c0_484 = arith.constant 0 : index
      %c46_485 = arith.constant 46 : index
      %c0_486 = arith.constant 0 : index
      %c0_487 = arith.constant 0 : index
      %590 = vector.load %arg3[%c0_484, %c46_485, %c0_486, %c0_487] : memref<1x49x16x16xbf16, #tpu.memory_space<vmem>>, vector<1x1x16x16xbf16>
      %591 = vector.shape_cast %590 : vector<1x1x16x16xbf16> to vector<16x16xbf16>
      %592 = arith.extf %591 : vector<16x16xbf16> to vector<16x16xf32>
      %c46_488 = arith.constant 46 : index
      %c0_489 = arith.constant 0 : index
      %c0_490 = arith.constant 0 : index
      %593 = vector.load %arg5[%c46_488, %c0_489, %c0_490] : memref<49x16x16xf32, #tpu.memory_space<vmem>>, vector<1x16x16xf32>
      %594 = vector.shape_cast %593 : vector<1x16x16xf32> to vector<16x16xf32>
      %595 = vector.shape_cast %592 : vector<16x16xf32> to vector<1x16x16xf32>
      tpu.vector_store %arg5[%c46_488, %c0_489, %c0_490], %595 {strides = array<i32>} : memref<49x16x16xf32, #tpu.memory_space<vmem>>, vector<1x16x16xf32>,
      %c0_491 = arith.constant 0 : index
      %c47_492 = arith.constant 47 : index
      %c0_493 = arith.constant 0 : index
      %c0_494 = arith.constant 0 : index
      %596 = vector.load %arg3[%c0_491, %c47_492, %c0_493, %c0_494] : memref<1x49x16x16xbf16, #tpu.memory_space<vmem>>, vector<1x1x16x16xbf16>
      %597 = vector.shape_cast %596 : vector<1x1x16x16xbf16> to vector<16x16xbf16>
      %598 = arith.extf %597 : vector<16x16xbf16> to vector<16x16xf32>
      %c47_495 = arith.constant 47 : index
      %c0_496 = arith.constant 0 : index
      %c0_497 = arith.constant 0 : index
      %599 = vector.load %arg5[%c47_495, %c0_496, %c0_497] : memref<49x16x16xf32, #tpu.memory_space<vmem>>, vector<1x16x16xf32>
      %600 = vector.shape_cast %599 : vector<1x16x16xf32> to vector<16x16xf32>
      %601 = vector.shape_cast %598 : vector<16x16xf32> to vector<1x16x16xf32>
      tpu.vector_store %arg5[%c47_495, %c0_496, %c0_497], %601 {strides = array<i32>} : memref<49x16x16xf32, #tpu.memory_space<vmem>>, vector<1x16x16xf32>,
      %c0_498 = arith.constant 0 : index
      %c48_499 = arith.constant 48 : index
      %c0_500 = arith.constant 0 : index
      %c0_501 = arith.constant 0 : index
      %602 = vector.load %arg3[%c0_498, %c48_499, %c0_500, %c0_501] : memref<1x49x16x16xbf16, #tpu.memory_space<vmem>>, vector<1x1x16x16xbf16>
      %603 = vector.shape_cast %602 : vector<1x1x16x16xbf16> to vector<16x16xbf16>
      %604 = arith.extf %603 : vector<16x16xbf16> to vector<16x16xf32>
      %c48_502 = arith.constant 48 : index
      %c0_503 = arith.constant 0 : index
      %c0_504 = arith.constant 0 : index
      %605 = vector.load %arg5[%c48_502, %c0_503, %c0_504] : memref<49x16x16xf32, #tpu.memory_space<vmem>>, vector<1x16x16xf32>
      %606 = vector.shape_cast %605 : vector<1x16x16xf32> to vector<16x16xf32>
      %607 = vector.shape_cast %604 : vector<16x16xf32> to vector<1x16x16xf32>
      tpu.vector_store %arg5[%c48_502, %c0_503, %c0_504], %607 {strides = array<i32>} : memref<49x16x16xf32, #tpu.memory_space<vmem>>, vector<1x16x16xf32>,
    } else {
    }
    %cst = arith.constant 0.000000e+00 : f32
    %3 = vector.broadcast %cst : f32 to vector<16x16xf32>
    %cst_1 = arith.constant 0.000000e+00 : f32
    %4 = vector.broadcast %cst_1 : f32 to vector<16x16xf32>
    %cst_2 = arith.constant 0.000000e+00 : f32
    %5 = vector.broadcast %cst_2 : f32 to vector<16x16xf32>
    %cst_3 = arith.constant 0.000000e+00 : f32
    %6 = vector.broadcast %cst_3 : f32 to vector<16x16xf32>
    %c0 = arith.constant 0 : index
    %c0_4 = arith.constant 0 : index
    %c0_5 = arith.constant 0 : index
    %7 = vector.load %arg2[%c0, %c0_4, %c0_5] : memref<1x22x128xf32, #tpu.memory_space<vmem>>, vector<1x16x128xf32>
    %8 = vector.shape_cast %7 : vector<1x16x128xf32> to vector<16x128xf32>
    %9 = vector.extract_strided_slice %8 {offsets = [0, 0], sizes = [16, 16], strides = [1, 1]} : vector<16x128xf32> to vector<16x16xf32>
    %c0_6 = arith.constant 0 : index
    %c0_7 = arith.constant 0 : index
    %c0_8 = arith.constant 0 : index
    %10 = vector.load %arg5[%c0_6, %c0_7, %c0_8] : memref<49x16x16xf32, #tpu.memory_space<vmem>>, vector<1x16x16xf32>
    %11 = vector.shape_cast %10 : vector<1x16x16xf32> to vector<16x16xf32>
    %12 = arith.mulf %9, %11 : vector<16x16xf32>
    %13 = arith.addf %3, %12 : vector<16x16xf32>
    %c127_i32 = arith.constant 127 : i32
    %14 = tpu.dynamic_rotate %8 by %c127_i32 dim 1 : vector<16x128xf32>, i32 -> vector<16x128xf32>
    %15 = vector.extract_strided_slice %14 {offsets = [0, 0], sizes = [16, 16], strides = [1, 1]} : vector<16x128xf32> to vector<16x16xf32>
    %c1 = arith.constant 1 : index
    %c0_9 = arith.constant 0 : index
    %c0_10 = arith.constant 0 : index
    %16 = vector.load %arg5[%c1, %c0_9, %c0_10] : memref<49x16x16xf32, #tpu.memory_space<vmem>>, vector<1x16x16xf32>
    %17 = vector.shape_cast %16 : vector<1x16x16xf32> to vector<16x16xf32>
    %18 = arith.mulf %15, %17 : vector<16x16xf32>
    %19 = arith.addf %4, %18 : vector<16x16xf32>
    %c126_i32 = arith.constant 126 : i32
    %20 = tpu.dynamic_rotate %8 by %c126_i32 dim 1 : vector<16x128xf32>, i32 -> vector<16x128xf32>
    %21 = vector.extract_strided_slice %20 {offsets = [0, 0], sizes = [16, 16], strides = [1, 1]} : vector<16x128xf32> to vector<16x16xf32>
    %c2 = arith.constant 2 : index
    %c0_11 = arith.constant 0 : index
    %c0_12 = arith.constant 0 : index
    %22 = vector.load %arg5[%c2, %c0_11, %c0_12] : memref<49x16x16xf32, #tpu.memory_space<vmem>>, vector<1x16x16xf32>
    %23 = vector.shape_cast %22 : vector<1x16x16xf32> to vector<16x16xf32>
    %24 = arith.mulf %21, %23 : vector<16x16xf32>
    %25 = arith.addf %5, %24 : vector<16x16xf32>
    %c125_i32 = arith.constant 125 : i32
    %26 = tpu.dynamic_rotate %8 by %c125_i32 dim 1 : vector<16x128xf32>, i32 -> vector<16x128xf32>
    %27 = vector.extract_strided_slice %26 {offsets = [0, 0], sizes = [16, 16], strides = [1, 1]} : vector<16x128xf32> to vector<16x16xf32>
    %c3 = arith.constant 3 : index
    %c0_13 = arith.constant 0 : index
    %c0_14 = arith.constant 0 : index
    %28 = vector.load %arg5[%c3, %c0_13, %c0_14] : memref<49x16x16xf32, #tpu.memory_space<vmem>>, vector<1x16x16xf32>
    %29 = vector.shape_cast %28 : vector<1x16x16xf32> to vector<16x16xf32>
    %30 = arith.mulf %27, %29 : vector<16x16xf32>
    %31 = arith.addf %6, %30 : vector<16x16xf32>
    %c124_i32 = arith.constant 124 : i32
    %32 = tpu.dynamic_rotate %8 by %c124_i32 dim 1 : vector<16x128xf32>, i32 -> vector<16x128xf32>
    %33 = vector.extract_strided_slice %32 {offsets = [0, 0], sizes = [16, 16], strides = [1, 1]} : vector<16x128xf32> to vector<16x16xf32>
    %c4 = arith.constant 4 : index
    %c0_15 = arith.constant 0 : index
    %c0_16 = arith.constant 0 : index
    %34 = vector.load %arg5[%c4, %c0_15, %c0_16] : memref<49x16x16xf32, #tpu.memory_space<vmem>>, vector<1x16x16xf32>
    %35 = vector.shape_cast %34 : vector<1x16x16xf32> to vector<16x16xf32>
    %36 = arith.mulf %33, %35 : vector<16x16xf32>
    %37 = arith.addf %13, %36 : vector<16x16xf32>
    %c123_i32 = arith.constant 123 : i32
    %38 = tpu.dynamic_rotate %8 by %c123_i32 dim 1 : vector<16x128xf32>, i32 -> vector<16x128xf32>
    %39 = vector.extract_strided_slice %38 {offsets = [0, 0], sizes = [16, 16], strides = [1, 1]} : vector<16x128xf32> to vector<16x16xf32>
    %c5 = arith.constant 5 : index
    %c0_17 = arith.constant 0 : index
    %c0_18 = arith.constant 0 : index
    %40 = vector.load %arg5[%c5, %c0_17, %c0_18] : memref<49x16x16xf32, #tpu.memory_space<vmem>>, vector<1x16x16xf32>
    %41 = vector.shape_cast %40 : vector<1x16x16xf32> to vector<16x16xf32>
    %42 = arith.mulf %39, %41 : vector<16x16xf32>
    %43 = arith.addf %19, %42 : vector<16x16xf32>
    %c122_i32 = arith.constant 122 : i32
    %44 = tpu.dynamic_rotate %8 by %c122_i32 dim 1 : vector<16x128xf32>, i32 -> vector<16x128xf32>
    %45 = vector.extract_strided_slice %44 {offsets = [0, 0], sizes = [16, 16], strides = [1, 1]} : vector<16x128xf32> to vector<16x16xf32>
    %c6 = arith.constant 6 : index
    %c0_19 = arith.constant 0 : index
    %c0_20 = arith.constant 0 : index
    %46 = vector.load %arg5[%c6, %c0_19, %c0_20] : memref<49x16x16xf32, #tpu.memory_space<vmem>>, vector<1x16x16xf32>
    %47 = vector.shape_cast %46 : vector<1x16x16xf32> to vector<16x16xf32>
    %48 = arith.mulf %45, %47 : vector<16x16xf32>
    %49 = arith.addf %25, %48 : vector<16x16xf32>
    %c0_21 = arith.constant 0 : index
    %c1_22 = arith.constant 1 : index
    %c0_23 = arith.constant 0 : index
    %50 = vector.load %arg2[%c0_21, %c1_22, %c0_23] : memref<1x22x128xf32, #tpu.memory_space<vmem>>, vector<1x16x128xf32>
    %51 = vector.shape_cast %50 : vector<1x16x128xf32> to vector<16x128xf32>
    %52 = vector.extract_strided_slice %51 {offsets = [0, 0], sizes = [16, 16], strides = [1, 1]} : vector<16x128xf32> to vector<16x16xf32>
    %c7 = arith.constant 7 : index
    %c0_24 = arith.constant 0 : index
    %c0_25 = arith.constant 0 : index
    %53 = vector.load %arg5[%c7, %c0_24, %c0_25] : memref<49x16x16xf32, #tpu.memory_space<vmem>>, vector<1x16x16xf32>
    %54 = vector.shape_cast %53 : vector<1x16x16xf32> to vector<16x16xf32>
    %55 = arith.mulf %52, %54 : vector<16x16xf32>
    %56 = arith.addf %31, %55 : vector<16x16xf32>
    %c127_i32_26 = arith.constant 127 : i32
    %57 = tpu.dynamic_rotate %51 by %c127_i32_26 dim 1 : vector<16x128xf32>, i32 -> vector<16x128xf32>
    %58 = vector.extract_strided_slice %57 {offsets = [0, 0], sizes = [16, 16], strides = [1, 1]} : vector<16x128xf32> to vector<16x16xf32>
    %c8 = arith.constant 8 : index
    %c0_27 = arith.constant 0 : index
    %c0_28 = arith.constant 0 : index
    %59 = vector.load %arg5[%c8, %c0_27, %c0_28] : memref<49x16x16xf32, #tpu.memory_space<vmem>>, vector<1x16x16xf32>
    %60 = vector.shape_cast %59 : vector<1x16x16xf32> to vector<16x16xf32>
    %61 = arith.mulf %58, %60 : vector<16x16xf32>
    %62 = arith.addf %37, %61 : vector<16x16xf32>
    %c126_i32_29 = arith.constant 126 : i32
    %63 = tpu.dynamic_rotate %51 by %c126_i32_29 dim 1 : vector<16x128xf32>, i32 -> vector<16x128xf32>
    %64 = vector.extract_strided_slice %63 {offsets = [0, 0], sizes = [16, 16], strides = [1, 1]} : vector<16x128xf32> to vector<16x16xf32>
    %c9 = arith.constant 9 : index
    %c0_30 = arith.constant 0 : index
    %c0_31 = arith.constant 0 : index
    %65 = vector.load %arg5[%c9, %c0_30, %c0_31] : memref<49x16x16xf32, #tpu.memory_space<vmem>>, vector<1x16x16xf32>
    %66 = vector.shape_cast %65 : vector<1x16x16xf32> to vector<16x16xf32>
    %67 = arith.mulf %64, %66 : vector<16x16xf32>
    %68 = arith.addf %43, %67 : vector<16x16xf32>
    %c125_i32_32 = arith.constant 125 : i32
    %69 = tpu.dynamic_rotate %51 by %c125_i32_32 dim 1 : vector<16x128xf32>, i32 -> vector<16x128xf32>
    %70 = vector.extract_strided_slice %69 {offsets = [0, 0], sizes = [16, 16], strides = [1, 1]} : vector<16x128xf32> to vector<16x16xf32>
    %c10 = arith.constant 10 : index
    %c0_33 = arith.constant 0 : index
    %c0_34 = arith.constant 0 : index
    %71 = vector.load %arg5[%c10, %c0_33, %c0_34] : memref<49x16x16xf32, #tpu.memory_space<vmem>>, vector<1x16x16xf32>
    %72 = vector.shape_cast %71 : vector<1x16x16xf32> to vector<16x16xf32>
    %73 = arith.mulf %70, %72 : vector<16x16xf32>
    %74 = arith.addf %49, %73 : vector<16x16xf32>
    %c124_i32_35 = arith.constant 124 : i32
    %75 = tpu.dynamic_rotate %51 by %c124_i32_35 dim 1 : vector<16x128xf32>, i32 -> vector<16x128xf32>
    %76 = vector.extract_strided_slice %75 {offsets = [0, 0], sizes = [16, 16], strides = [1, 1]} : vector<16x128xf32> to vector<16x16xf32>
    %c11 = arith.constant 11 : index
    %c0_36 = arith.constant 0 : index
    %c0_37 = arith.constant 0 : index
    %77 = vector.load %arg5[%c11, %c0_36, %c0_37] : memref<49x16x16xf32, #tpu.memory_space<vmem>>, vector<1x16x16xf32>
    %78 = vector.shape_cast %77 : vector<1x16x16xf32> to vector<16x16xf32>
    %79 = arith.mulf %76, %78 : vector<16x16xf32>
    %80 = arith.addf %56, %79 : vector<16x16xf32>
    %c123_i32_38 = arith.constant 123 : i32
    %81 = tpu.dynamic_rotate %51 by %c123_i32_38 dim 1 : vector<16x128xf32>, i32 -> vector<16x128xf32>
    %82 = vector.extract_strided_slice %81 {offsets = [0, 0], sizes = [16, 16], strides = [1, 1]} : vector<16x128xf32> to vector<16x16xf32>
    %c12 = arith.constant 12 : index
    %c0_39 = arith.constant 0 : index
    %c0_40 = arith.constant 0 : index
    %83 = vector.load %arg5[%c12, %c0_39, %c0_40] : memref<49x16x16xf32, #tpu.memory_space<vmem>>, vector<1x16x16xf32>
    %84 = vector.shape_cast %83 : vector<1x16x16xf32> to vector<16x16xf32>
    %85 = arith.mulf %82, %84 : vector<16x16xf32>
    %86 = arith.addf %62, %85 : vector<16x16xf32>
    %c122_i32_41 = arith.constant 122 : i32
    %87 = tpu.dynamic_rotate %51 by %c122_i32_41 dim 1 : vector<16x128xf32>, i32 -> vector<16x128xf32>
    %88 = vector.extract_strided_slice %87 {offsets = [0, 0], sizes = [16, 16], strides = [1, 1]} : vector<16x128xf32> to vector<16x16xf32>
    %c13 = arith.constant 13 : index
    %c0_42 = arith.constant 0 : index
    %c0_43 = arith.constant 0 : index
    %89 = vector.load %arg5[%c13, %c0_42, %c0_43] : memref<49x16x16xf32, #tpu.memory_space<vmem>>, vector<1x16x16xf32>
    %90 = vector.shape_cast %89 : vector<1x16x16xf32> to vector<16x16xf32>
    %91 = arith.mulf %88, %90 : vector<16x16xf32>
    %92 = arith.addf %68, %91 : vector<16x16xf32>
    %c0_44 = arith.constant 0 : index
    %c2_45 = arith.constant 2 : index
    %c0_46 = arith.constant 0 : index
    %93 = vector.load %arg2[%c0_44, %c2_45, %c0_46] : memref<1x22x128xf32, #tpu.memory_space<vmem>>, vector<1x16x128xf32>
    %94 = vector.shape_cast %93 : vector<1x16x128xf32> to vector<16x128xf32>
    %95 = vector.extract_strided_slice %94 {offsets = [0, 0], sizes = [16, 16], strides = [1, 1]} : vector<16x128xf32> to vector<16x16xf32>
    %c14 = arith.constant 14 : index
    %c0_47 = arith.constant 0 : index
    %c0_48 = arith.constant 0 : index
    %96 = vector.load %arg5[%c14, %c0_47, %c0_48] : memref<49x16x16xf32, #tpu.memory_space<vmem>>, vector<1x16x16xf32>
    %97 = vector.shape_cast %96 : vector<1x16x16xf32> to vector<16x16xf32>
    %98 = arith.mulf %95, %97 : vector<16x16xf32>
    %99 = arith.addf %74, %98 : vector<16x16xf32>
    %c127_i32_49 = arith.constant 127 : i32
    %100 = tpu.dynamic_rotate %94 by %c127_i32_49 dim 1 : vector<16x128xf32>, i32 -> vector<16x128xf32>
    %101 = vector.extract_strided_slice %100 {offsets = [0, 0], sizes = [16, 16], strides = [1, 1]} : vector<16x128xf32> to vector<16x16xf32>
    %c15 = arith.constant 15 : index
    %c0_50 = arith.constant 0 : index
    %c0_51 = arith.constant 0 : index
    %102 = vector.load %arg5[%c15, %c0_50, %c0_51] : memref<49x16x16xf32, #tpu.memory_space<vmem>>, vector<1x16x16xf32>
    %103 = vector.shape_cast %102 : vector<1x16x16xf32> to vector<16x16xf32>
    %104 = arith.mulf %101, %103 : vector<16x16xf32>
    %105 = arith.addf %80, %104 : vector<16x16xf32>
    %c126_i32_52 = arith.constant 126 : i32
    %106 = tpu.dynamic_rotate %94 by %c126_i32_52 dim 1 : vector<16x128xf32>, i32 -> vector<16x128xf32>
    %107 = vector.extract_strided_slice %106 {offsets = [0, 0], sizes = [16, 16], strides = [1, 1]} : vector<16x128xf32> to vector<16x16xf32>
    %c16 = arith.constant 16 : index
    %c0_53 = arith.constant 0 : index
    %c0_54 = arith.constant 0 : index
    %108 = vector.load %arg5[%c16, %c0_53, %c0_54] : memref<49x16x16xf32, #tpu.memory_space<vmem>>, vector<1x16x16xf32>
    %109 = vector.shape_cast %108 : vector<1x16x16xf32> to vector<16x16xf32>
    %110 = arith.mulf %107, %109 : vector<16x16xf32>
    %111 = arith.addf %86, %110 : vector<16x16xf32>
    %c125_i32_55 = arith.constant 125 : i32
    %112 = tpu.dynamic_rotate %94 by %c125_i32_55 dim 1 : vector<16x128xf32>, i32 -> vector<16x128xf32>
    %113 = vector.extract_strided_slice %112 {offsets = [0, 0], sizes = [16, 16], strides = [1, 1]} : vector<16x128xf32> to vector<16x16xf32>
    %c17 = arith.constant 17 : index
    %c0_56 = arith.constant 0 : index
    %c0_57 = arith.constant 0 : index
    %114 = vector.load %arg5[%c17, %c0_56, %c0_57] : memref<49x16x16xf32, #tpu.memory_space<vmem>>, vector<1x16x16xf32>
    %115 = vector.shape_cast %114 : vector<1x16x16xf32> to vector<16x16xf32>
    %116 = arith.mulf %113, %115 : vector<16x16xf32>
    %117 = arith.addf %92, %116 : vector<16x16xf32>
    %c124_i32_58 = arith.constant 124 : i32
    %118 = tpu.dynamic_rotate %94 by %c124_i32_58 dim 1 : vector<16x128xf32>, i32 -> vector<16x128xf32>
    %119 = vector.extract_strided_slice %118 {offsets = [0, 0], sizes = [16, 16], strides = [1, 1]} : vector<16x128xf32> to vector<16x16xf32>
    %c18 = arith.constant 18 : index
    %c0_59 = arith.constant 0 : index
    %c0_60 = arith.constant 0 : index
    %120 = vector.load %arg5[%c18, %c0_59, %c0_60] : memref<49x16x16xf32, #tpu.memory_space<vmem>>, vector<1x16x16xf32>
    %121 = vector.shape_cast %120 : vector<1x16x16xf32> to vector<16x16xf32>
    %122 = arith.mulf %119, %121 : vector<16x16xf32>
    %123 = arith.addf %99, %122 : vector<16x16xf32>
    %c123_i32_61 = arith.constant 123 : i32
    %124 = tpu.dynamic_rotate %94 by %c123_i32_61 dim 1 : vector<16x128xf32>, i32 -> vector<16x128xf32>
    %125 = vector.extract_strided_slice %124 {offsets = [0, 0], sizes = [16, 16], strides = [1, 1]} : vector<16x128xf32> to vector<16x16xf32>
    %c19 = arith.constant 19 : index
    %c0_62 = arith.constant 0 : index
    %c0_63 = arith.constant 0 : index
    %126 = vector.load %arg5[%c19, %c0_62, %c0_63] : memref<49x16x16xf32, #tpu.memory_space<vmem>>, vector<1x16x16xf32>
    %127 = vector.shape_cast %126 : vector<1x16x16xf32> to vector<16x16xf32>
    %128 = arith.mulf %125, %127 : vector<16x16xf32>
    %129 = arith.addf %105, %128 : vector<16x16xf32>
    %c122_i32_64 = arith.constant 122 : i32
    %130 = tpu.dynamic_rotate %94 by %c122_i32_64 dim 1 : vector<16x128xf32>, i32 -> vector<16x128xf32>
    %131 = vector.extract_strided_slice %130 {offsets = [0, 0], sizes = [16, 16], strides = [1, 1]} : vector<16x128xf32> to vector<16x16xf32>
    %c20 = arith.constant 20 : index
    %c0_65 = arith.constant 0 : index
    %c0_66 = arith.constant 0 : index
    %132 = vector.load %arg5[%c20, %c0_65, %c0_66] : memref<49x16x16xf32, #tpu.memory_space<vmem>>, vector<1x16x16xf32>
    %133 = vector.shape_cast %132 : vector<1x16x16xf32> to vector<16x16xf32>
    %134 = arith.mulf %131, %133 : vector<16x16xf32>
    %135 = arith.addf %111, %134 : vector<16x16xf32>
    %c0_67 = arith.constant 0 : index
    %c3_68 = arith.constant 3 : index
    %c0_69 = arith.constant 0 : index
    %136 = vector.load %arg2[%c0_67, %c3_68, %c0_69] : memref<1x22x128xf32, #tpu.memory_space<vmem>>, vector<1x16x128xf32>
    %137 = vector.shape_cast %136 : vector<1x16x128xf32> to vector<16x128xf32>
    %138 = vector.extract_strided_slice %137 {offsets = [0, 0], sizes = [16, 16], strides = [1, 1]} : vector<16x128xf32> to vector<16x16xf32>
    %c21 = arith.constant 21 : index
    %c0_70 = arith.constant 0 : index
    %c0_71 = arith.constant 0 : index
    %139 = vector.load %arg5[%c21, %c0_70, %c0_71] : memref<49x16x16xf32, #tpu.memory_space<vmem>>, vector<1x16x16xf32>
    %140 = vector.shape_cast %139 : vector<1x16x16xf32> to vector<16x16xf32>
    %141 = arith.mulf %138, %140 : vector<16x16xf32>
    %142 = arith.addf %117, %141 : vector<16x16xf32>
    %c127_i32_72 = arith.constant 127 : i32
    %143 = tpu.dynamic_rotate %137 by %c127_i32_72 dim 1 : vector<16x128xf32>, i32 -> vector<16x128xf32>
    %144 = vector.extract_strided_slice %143 {offsets = [0, 0], sizes = [16, 16], strides = [1, 1]} : vector<16x128xf32> to vector<16x16xf32>
    %c22 = arith.constant 22 : index
    %c0_73 = arith.constant 0 : index
    %c0_74 = arith.constant 0 : index
    %145 = vector.load %arg5[%c22, %c0_73, %c0_74] : memref<49x16x16xf32, #tpu.memory_space<vmem>>, vector<1x16x16xf32>
    %146 = vector.shape_cast %145 : vector<1x16x16xf32> to vector<16x16xf32>
    %147 = arith.mulf %144, %146 : vector<16x16xf32>
    %148 = arith.addf %123, %147 : vector<16x16xf32>
    %c126_i32_75 = arith.constant 126 : i32
    %149 = tpu.dynamic_rotate %137 by %c126_i32_75 dim 1 : vector<16x128xf32>, i32 -> vector<16x128xf32>
    %150 = vector.extract_strided_slice %149 {offsets = [0, 0], sizes = [16, 16], strides = [1, 1]} : vector<16x128xf32> to vector<16x16xf32>
    %c23 = arith.constant 23 : index
    %c0_76 = arith.constant 0 : index
    %c0_77 = arith.constant 0 : index
    %151 = vector.load %arg5[%c23, %c0_76, %c0_77] : memref<49x16x16xf32, #tpu.memory_space<vmem>>, vector<1x16x16xf32>
    %152 = vector.shape_cast %151 : vector<1x16x16xf32> to vector<16x16xf32>
    %153 = arith.mulf %150, %152 : vector<16x16xf32>
    %154 = arith.addf %129, %153 : vector<16x16xf32>
    %c125_i32_78 = arith.constant 125 : i32
    %155 = tpu.dynamic_rotate %137 by %c125_i32_78 dim 1 : vector<16x128xf32>, i32 -> vector<16x128xf32>
    %156 = vector.extract_strided_slice %155 {offsets = [0, 0], sizes = [16, 16], strides = [1, 1]} : vector<16x128xf32> to vector<16x16xf32>
    %c24 = arith.constant 24 : index
    %c0_79 = arith.constant 0 : index
    %c0_80 = arith.constant 0 : index
    %157 = vector.load %arg5[%c24, %c0_79, %c0_80] : memref<49x16x16xf32, #tpu.memory_space<vmem>>, vector<1x16x16xf32>
    %158 = vector.shape_cast %157 : vector<1x16x16xf32> to vector<16x16xf32>
    %159 = arith.mulf %156, %158 : vector<16x16xf32>
    %160 = arith.addf %135, %159 : vector<16x16xf32>
    %c124_i32_81 = arith.constant 124 : i32
    %161 = tpu.dynamic_rotate %137 by %c124_i32_81 dim 1 : vector<16x128xf32>, i32 -> vector<16x128xf32>
    %162 = vector.extract_strided_slice %161 {offsets = [0, 0], sizes = [16, 16], strides = [1, 1]} : vector<16x128xf32> to vector<16x16xf32>
    %c25 = arith.constant 25 : index
    %c0_82 = arith.constant 0 : index
    %c0_83 = arith.constant 0 : index
    %163 = vector.load %arg5[%c25, %c0_82, %c0_83] : memref<49x16x16xf32, #tpu.memory_space<vmem>>, vector<1x16x16xf32>
    %164 = vector.shape_cast %163 : vector<1x16x16xf32> to vector<16x16xf32>
    %165 = arith.mulf %162, %164 : vector<16x16xf32>
    %166 = arith.addf %142, %165 : vector<16x16xf32>
    %c123_i32_84 = arith.constant 123 : i32
    %167 = tpu.dynamic_rotate %137 by %c123_i32_84 dim 1 : vector<16x128xf32>, i32 -> vector<16x128xf32>
    %168 = vector.extract_strided_slice %167 {offsets = [0, 0], sizes = [16, 16], strides = [1, 1]} : vector<16x128xf32> to vector<16x16xf32>
    %c26 = arith.constant 26 : index
    %c0_85 = arith.constant 0 : index
    %c0_86 = arith.constant 0 : index
    %169 = vector.load %arg5[%c26, %c0_85, %c0_86] : memref<49x16x16xf32, #tpu.memory_space<vmem>>, vector<1x16x16xf32>
    %170 = vector.shape_cast %169 : vector<1x16x16xf32> to vector<16x16xf32>
    %171 = arith.mulf %168, %170 : vector<16x16xf32>
    %172 = arith.addf %148, %171 : vector<16x16xf32>
    %c122_i32_87 = arith.constant 122 : i32
    %173 = tpu.dynamic_rotate %137 by %c122_i32_87 dim 1 : vector<16x128xf32>, i32 -> vector<16x128xf32>
    %174 = vector.extract_strided_slice %173 {offsets = [0, 0], sizes = [16, 16], strides = [1, 1]} : vector<16x128xf32> to vector<16x16xf32>
    %c27 = arith.constant 27 : index
    %c0_88 = arith.constant 0 : index
    %c0_89 = arith.constant 0 : index
    %175 = vector.load %arg5[%c27, %c0_88, %c0_89] : memref<49x16x16xf32, #tpu.memory_space<vmem>>, vector<1x16x16xf32>
    %176 = vector.shape_cast %175 : vector<1x16x16xf32> to vector<16x16xf32>
    %177 = arith.mulf %174, %176 : vector<16x16xf32>
    %178 = arith.addf %154, %177 : vector<16x16xf32>
    %c0_90 = arith.constant 0 : index
    %c4_91 = arith.constant 4 : index
    %c0_92 = arith.constant 0 : index
    %179 = vector.load %arg2[%c0_90, %c4_91, %c0_92] : memref<1x22x128xf32, #tpu.memory_space<vmem>>, vector<1x16x128xf32>
    %180 = vector.shape_cast %179 : vector<1x16x128xf32> to vector<16x128xf32>
    %181 = vector.extract_strided_slice %180 {offsets = [0, 0], sizes = [16, 16], strides = [1, 1]} : vector<16x128xf32> to vector<16x16xf32>
    %c28 = arith.constant 28 : index
    %c0_93 = arith.constant 0 : index
    %c0_94 = arith.constant 0 : index
    %182 = vector.load %arg5[%c28, %c0_93, %c0_94] : memref<49x16x16xf32, #tpu.memory_space<vmem>>, vector<1x16x16xf32>
    %183 = vector.shape_cast %182 : vector<1x16x16xf32> to vector<16x16xf32>
    %184 = arith.mulf %181, %183 : vector<16x16xf32>
    %185 = arith.addf %160, %184 : vector<16x16xf32>
    %c127_i32_95 = arith.constant 127 : i32
    %186 = tpu.dynamic_rotate %180 by %c127_i32_95 dim 1 : vector<16x128xf32>, i32 -> vector<16x128xf32>
    %187 = vector.extract_strided_slice %186 {offsets = [0, 0], sizes = [16, 16], strides = [1, 1]} : vector<16x128xf32> to vector<16x16xf32>
    %c29 = arith.constant 29 : index
    %c0_96 = arith.constant 0 : index
    %c0_97 = arith.constant 0 : index
    %188 = vector.load %arg5[%c29, %c0_96, %c0_97] : memref<49x16x16xf32, #tpu.memory_space<vmem>>, vector<1x16x16xf32>
    %189 = vector.shape_cast %188 : vector<1x16x16xf32> to vector<16x16xf32>
    %190 = arith.mulf %187, %189 : vector<16x16xf32>
    %191 = arith.addf %166, %190 : vector<16x16xf32>
    %c126_i32_98 = arith.constant 126 : i32
    %192 = tpu.dynamic_rotate %180 by %c126_i32_98 dim 1 : vector<16x128xf32>, i32 -> vector<16x128xf32>
    %193 = vector.extract_strided_slice %192 {offsets = [0, 0], sizes = [16, 16], strides = [1, 1]} : vector<16x128xf32> to vector<16x16xf32>
    %c30 = arith.constant 30 : index
    %c0_99 = arith.constant 0 : index
    %c0_100 = arith.constant 0 : index
    %194 = vector.load %arg5[%c30, %c0_99, %c0_100] : memref<49x16x16xf32, #tpu.memory_space<vmem>>, vector<1x16x16xf32>
    %195 = vector.shape_cast %194 : vector<1x16x16xf32> to vector<16x16xf32>
    %196 = arith.mulf %193, %195 : vector<16x16xf32>
    %197 = arith.addf %172, %196 : vector<16x16xf32>
    %c125_i32_101 = arith.constant 125 : i32
    %198 = tpu.dynamic_rotate %180 by %c125_i32_101 dim 1 : vector<16x128xf32>, i32 -> vector<16x128xf32>
    %199 = vector.extract_strided_slice %198 {offsets = [0, 0], sizes = [16, 16], strides = [1, 1]} : vector<16x128xf32> to vector<16x16xf32>
    %c31 = arith.constant 31 : index
    %c0_102 = arith.constant 0 : index
    %c0_103 = arith.constant 0 : index
    %200 = vector.load %arg5[%c31, %c0_102, %c0_103] : memref<49x16x16xf32, #tpu.memory_space<vmem>>, vector<1x16x16xf32>
    %201 = vector.shape_cast %200 : vector<1x16x16xf32> to vector<16x16xf32>
    %202 = arith.mulf %199, %201 : vector<16x16xf32>
    %203 = arith.addf %178, %202 : vector<16x16xf32>
    %c124_i32_104 = arith.constant 124 : i32
    %204 = tpu.dynamic_rotate %180 by %c124_i32_104 dim 1 : vector<16x128xf32>, i32 -> vector<16x128xf32>
    %205 = vector.extract_strided_slice %204 {offsets = [0, 0], sizes = [16, 16], strides = [1, 1]} : vector<16x128xf32> to vector<16x16xf32>
    %c32 = arith.constant 32 : index
    %c0_105 = arith.constant 0 : index
    %c0_106 = arith.constant 0 : index
    %206 = vector.load %arg5[%c32, %c0_105, %c0_106] : memref<49x16x16xf32, #tpu.memory_space<vmem>>, vector<1x16x16xf32>
    %207 = vector.shape_cast %206 : vector<1x16x16xf32> to vector<16x16xf32>
    %208 = arith.mulf %205, %207 : vector<16x16xf32>
    %209 = arith.addf %185, %208 : vector<16x16xf32>
    %c123_i32_107 = arith.constant 123 : i32
    %210 = tpu.dynamic_rotate %180 by %c123_i32_107 dim 1 : vector<16x128xf32>, i32 -> vector<16x128xf32>
    %211 = vector.extract_strided_slice %210 {offsets = [0, 0], sizes = [16, 16], strides = [1, 1]} : vector<16x128xf32> to vector<16x16xf32>
    %c33 = arith.constant 33 : index
    %c0_108 = arith.constant 0 : index
    %c0_109 = arith.constant 0 : index
    %212 = vector.load %arg5[%c33, %c0_108, %c0_109] : memref<49x16x16xf32, #tpu.memory_space<vmem>>, vector<1x16x16xf32>
    %213 = vector.shape_cast %212 : vector<1x16x16xf32> to vector<16x16xf32>
    %214 = arith.mulf %211, %213 : vector<16x16xf32>
    %215 = arith.addf %191, %214 : vector<16x16xf32>
    %c122_i32_110 = arith.constant 122 : i32
    %216 = tpu.dynamic_rotate %180 by %c122_i32_110 dim 1 : vector<16x128xf32>, i32 -> vector<16x128xf32>
    %217 = vector.extract_strided_slice %216 {offsets = [0, 0], sizes = [16, 16], strides = [1, 1]} : vector<16x128xf32> to vector<16x16xf32>
    %c34 = arith.constant 34 : index
    %c0_111 = arith.constant 0 : index
    %c0_112 = arith.constant 0 : index
    %218 = vector.load %arg5[%c34, %c0_111, %c0_112] : memref<49x16x16xf32, #tpu.memory_space<vmem>>, vector<1x16x16xf32>
    %219 = vector.shape_cast %218 : vector<1x16x16xf32> to vector<16x16xf32>
    %220 = arith.mulf %217, %219 : vector<16x16xf32>
    %221 = arith.addf %197, %220 : vector<16x16xf32>
    %c0_113 = arith.constant 0 : index
    %c5_114 = arith.constant 5 : index
    %c0_115 = arith.constant 0 : index
    %222 = vector.load %arg2[%c0_113, %c5_114, %c0_115] : memref<1x22x128xf32, #tpu.memory_space<vmem>>, vector<1x16x128xf32>
    %223 = vector.shape_cast %222 : vector<1x16x128xf32> to vector<16x128xf32>
    %224 = vector.extract_strided_slice %223 {offsets = [0, 0], sizes = [16, 16], strides = [1, 1]} : vector<16x128xf32> to vector<16x16xf32>
    %c35 = arith.constant 35 : index
    %c0_116 = arith.constant 0 : index
    %c0_117 = arith.constant 0 : index
    %225 = vector.load %arg5[%c35, %c0_116, %c0_117] : memref<49x16x16xf32, #tpu.memory_space<vmem>>, vector<1x16x16xf32>
    %226 = vector.shape_cast %225 : vector<1x16x16xf32> to vector<16x16xf32>
    %227 = arith.mulf %224, %226 : vector<16x16xf32>
    %228 = arith.addf %203, %227 : vector<16x16xf32>
    %c127_i32_118 = arith.constant 127 : i32
    %229 = tpu.dynamic_rotate %223 by %c127_i32_118 dim 1 : vector<16x128xf32>, i32 -> vector<16x128xf32>
    %230 = vector.extract_strided_slice %229 {offsets = [0, 0], sizes = [16, 16], strides = [1, 1]} : vector<16x128xf32> to vector<16x16xf32>
    %c36 = arith.constant 36 : index
    %c0_119 = arith.constant 0 : index
    %c0_120 = arith.constant 0 : index
    %231 = vector.load %arg5[%c36, %c0_119, %c0_120] : memref<49x16x16xf32, #tpu.memory_space<vmem>>, vector<1x16x16xf32>
    %232 = vector.shape_cast %231 : vector<1x16x16xf32> to vector<16x16xf32>
    %233 = arith.mulf %230, %232 : vector<16x16xf32>
    %234 = arith.addf %209, %233 : vector<16x16xf32>
    %c126_i32_121 = arith.constant 126 : i32
    %235 = tpu.dynamic_rotate %223 by %c126_i32_121 dim 1 : vector<16x128xf32>, i32 -> vector<16x128xf32>
    %236 = vector.extract_strided_slice %235 {offsets = [0, 0], sizes = [16, 16], strides = [1, 1]} : vector<16x128xf32> to vector<16x16xf32>
    %c37 = arith.constant 37 : index
    %c0_122 = arith.constant 0 : index
    %c0_123 = arith.constant 0 : index
    %237 = vector.load %arg5[%c37, %c0_122, %c0_123] : memref<49x16x16xf32, #tpu.memory_space<vmem>>, vector<1x16x16xf32>
    %238 = vector.shape_cast %237 : vector<1x16x16xf32> to vector<16x16xf32>
    %239 = arith.mulf %236, %238 : vector<16x16xf32>
    %240 = arith.addf %215, %239 : vector<16x16xf32>
    %c125_i32_124 = arith.constant 125 : i32
    %241 = tpu.dynamic_rotate %223 by %c125_i32_124 dim 1 : vector<16x128xf32>, i32 -> vector<16x128xf32>
    %242 = vector.extract_strided_slice %241 {offsets = [0, 0], sizes = [16, 16], strides = [1, 1]} : vector<16x128xf32> to vector<16x16xf32>
    %c38 = arith.constant 38 : index
    %c0_125 = arith.constant 0 : index
    %c0_126 = arith.constant 0 : index
    %243 = vector.load %arg5[%c38, %c0_125, %c0_126] : memref<49x16x16xf32, #tpu.memory_space<vmem>>, vector<1x16x16xf32>
    %244 = vector.shape_cast %243 : vector<1x16x16xf32> to vector<16x16xf32>
    %245 = arith.mulf %242, %244 : vector<16x16xf32>
    %246 = arith.addf %221, %245 : vector<16x16xf32>
    %c124_i32_127 = arith.constant 124 : i32
    %247 = tpu.dynamic_rotate %223 by %c124_i32_127 dim 1 : vector<16x128xf32>, i32 -> vector<16x128xf32>
    %248 = vector.extract_strided_slice %247 {offsets = [0, 0], sizes = [16, 16], strides = [1, 1]} : vector<16x128xf32> to vector<16x16xf32>
    %c39 = arith.constant 39 : index
    %c0_128 = arith.constant 0 : index
    %c0_129 = arith.constant 0 : index
    %249 = vector.load %arg5[%c39, %c0_128, %c0_129] : memref<49x16x16xf32, #tpu.memory_space<vmem>>, vector<1x16x16xf32>
    %250 = vector.shape_cast %249 : vector<1x16x16xf32> to vector<16x16xf32>
    %251 = arith.mulf %248, %250 : vector<16x16xf32>
    %252 = arith.addf %228, %251 : vector<16x16xf32>
    %c123_i32_130 = arith.constant 123 : i32
    %253 = tpu.dynamic_rotate %223 by %c123_i32_130 dim 1 : vector<16x128xf32>, i32 -> vector<16x128xf32>
    %254 = vector.extract_strided_slice %253 {offsets = [0, 0], sizes = [16, 16], strides = [1, 1]} : vector<16x128xf32> to vector<16x16xf32>
    %c40 = arith.constant 40 : index
    %c0_131 = arith.constant 0 : index
    %c0_132 = arith.constant 0 : index
    %255 = vector.load %arg5[%c40, %c0_131, %c0_132] : memref<49x16x16xf32, #tpu.memory_space<vmem>>, vector<1x16x16xf32>
    %256 = vector.shape_cast %255 : vector<1x16x16xf32> to vector<16x16xf32>
    %257 = arith.mulf %254, %256 : vector<16x16xf32>
    %258 = arith.addf %234, %257 : vector<16x16xf32>
    %c122_i32_133 = arith.constant 122 : i32
    %259 = tpu.dynamic_rotate %223 by %c122_i32_133 dim 1 : vector<16x128xf32>, i32 -> vector<16x128xf32>
    %260 = vector.extract_strided_slice %259 {offsets = [0, 0], sizes = [16, 16], strides = [1, 1]} : vector<16x128xf32> to vector<16x16xf32>
    %c41 = arith.constant 41 : index
    %c0_134 = arith.constant 0 : index
    %c0_135 = arith.constant 0 : index
    %261 = vector.load %arg5[%c41, %c0_134, %c0_135] : memref<49x16x16xf32, #tpu.memory_space<vmem>>, vector<1x16x16xf32>
    %262 = vector.shape_cast %261 : vector<1x16x16xf32> to vector<16x16xf32>
    %263 = arith.mulf %260, %262 : vector<16x16xf32>
    %264 = arith.addf %240, %263 : vector<16x16xf32>
    %c0_136 = arith.constant 0 : index
    %c6_137 = arith.constant 6 : index
    %c0_138 = arith.constant 0 : index
    %265 = vector.load %arg2[%c0_136, %c6_137, %c0_138] : memref<1x22x128xf32, #tpu.memory_space<vmem>>, vector<1x16x128xf32>
    %266 = vector.shape_cast %265 : vector<1x16x128xf32> to vector<16x128xf32>
    %267 = vector.extract_strided_slice %266 {offsets = [0, 0], sizes = [16, 16], strides = [1, 1]} : vector<16x128xf32> to vector<16x16xf32>
    %c42 = arith.constant 42 : index
    %c0_139 = arith.constant 0 : index
    %c0_140 = arith.constant 0 : index
    %268 = vector.load %arg5[%c42, %c0_139, %c0_140] : memref<49x16x16xf32, #tpu.memory_space<vmem>>, vector<1x16x16xf32>
    %269 = vector.shape_cast %268 : vector<1x16x16xf32> to vector<16x16xf32>
    %270 = arith.mulf %267, %269 : vector<16x16xf32>
    %271 = arith.addf %246, %270 : vector<16x16xf32>
    %c127_i32_141 = arith.constant 127 : i32
    %272 = tpu.dynamic_rotate %266 by %c127_i32_141 dim 1 : vector<16x128xf32>, i32 -> vector<16x128xf32>
    %273 = vector.extract_strided_slice %272 {offsets = [0, 0], sizes = [16, 16], strides = [1, 1]} : vector<16x128xf32> to vector<16x16xf32>
    %c43 = arith.constant 43 : index
    %c0_142 = arith.constant 0 : index
    %c0_143 = arith.constant 0 : index
    %274 = vector.load %arg5[%c43, %c0_142, %c0_143] : memref<49x16x16xf32, #tpu.memory_space<vmem>>, vector<1x16x16xf32>
    %275 = vector.shape_cast %274 : vector<1x16x16xf32> to vector<16x16xf32>
    %276 = arith.mulf %273, %275 : vector<16x16xf32>
    %277 = arith.addf %252, %276 : vector<16x16xf32>
    %c126_i32_144 = arith.constant 126 : i32
    %278 = tpu.dynamic_rotate %266 by %c126_i32_144 dim 1 : vector<16x128xf32>, i32 -> vector<16x128xf32>
    %279 = vector.extract_strided_slice %278 {offsets = [0, 0], sizes = [16, 16], strides = [1, 1]} : vector<16x128xf32> to vector<16x16xf32>
    %c44 = arith.constant 44 : index
    %c0_145 = arith.constant 0 : index
    %c0_146 = arith.constant 0 : index
    %280 = vector.load %arg5[%c44, %c0_145, %c0_146] : memref<49x16x16xf32, #tpu.memory_space<vmem>>, vector<1x16x16xf32>
    %281 = vector.shape_cast %280 : vector<1x16x16xf32> to vector<16x16xf32>
    %282 = arith.mulf %279, %281 : vector<16x16xf32>
    %283 = arith.addf %258, %282 : vector<16x16xf32>
    %c125_i32_147 = arith.constant 125 : i32
    %284 = tpu.dynamic_rotate %266 by %c125_i32_147 dim 1 : vector<16x128xf32>, i32 -> vector<16x128xf32>
    %285 = vector.extract_strided_slice %284 {offsets = [0, 0], sizes = [16, 16], strides = [1, 1]} : vector<16x128xf32> to vector<16x16xf32>
    %c45 = arith.constant 45 : index
    %c0_148 = arith.constant 0 : index
    %c0_149 = arith.constant 0 : index
    %286 = vector.load %arg5[%c45, %c0_148, %c0_149] : memref<49x16x16xf32, #tpu.memory_space<vmem>>, vector<1x16x16xf32>
    %287 = vector.shape_cast %286 : vector<1x16x16xf32> to vector<16x16xf32>
    %288 = arith.mulf %285, %287 : vector<16x16xf32>
    %289 = arith.addf %264, %288 : vector<16x16xf32>
    %c124_i32_150 = arith.constant 124 : i32
    %290 = tpu.dynamic_rotate %266 by %c124_i32_150 dim 1 : vector<16x128xf32>, i32 -> vector<16x128xf32>
    %291 = vector.extract_strided_slice %290 {offsets = [0, 0], sizes = [16, 16], strides = [1, 1]} : vector<16x128xf32> to vector<16x16xf32>
    %c46 = arith.constant 46 : index
    %c0_151 = arith.constant 0 : index
    %c0_152 = arith.constant 0 : index
    %292 = vector.load %arg5[%c46, %c0_151, %c0_152] : memref<49x16x16xf32, #tpu.memory_space<vmem>>, vector<1x16x16xf32>
    %293 = vector.shape_cast %292 : vector<1x16x16xf32> to vector<16x16xf32>
    %294 = arith.mulf %291, %293 : vector<16x16xf32>
    %295 = arith.addf %271, %294 : vector<16x16xf32>
    %c123_i32_153 = arith.constant 123 : i32
    %296 = tpu.dynamic_rotate %266 by %c123_i32_153 dim 1 : vector<16x128xf32>, i32 -> vector<16x128xf32>
    %297 = vector.extract_strided_slice %296 {offsets = [0, 0], sizes = [16, 16], strides = [1, 1]} : vector<16x128xf32> to vector<16x16xf32>
    %c47 = arith.constant 47 : index
    %c0_154 = arith.constant 0 : index
    %c0_155 = arith.constant 0 : index
    %298 = vector.load %arg5[%c47, %c0_154, %c0_155] : memref<49x16x16xf32, #tpu.memory_space<vmem>>, vector<1x16x16xf32>
    %299 = vector.shape_cast %298 : vector<1x16x16xf32> to vector<16x16xf32>
    %300 = arith.mulf %297, %299 : vector<16x16xf32>
    %301 = arith.addf %277, %300 : vector<16x16xf32>
    %c122_i32_156 = arith.constant 122 : i32
    %302 = tpu.dynamic_rotate %266 by %c122_i32_156 dim 1 : vector<16x128xf32>, i32 -> vector<16x128xf32>
    %303 = vector.extract_strided_slice %302 {offsets = [0, 0], sizes = [16, 16], strides = [1, 1]} : vector<16x128xf32> to vector<16x16xf32>
    %c48 = arith.constant 48 : index
    %c0_157 = arith.constant 0 : index
    %c0_158 = arith.constant 0 : index
    %304 = vector.load %arg5[%c48, %c0_157, %c0_158] : memref<49x16x16xf32, #tpu.memory_space<vmem>>, vector<1x16x16xf32>
    %305 = vector.shape_cast %304 : vector<1x16x16xf32> to vector<16x16xf32>
    %306 = arith.mulf %303, %305 : vector<16x16xf32>
    %307 = arith.addf %283, %306 : vector<16x16xf32>
    %308 = arith.addf %307, %289 : vector<16x16xf32>
    %309 = arith.addf %295, %301 : vector<16x16xf32>
    %310 = arith.addf %308, %309 : vector<16x16xf32>
    %c0_159 = arith.constant 0 : index
    %c0_160 = arith.constant 0 : index
    %c0_161 = arith.constant 0 : index
    %311 = vector.load %arg4[%c0_159, %c0_160, %c0_161] : memref<1x16x16xf32, #tpu.memory_space<vmem>>, vector<1x16x16xf32>
    %312 = vector.shape_cast %311 : vector<1x16x16xf32> to vector<16x16xf32>
    %313 = vector.shape_cast %310 : vector<16x16xf32> to vector<1x16x16xf32>
    tpu.vector_store %arg4[%c0_159, %c0_160, %c0_161], %313 {strides = array<i32>} : memref<1x16x16xf32, #tpu.memory_space<vmem>>, vector<1x16x16xf32>,
    return
  }
  func.func @transform_0(%arg0: i32, %arg1: i32) -> (i32, i32, i32) {
    %c2_i32 = arith.constant 2 : i32
    %0 = arith.muli %arg1, %c2_i32 : i32
    %1 = arith.addi %arg0, %0 : i32
    %c0_i32 = arith.constant 0 : i32
    %c0_i32_0 = arith.constant 0 : i32
    %c0_i32_1 = arith.constant 0 : i32
    return %1, %c0_i32, %c0_i32_0 : i32, i32, i32
  }
  func.func @transform_1(%arg0: i32, %arg1: i32) -> (i32, i32, i32, i32) {
    %c0_i32 = arith.constant 0 : i32
    %c0_i32_0 = arith.constant 0 : i32
    %c0_i32_1 = arith.constant 0 : i32
    %c0_i32_2 = arith.constant 0 : i32
    return %arg0, %c0_i32, %c0_i32_0, %c0_i32_1 : i32, i32, i32, i32
  }
  func.func @transform_2(%arg0: i32, %arg1: i32) -> (i32, i32, i32) {
    %c2_i32 = arith.constant 2 : i32
    %0 = arith.muli %arg1, %c2_i32 : i32
    %1 = arith.addi %arg0, %0 : i32
    %c0_i32 = arith.constant 0 : i32
    %c0_i32_0 = arith.constant 0 : i32
    %c0_i32_1 = arith.constant 0 : i32
    return %1, %c0_i32, %c0_i32_0 : i32, i32, i32
  }
}

</mosaic_0001>

<llo_original>
// kernel: tpu_custom_call.1
$region0: #{tpu_custom_call.1}
  #allocation0 [shape = 'u32[]', space=smem, size = 0x4, offset = 0x4, fixed_abs, tag = 'smem constant byte address 0x4 - core index']
  #allocation1 [shape = 'u32[144,128]{1,0:T(1,128)}', space=vmem, size = 0x12000, scoped, tag = 'internal scratch']
  #allocation2 [shape = 'f32[49,16,16]{2,1,0:T(8,128)}', space=vmem, size = 0x62000, scoped, tag = 'scratch operand']
  %s0 = inlined_call_operand.vmem [shape: f32[6,22,128], index: 0, kind: input, shape index: {}]
  %s1 = inlined_call_operand.vmem [shape: bf16[2,49,16,16], index: 1, kind: input, shape index: {}]
  %s2 = inlined_call_operand.hbm [shape: f32[6,16,16], index: 2, kind: output, shape index: {}]
  %s3 = sld [smem:[#allocation0]]
  $region45: #{tpu_custom_call.1} parent=0
    _
  %s5 = ssub.s32 1, %s3
  %s6 = scalar_select 0, %s5, %s3
  $region1: #{tpu_custom_call.1} parent=0
    #allocation3 [shape = 'u8[16384]{0}', space=vmem, size = 0x4000, scoped, tag = 'output window, operand 0']
    #allocation4 [shape = 's32[2]{0}', space=sflag, size = 0x8, scoped, tag = 'scoped memory for tpu_custom_call.1']
    %7 = vsyncpa [#allocation4], 0
    %s8 = scalar_lea.sflag [#allocation4], 1
    %9 = vsyncpa %s8, 0
    loop: start=0, step=1, limit=8
    $region2: #{tpu_custom_call.1} parent=1 // loop_pre_header
      _
    $region3: #{tpu_custom_call.1} parent=1 // loop_header
      %s11 = sphi 0, %s15
      %p12 = scmp.ge.s32.totalorder %s11, 8
      %s18 = sphi 0, %s30
      %s19 = sphi 0, %s26
      %s20 = sphi 0, %s18
      %s21 = sphi 0, %s19
      %s22 = sphi 0, %s20
      %s23 = sphi 0, %s21
      %s37 = sphi 0, %s39
      %s40 = sphi 0, %s37
      %s41 = sphi 0, %s40
      %s57 = sphi 0, %s41
      %s63 = sphi 0, %s65
      %s66 = sphi 0, %s63
      %s67 = sphi 0, %s66
      %s83 = sphi 0, %s67
      %s93 = sphi 0, %s95
      %s96 = sphi 0, %s93
      %s97 = sphi 0, %s96
      %s113 = sphi 0, %s97
    $region4: #{tpu_custom_call.1} parent=1 // loop_header_branch
      %14 = sbr.rel (%p12) target = $region8
    $region5: #{tpu_custom_call.1} parent=1 // loop_body
      %s16 = ssub.s32 %s11, 1
      %s17 = ssub.s32 %s11, 2
      %s24 = sadd.s32 1, %s19
      %p25 = scmp.ge.s32.totalorder %s24, 3
      %s26 = scalar_select %p25, 0, %s24
      %s27 = sadd.s32 1, %s18
      %s28 = scalar_select %p25, %s27, %s18
      %p29 = scmp.ge.s32.totalorder %s28, 2
      %s30 = scalar_select %p29, 0, %s28
      %s31 = smul.u32 %s19, 2
      %s32 = sadd.s32 %s18, %s31
      %s33 = smul.u32 %s26, 2
      %s34 = sadd.s32 %s30, %s33
      %s35 = ssub.s32 %s32, %s34
      %p36 = scmp.eq.s32.totalorder %s35, 0
      %s38 = sadd.s32 %s37, 1
      %s39 = scalar_select %p36, %s37, %s38
      %p42 = pneg %p36
      %p43 = scmp.eq.s32.totalorder %s11, 5
      %p44 = por %p42, %p43
      %p45 = scmp.ne.s32.totalorder %s37, %s40
      %p46 = scmp.eq.s32.totalorder %s11, 0
      %p47 = por %p45, %p46
      %p48 = scmp.ne.s32.totalorder %s37, %s40
      %p49 = scmp.eq.s32.totalorder %s16, 5
      %p50 = por %p48, %p49
      %p51 = scmp.ne.s32.totalorder %s40, %s41
      %p52 = scmp.eq.s32.totalorder %s16, 0
      %p53 = por %p51, %p52
      %p54 = scmp.ne.s32.totalorder %s40, %s41
      %p55 = scmp.eq.s32.totalorder %s17, 5
      %p56 = por %p54, %p55
      %p58 = scmp.ne.s32.totalorder %s41, %s57
      %p59 = scmp.eq.s32.totalorder %s17, 0
      %p60 = por %p58, %p59
      %s61 = ssub.s32 %s18, %s30
      %p62 = scmp.eq.s32.totalorder %s61, 0
      %s64 = sadd.s32 %s63, 1
      %s65 = scalar_select %p62, %s63, %s64
      %p68 = pneg %p62
      %p69 = scmp.eq.s32.totalorder %s11, 5
      %p70 = por %p68, %p69
      %p71 = scmp.ne.s32.totalorder %s63, %s66
      %p72 = scmp.eq.s32.totalorder %s11, 0
      %p73 = por %p71, %p72
      %p74 = scmp.ne.s32.totalorder %s63, %s66
      %p75 = scmp.eq.s32.totalorder %s16, 5
      %p76 = por %p74, %p75
      %p77 = scmp.ne.s32.totalorder %s66, %s67
      %p78 = scmp.eq.s32.totalorder %s16, 0
      %p79 = por %p77, %p78
      %p80 = scmp.ne.s32.totalorder %s66, %s67
      %p81 = scmp.eq.s32.totalorder %s17, 5
      %p82 = por %p80, %p81
      %p84 = scmp.ne.s32.totalorder %s67, %s83
      %p85 = scmp.eq.s32.totalorder %s17, 0
      %p86 = por %p84, %p85
      %s87 = smul.u32 %s19, 2
      %s88 = sadd.s32 %s18, %s87
      %s89 = smul.u32 %s26, 2
      %s90 = sadd.s32 %s30, %s89
      %s91 = ssub.s32 %s88, %s90
      %p92 = scmp.eq.s32.totalorder %s91, 0
      %s94 = sadd.s32 %s93, 1
      %s95 = scalar_select %p92, %s93, %s94
      %p98 = pneg %p92
      %p99 = scmp.eq.s32.totalorder %s11, 5
      %p100 = por %p98, %p99
      %p101 = scmp.ne.s32.totalorder %s93, %s96
      %p102 = scmp.eq.s32.totalorder %s11, 0
      %p103 = por %p101, %p102
      %p104 = scmp.ne.s32.totalorder %s93, %s96
      %p105 = scmp.eq.s32.totalorder %s16, 5
      %p106 = por %p104, %p105
      %p107 = scmp.ne.s32.totalorder %s96, %s97
      %p108 = scmp.eq.s32.totalorder %s16, 0
      %p109 = por %p107, %p108
      %p110 = scmp.ne.s32.totalorder %s96, %s97
      %p111 = scmp.eq.s32.totalorder %s17, 5
      %p112 = por %p110, %p111
      %p114 = scmp.ne.s32.totalorder %s97, %s113
      %p115 = scmp.eq.s32.totalorder %s17, 0
      %p116 = por %p114, %p115
      %p117 = scmp.le.s32.totalorder 1, %s11
      %p118 = scmp.lt.s32.totalorder %s11, 7
      %p119 = pnand %p117, %p118
      %p120 = pneg %p119
      // Predicated region
      $region9: #{tpu_custom_call.1} parent=5 // pred_check
        _
      $region10: #{tpu_custom_call.1} parent=5 // pred_check_branch
        %122 = sbr.rel (%p119) target = $region12
      $region11: #{tpu_custom_call.1} parent=5 // pred_region
        %s123 = ssub.s32 %s11, 1
      $region12: #{tpu_custom_call.1} parent=5 // pred_fallthru
        _
      %p124 = scmp.lt.s32.totalorder %s11, 6
      // Predicated region
      $region13: #{tpu_custom_call.1} parent=5 // pred_check
        %p125 = pneg %p124
      $region14: #{tpu_custom_call.1} parent=5 // pred_check_branch
        %127 = sbr.rel (%p125) target = $region16
      $region15: #{tpu_custom_call.1} parent=5 // pred_region
        // Predicated region
        $region17: #{tpu_custom_call.1} parent=15 // pred_check
          %p128 = pneg %p47
        $region18: #{tpu_custom_call.1} parent=15 // pred_check_branch
          %130 = sbr.rel (%p128) target = $region20
        $region19: #{tpu_custom_call.1} parent=15 // pred_region
          %s131 = smul.u32 %s19, 2
          %s132 = sadd.s32 %s18, %s131
          %p133 = scmp.lt.s32.totalorder %s132, 5
          %s134 = scalar_select %p133, %s132, 5
          %s135 = smul.addr %s134, 3
          %s136 = smul.addr %s135, 8
          %s137 = scalar_lea.vmem %s0, %s136
          %s138 = smul.u32 %s19, 2
          %s139 = sadd.s32 %s18, %s138
        $region20: #{tpu_custom_call.1} parent=15 // pred_fallthru
          _
        // Predicated region
        $region21: #{tpu_custom_call.1} parent=15 // pred_check
          %p140 = pneg %p73
        $region22: #{tpu_custom_call.1} parent=15 // pred_check_branch
          %142 = sbr.rel (%p140) target = $region24
        $region23: #{tpu_custom_call.1} parent=15 // pred_region
          %p143 = scmp.lt.s32.totalorder %s18, 1
          %s144 = scalar_select %p143, %s18, 1
          %s145 = smul.addr %s144, 98
          %s146 = smul.addr %s145, 4
          %s147 = scalar_lea.vmem %s1, %s146
        $region24: #{tpu_custom_call.1} parent=15 // pred_fallthru
          _
      $region16: #{tpu_custom_call.1} parent=5 // pred_fallthru
        _
      %p148 = scmp.le.s32.totalorder 1, %s11
      %p149 = scmp.lt.s32.totalorder %s11, 7
      %p150 = pnand %p148, %p149
      %p151 = pneg %p150
      // Predicated region
      $region25: #{tpu_custom_call.1} parent=5 // pred_check
        _
      $region26: #{tpu_custom_call.1} parent=5 // pred_check_branch
        %153 = sbr.rel (%p150) target = $region28
      $region27: #{tpu_custom_call.1} parent=5 // pred_region
        %s154 = ssub.s32 %s11, 1
        %s155 = smul.u32 %s21, 2
        %s156 = sadd.s32 %s20, %s155
        %p157 = scmp.lt.s32.totalorder %s156, 5
        %s158 = scalar_select %p157, %s156, 5
        %s159 = smul.addr %s158, 3
        %s160 = smul.addr %s159, 8
        %s161 = scalar_lea.vmem %s0, %s160
        %p162 = pneg %p53
        %p163 = pneg %p50
        %p164 = scmp.lt.s32.totalorder %s20, 1
        %s165 = scalar_select %p164, %s20, 1
        %s166 = smul.addr %s165, 98
        %s167 = smul.addr %s166, 4
        %s168 = scalar_lea.vmem %s1, %s167
        %p169 = pneg %p79
        %p170 = pneg %p76
        %p171 = pneg %p109
        %p172 = pneg %p106
        %s173 = sand.u32 %s96, 1
        %s174 = scalar_lea.sflag [#allocation4], %s173
        %s175 = sand.u32 %s96, 1
        %s176 = smul.addr %s175, 16
        %s177 = scalar_lea.vmem [#allocation3], %s176
        %s178 = smul.u32 %s21, 2
        %s179 = sadd.s32 %s20, %s178
        %p180 = scmp.lt.s32.totalorder %s179, 5
        %s181 = scalar_select %p180, %s179, 5
        %s182 = smul.addr %s181, 3
        %s183 = smul.addr %s182, 8
        %s184 = scalar_lea.vmem %s0, %s183
        %s185 = smul.u32 %s21, 2
        %s186 = sadd.s32 %s20, %s185
        %p187 = scmp.lt.s32.totalorder %s20, 1
        %s188 = scalar_select %p187, %s20, 1
        %s189 = smul.addr %s188, 98
        %s190 = smul.addr %s189, 4
        %s191 = scalar_lea.vmem %s1, %s190
        %s192 = smul.u32 %s21, 2
        %s193 = sadd.s32 %s20, %s192
        %p194 = scmp.eq.s32.totalorder %s21, 0
        // Predicated region
        $region29: #{tpu_custom_call.1} parent=27 // pred_check
          %p195 = pneg %p194
        $region30: #{tpu_custom_call.1} parent=27 // pred_check_branch
          %197 = sbr.rel (%p195) target = $region32
        $region31: #{tpu_custom_call.1} parent=27 // pred_region
          %v198 = vld [vmem:[%s191] sm:$0xf]
          %v199 = vld [vmem:[%s191 + $0x4] sm:$0xf]
          %v200 = vunpack.c.l.bf16 %v198
          %v201 = vunpack.c.l.bf16 %v199
          %vm202 = vcmask 130048
          %203 = vst.msk [vmem:[#allocation2] sm:$0xff] %vm202, %v200
          %204 = vst.msk [vmem:[#allocation2 + $0x8] sm:$0xff] %vm202, %v201
          %s205 = scalar_lea.vmem %s191, 8
          %v206 = vld [vmem:[%s205] sm:$0xf]
          %v207 = vld [vmem:[%s205 + $0x4] sm:$0xf]
          %v208 = vunpack.c.l.bf16 %v206
          %v209 = vunpack.c.l.bf16 %v207
          %s210 = scalar_lea.vmem [#allocation2], 16
          %211 = vst.msk [vmem:[%s210] sm:$0xff] %vm202, %v208
          %212 = vst.msk [vmem:[%s210 + $0x8] sm:$0xff] %vm202, %v209
          %s213 = scalar_lea.vmem %s191, 16
          %v214 = vld [vmem:[%s213] sm:$0xf]
          %v215 = vld [vmem:[%s213 + $0x4] sm:$0xf]
          %v216 = vunpack.c.l.bf16 %v214
          %v217 = vunpack.c.l.bf16 %v215
          %s218 = scalar_lea.vmem [#allocation2], 32
          %219 = vst.msk [vmem:[%s218] sm:$0xff] %vm202, %v216
          %220 = vst.msk [vmem:[%s218 + $0x8] sm:$0xff] %vm202, %v217
          %s221 = scalar_lea.vmem %s191, 24
          %v222 = vld [vmem:[%s221] sm:$0xf]
          %v223 = vld [vmem:[%s221 + $0x4] sm:$0xf]
          %v224 = vunpack.c.l.bf16 %v222
          %v225 = vunpack.c.l.bf16 %v223
          %s226 = scalar_lea.vmem [#allocation2], 48
          %227 = vst.msk [vmem:[%s226] sm:$0xff] %vm202, %v224
          %228 = vst.msk [vmem:[%s226 + $0x8] sm:$0xff] %vm202, %v225
          %s229 = scalar_lea.vmem %s191, 32
          %v230 = vld [vmem:[%s229] sm:$0xf]
          %v231 = vld [vmem:[%s229 + $0x4] sm:$0xf]
          %v232 = vunpack.c.l.bf16 %v230
          %v233 = vunpack.c.l.bf16 %v231
          %s234 = scalar_lea.vmem [#allocation2], 64
          %235 = vst.msk [vmem:[%s234] sm:$0xff] %vm202, %v232
          %236 = vst.msk [vmem:[%s234 + $0x8] sm:$0xff] %vm202, %v233
          %s237 = scalar_lea.vmem %s191, 40
          %v238 = vld [vmem:[%s237] sm:$0xf]
          %v239 = vld [vmem:[%s237 + $0x4] sm:$0xf]
          %v240 = vunpack.c.l.bf16 %v238
          %v241 = vunpack.c.l.bf16 %v239
          %s242 = scalar_lea.vmem [#allocation2], 80
          %243 = vst.msk [vmem:[%s242] sm:$0xff] %vm202, %v240
          %244 = vst.msk [vmem:[%s242 + $0x8] sm:$0xff] %vm202, %v241
          %s245 = scalar_lea.vmem %s191, 48
          %v246 = vld [vmem:[%s245] sm:$0xf]
          %v247 = vld [vmem:[%s245 + $0x4] sm:$0xf]
          %v248 = vunpack.c.l.bf16 %v246
          %v249 = vunpack.c.l.bf16 %v247
          %s250 = scalar_lea.vmem [#allocation2], 96
          %251 = vst.msk [vmem:[%s250] sm:$0xff] %vm202, %v248
          %252 = vst.msk [vmem:[%s250 + $0x8] sm:$0xff] %vm202, %v249
          %s253 = scalar_lea.vmem %s191, 56
          %v254 = vld [vmem:[%s253] sm:$0xf]
          %v255 = vld [vmem:[%s253 + $0x4] sm:$0xf]
          %v256 = vunpack.c.l.bf16 %v254
          %v257 = vunpack.c.l.bf16 %v255
          %s258 = scalar_lea.vmem [#allocation2], 112
          %259 = vst.msk [vmem:[%s258] sm:$0xff] %vm202, %v256
          %260 = vst.msk [vmem:[%s258 + $0x8] sm:$0xff] %vm202, %v257
          %s261 = scalar_lea.vmem %s191, 64
          %v262 = vld [vmem:[%s261] sm:$0xf]
          %v263 = vld [vmem:[%s261 + $0x4] sm:$0xf]
          %v264 = vunpack.c.l.bf16 %v262
          %v265 = vunpack.c.l.bf16 %v263
          %s266 = scalar_lea.vmem [#allocation2], 128
          %267 = vst.msk [vmem:[%s266] sm:$0xff] %vm202, %v264
          %268 = vst.msk [vmem:[%s266 + $0x8] sm:$0xff] %vm202, %v265
          %s269 = scalar_lea.vmem %s191, 72
          %v270 = vld [vmem:[%s269] sm:$0xf]
          %v271 = vld [vmem:[%s269 + $0x4] sm:$0xf]
          %v272 = vunpack.c.l.bf16 %v270
          %v273 = vunpack.c.l.bf16 %v271
          %s274 = scalar_lea.vmem [#allocation2], 144
          %275 = vst.msk [vmem:[%s274] sm:$0xff] %vm202, %v272
          %276 = vst.msk [vmem:[%s274 + $0x8] sm:$0xff] %vm202, %v273
          %s277 = scalar_lea.vmem %s191, 80
          %v278 = vld [vmem:[%s277] sm:$0xf]
          %v279 = vld [vmem:[%s277 + $0x4] sm:$0xf]
          %v280 = vunpack.c.l.bf16 %v278
          %v281 = vunpack.c.l.bf16 %v279
          %s282 = scalar_lea.vmem [#allocation2], 160
          %283 = vst.msk [vmem:[%s282] sm:$0xff] %vm202, %v280
          %284 = vst.msk [vmem:[%s282 + $0x8] sm:$0xff] %vm202, %v281
          %s285 = scalar_lea.vmem %s191, 88
          %v286 = vld [vmem:[%s285] sm:$0xf]
          %v287 = vld [vmem:[%s285 + $0x4] sm:$0xf]
          %v288 = vunpack.c.l.bf16 %v286
          %v289 = vunpack.c.l.bf16 %v287
          %s290 = scalar_lea.vmem [#allocation2], 176
          %291 = vst.msk [vmem:[%s290] sm:$0xff] %vm202, %v288
          %292 = vst.msk [vmem:[%s290 + $0x8] sm:$0xff] %vm202, %v289
          %s293 = scalar_lea.vmem %s191, 96
          %v294 = vld [vmem:[%s293] sm:$0xf]
          %v295 = vld [vmem:[%s293 + $0x4] sm:$0xf]
          %v296 = vunpack.c.l.bf16 %v294
          %v297 = vunpack.c.l.bf16 %v295
          %s298 = scalar_lea.vmem [#allocation2], 192
          %299 = vst.msk [vmem:[%s298] sm:$0xff] %vm202, %v296
          %300 = vst.msk [vmem:[%s298 + $0x8] sm:$0xff] %vm202, %v297
          %s301 = scalar_lea.vmem %s191, 104
          %v302 = vld [vmem:[%s301] sm:$0xf]
          %v303 = vld [vmem:[%s301 + $0x4] sm:$0xf]
          %v304 = vunpack.c.l.bf16 %v302
          %v305 = vunpack.c.l.bf16 %v303
          %s306 = scalar_lea.vmem [#allocation2], 208
          %307 = vst.msk [vmem:[%s306] sm:$0xff] %vm202, %v304
          %308 = vst.msk [vmem:[%s306 + $0x8] sm:$0xff] %vm202, %v305
          %s309 = scalar_lea.vmem %s191, 112
          %v310 = vld [vmem:[%s309] sm:$0xf]
          %v311 = vld [vmem:[%s309 + $0x4] sm:$0xf]
          %v312 = vunpack.c.l.bf16 %v310
          %v313 = vunpack.c.l.bf16 %v311
          %s314 = scalar_lea.vmem [#allocation2], 224
          %315 = vst.msk [vmem:[%s314] sm:$0xff] %vm202, %v312
          %316 = vst.msk [vmem:[%s314 + $0x8] sm:$0xff] %vm202, %v313
          %s317 = scalar_lea.vmem %s191, 120
          %v318 = vld [vmem:[%s317] sm:$0xf]
          %v319 = vld [vmem:[%s317 + $0x4] sm:$0xf]
          %v320 = vunpack.c.l.bf16 %v318
          %v321 = vunpack.c.l.bf16 %v319
          %s322 = scalar_lea.vmem [#allocation2], 240
          %323 = vst.msk [vmem:[%s322] sm:$0xff] %vm202, %v320
          %324 = vst.msk [vmem:[%s322 + $0x8] sm:$0xff] %vm202, %v321
          %s325 = scalar_lea.vmem %s191, 128
          %v326 = vld [vmem:[%s325] sm:$0xf]
          %v327 = vld [vmem:[%s325 + $0x4] sm:$0xf]
          %v328 = vunpack.c.l.bf16 %v326
          %v329 = vunpack.c.l.bf16 %v327
          %s330 = scalar_lea.vmem [#allocation2], 256
          %331 = vst.msk [vmem:[%s330] sm:$0xff] %vm202, %v328
          %332 = vst.msk [vmem:[%s330 + $0x8] sm:$0xff] %vm202, %v329
          %s333 = scalar_lea.vmem %s191, 136
          %v334 = vld [vmem:[%s333] sm:$0xf]
          %v335 = vld [vmem:[%s333 + $0x4] sm:$0xf]
          %v336 = vunpack.c.l.bf16 %v334
          %v337 = vunpack.c.l.bf16 %v335
          %s338 = scalar_lea.vmem [#allocation2], 272
          %339 = vst.msk [vmem:[%s338] sm:$0xff] %vm202, %v336
          %340 = vst.msk [vmem:[%s338 + $0x8] sm:$0xff] %vm202, %v337
          %s341 = scalar_lea.vmem %s191, 144
          %v342 = vld [vmem:[%s341] sm:$0xf]
          %v343 = vld [vmem:[%s341 + $0x4] sm:$0xf]
          %v344 = vunpack.c.l.bf16 %v342
          %v345 = vunpack.c.l.bf16 %v343
          %s346 = scalar_lea.vmem [#allocation2], 288
          %347 = vst.msk [vmem:[%s346] sm:$0xff] %vm202, %v344
          %348 = vst.msk [vmem:[%s346 + $0x8] sm:$0xff] %vm202, %v345
          %s349 = scalar_lea.vmem %s191, 152
          %v350 = vld [vmem:[%s349] sm:$0xf]
          %v351 = vld [vmem:[%s349 + $0x4] sm:$0xf]
          %v352 = vunpack.c.l.bf16 %v350
          %v353 = vunpack.c.l.bf16 %v351
          %s354 = scalar_lea.vmem [#allocation2], 304
          %355 = vst.msk [vmem:[%s354] sm:$0xff] %vm202, %v352
          %356 = vst.msk [vmem:[%s354 + $0x8] sm:$0xff] %vm202, %v353
          %s357 = scalar_lea.vmem %s191, 160
          %v358 = vld [vmem:[%s357] sm:$0xf]
          %v359 = vld [vmem:[%s357 + $0x4] sm:$0xf]
          %v360 = vunpack.c.l.bf16 %v358
          %v361 = vunpack.c.l.bf16 %v359
          %s362 = scalar_lea.vmem [#allocation2], 320
          %363 = vst.msk [vmem:[%s362] sm:$0xff] %vm202, %v360
          %364 = vst.msk [vmem:[%s362 + $0x8] sm:$0xff] %vm202, %v361
          %s365 = scalar_lea.vmem %s191, 168
          %v366 = vld [vmem:[%s365] sm:$0xf]
          %v367 = vld [vmem:[%s365 + $0x4] sm:$0xf]
          %v368 = vunpack.c.l.bf16 %v366
          %v369 = vunpack.c.l.bf16 %v367
          %s370 = scalar_lea.vmem [#allocation2], 336
          %371 = vst.msk [vmem:[%s370] sm:$0xff] %vm202, %v368
          %372 = vst.msk [vmem:[%s370 + $0x8] sm:$0xff] %vm202, %v369
          %s373 = scalar_lea.vmem %s191, 176
          %v374 = vld [vmem:[%s373] sm:$0xf]
          %v375 = vld [vmem:[%s373 + $0x4] sm:$0xf]
          %v376 = vunpack.c.l.bf16 %v374
          %v377 = vunpack.c.l.bf16 %v375
          %s378 = scalar_lea.vmem [#allocation2], 352
          %379 = vst.msk [vmem:[%s378] sm:$0xff] %vm202, %v376
          %380 = vst.msk [vmem:[%s378 + $0x8] sm:$0xff] %vm202, %v377
          %s381 = scalar_lea.vmem %s191, 184
          %v382 = vld [vmem:[%s381] sm:$0xf]
          %v383 = vld [vmem:[%s381 + $0x4] sm:$0xf]
          %v384 = vunpack.c.l.bf16 %v382
          %v385 = vunpack.c.l.bf16 %v383
          %s386 = scalar_lea.vmem [#allocation2], 368
          %387 = vst.msk [vmem:[%s386] sm:$0xff] %vm202, %v384
          %388 = vst.msk [vmem:[%s386 + $0x8] sm:$0xff] %vm202, %v385
          %s389 = scalar_lea.vmem %s191, 192
          %v390 = vld [vmem:[%s389] sm:$0xf]
          %v391 = vld [vmem:[%s389 + $0x4] sm:$0xf]
          %v392 = vunpack.c.l.bf16 %v390
          %v393 = vunpack.c.l.bf16 %v391
          %s394 = scalar_lea.vmem [#allocation2], 384
          %395 = vst.msk [vmem:[%s394] sm:$0xff] %vm202, %v392
          %396 = vst.msk [vmem:[%s394 + $0x8] sm:$0xff] %vm202, %v393
          %s397 = scalar_lea.vmem %s191, 200
          %v398 = vld [vmem:[%s397] sm:$0xf]
          %v399 = vld [vmem:[%s397 + $0x4] sm:$0xf]
          %v400 = vunpack.c.l.bf16 %v398
          %v401 = vunpack.c.l.bf16 %v399
          %s402 = scalar_lea.vmem [#allocation2], 400
          %403 = vst.msk [vmem:[%s402] sm:$0xff] %vm202, %v400
          %404 = vst.msk [vmem:[%s402 + $0x8] sm:$0xff] %vm202, %v401
          %s405 = scalar_lea.vmem %s191, 208
          %v406 = vld [vmem:[%s405] sm:$0xf]
          %v407 = vld [vmem:[%s405 + $0x4] sm:$0xf]
          %v408 = vunpack.c.l.bf16 %v406
          %v409 = vunpack.c.l.bf16 %v407
          %s410 = scalar_lea.vmem [#allocation2], 416
          %411 = vst.msk [vmem:[%s410] sm:$0xff] %vm202, %v408
          %412 = vst.msk [vmem:[%s410 + $0x8] sm:$0xff] %vm202, %v409
          %s413 = scalar_lea.vmem %s191, 216
          %v414 = vld [vmem:[%s413] sm:$0xf]
          %v415 = vld [vmem:[%s413 + $0x4] sm:$0xf]
          %v416 = vunpack.c.l.bf16 %v414
          %v417 = vunpack.c.l.bf16 %v415
          %s418 = scalar_lea.vmem [#allocation2], 432
          %419 = vst.msk [vmem:[%s418] sm:$0xff] %vm202, %v416
          %420 = vst.msk [vmem:[%s418 + $0x8] sm:$0xff] %vm202, %v417
          %s421 = scalar_lea.vmem %s191, 224
          %v422 = vld [vmem:[%s421] sm:$0xf]
          %v423 = vld [vmem:[%s421 + $0x4] sm:$0xf]
          %v424 = vunpack.c.l.bf16 %v422
          %v425 = vunpack.c.l.bf16 %v423
          %s426 = scalar_lea.vmem [#allocation2], 448
          %427 = vst.msk [vmem:[%s426] sm:$0xff] %vm202, %v424
          %428 = vst.msk [vmem:[%s426 + $0x8] sm:$0xff] %vm202, %v425
          %s429 = scalar_lea.vmem %s191, 232
          %v430 = vld [vmem:[%s429] sm:$0xf]
          %v431 = vld [vmem:[%s429 + $0x4] sm:$0xf]
          %v432 = vunpack.c.l.bf16 %v430
          %v433 = vunpack.c.l.bf16 %v431
          %s434 = scalar_lea.vmem [#allocation2], 464
          %435 = vst.msk [vmem:[%s434] sm:$0xff] %vm202, %v432
          %436 = vst.msk [vmem:[%s434 + $0x8] sm:$0xff] %vm202, %v433
          %s437 = scalar_lea.vmem %s191, 240
          %v438 = vld [vmem:[%s437] sm:$0xf]
          %v439 = vld [vmem:[%s437 + $0x4] sm:$0xf]
          %v440 = vunpack.c.l.bf16 %v438
          %v441 = vunpack.c.l.bf16 %v439
          %s442 = scalar_lea.vmem [#allocation2], 480
          %443 = vst.msk [vmem:[%s442] sm:$0xff] %vm202, %v440
          %444 = vst.msk [vmem:[%s442 + $0x8] sm:$0xff] %vm202, %v441
          %s445 = scalar_lea.vmem %s191, 248
          %v446 = vld [vmem:[%s445] sm:$0xf]
          %v447 = vld [vmem:[%s445 + $0x4] sm:$0xf]
          %v448 = vunpack.c.l.bf16 %v446
          %v449 = vunpack.c.l.bf16 %v447
          %s450 = scalar_lea.vmem [#allocation2], 496
          %451 = vst.msk [vmem:[%s450] sm:$0xff] %vm202, %v448
          %452 = vst.msk [vmem:[%s450 + $0x8] sm:$0xff] %vm202, %v449
          %s453 = scalar_lea.vmem %s191, 256
          %v454 = vld [vmem:[%s453] sm:$0xf]
          %v455 = vld [vmem:[%s453 + $0x4] sm:$0xf]
          %v456 = vunpack.c.l.bf16 %v454
          %v457 = vunpack.c.l.bf16 %v455
          %s458 = scalar_lea.vmem [#allocation2], 512
          %459 = vst.msk [vmem:[%s458] sm:$0xff] %vm202, %v456
          %460 = vst.msk [vmem:[%s458 + $0x8] sm:$0xff] %vm202, %v457
          %s461 = scalar_lea.vmem %s191, 264
          %v462 = vld [vmem:[%s461] sm:$0xf]
          %v463 = vld [vmem:[%s461 + $0x4] sm:$0xf]
          %v464 = vunpack.c.l.bf16 %v462
          %v465 = vunpack.c.l.bf16 %v463
          %s466 = scalar_lea.vmem [#allocation2], 528
          %467 = vst.msk [vmem:[%s466] sm:$0xff] %vm202, %v464
          %468 = vst.msk [vmem:[%s466 + $0x8] sm:$0xff] %vm202, %v465
          %s469 = scalar_lea.vmem %s191, 272
          %v470 = vld [vmem:[%s469] sm:$0xf]
          %v471 = vld [vmem:[%s469 + $0x4] sm:$0xf]
          %v472 = vunpack.c.l.bf16 %v470
          %v473 = vunpack.c.l.bf16 %v471
          %s474 = scalar_lea.vmem [#allocation2], 544
          %475 = vst.msk [vmem:[%s474] sm:$0xff] %vm202, %v472
          %476 = vst.msk [vmem:[%s474 + $0x8] sm:$0xff] %vm202, %v473
          %s477 = scalar_lea.vmem %s191, 280
          %v478 = vld [vmem:[%s477] sm:$0xf]
          %v479 = vld [vmem:[%s477 + $0x4] sm:$0xf]
          %v480 = vunpack.c.l.bf16 %v478
          %v481 = vunpack.c.l.bf16 %v479
          %s482 = scalar_lea.vmem [#allocation2], 560
          %483 = vst.msk [vmem:[%s482] sm:$0xff] %vm202, %v480
          %484 = vst.msk [vmem:[%s482 + $0x8] sm:$0xff] %vm202, %v481
          %s485 = scalar_lea.vmem %s191, 288
          %v486 = vld [vmem:[%s485] sm:$0xf]
          %v487 = vld [vmem:[%s485 + $0x4] sm:$0xf]
          %v488 = vunpack.c.l.bf16 %v486
          %v489 = vunpack.c.l.bf16 %v487
          %s490 = scalar_lea.vmem [#allocation2], 576
          %491 = vst.msk [vmem:[%s490] sm:$0xff] %vm202, %v488
          %492 = vst.msk [vmem:[%s490 + $0x8] sm:$0xff] %vm202, %v489
          %s493 = scalar_lea.vmem %s191, 296
          %v494 = vld [vmem:[%s493] sm:$0xf]
          %v495 = vld [vmem:[%s493 + $0x4] sm:$0xf]
          %v496 = vunpack.c.l.bf16 %v494
          %v497 = vunpack.c.l.bf16 %v495
          %s498 = scalar_lea.vmem [#allocation2], 592
          %499 = vst.msk [vmem:[%s498] sm:$0xff] %vm202, %v496
          %500 = vst.msk [vmem:[%s498 + $0x8] sm:$0xff] %vm202, %v497
          %s501 = scalar_lea.vmem %s191, 304
          %v502 = vld [vmem:[%s501] sm:$0xf]
          %v503 = vld [vmem:[%s501 + $0x4] sm:$0xf]
          %v504 = vunpack.c.l.bf16 %v502
          %v505 = vunpack.c.l.bf16 %v503
          %s506 = scalar_lea.vmem [#allocation2], 608
          %507 = vst.msk [vmem:[%s506] sm:$0xff] %vm202, %v504
          %508 = vst.msk [vmem:[%s506 + $0x8] sm:$0xff] %vm202, %v505
          %s509 = scalar_lea.vmem %s191, 312
          %v510 = vld [vmem:[%s509] sm:$0xf]
          %v511 = vld [vmem:[%s509 + $0x4] sm:$0xf]
          %v512 = vunpack.c.l.bf16 %v510
          %v513 = vunpack.c.l.bf16 %v511
          %s514 = scalar_lea.vmem [#allocation2], 624
          %515 = vst.msk [vmem:[%s514] sm:$0xff] %vm202, %v512
          %516 = vst.msk [vmem:[%s514 + $0x8] sm:$0xff] %vm202, %v513
          %s517 = scalar_lea.vmem %s191, 320
          %v518 = vld [vmem:[%s517] sm:$0xf]
          %v519 = vld [vmem:[%s517 + $0x4] sm:$0xf]
          %v520 = vunpack.c.l.bf16 %v518
          %v521 = vunpack.c.l.bf16 %v519
          %s522 = scalar_lea.vmem [#allocation2], 640
          %523 = vst.msk [vmem:[%s522] sm:$0xff] %vm202, %v520
          %524 = vst.msk [vmem:[%s522 + $0x8] sm:$0xff] %vm202, %v521
          %s525 = scalar_lea.vmem %s191, 328
          %v526 = vld [vmem:[%s525] sm:$0xf]
          %v527 = vld [vmem:[%s525 + $0x4] sm:$0xf]
          %v528 = vunpack.c.l.bf16 %v526
          %v529 = vunpack.c.l.bf16 %v527
          %s530 = scalar_lea.vmem [#allocation2], 656
          %531 = vst.msk [vmem:[%s530] sm:$0xff] %vm202, %v528
          %532 = vst.msk [vmem:[%s530 + $0x8] sm:$0xff] %vm202, %v529
          %s533 = scalar_lea.vmem %s191, 336
          %v534 = vld [vmem:[%s533] sm:$0xf]
          %v535 = vld [vmem:[%s533 + $0x4] sm:$0xf]
          %v536 = vunpack.c.l.bf16 %v534
          %v537 = vunpack.c.l.bf16 %v535
          %s538 = scalar_lea.vmem [#allocation2], 672
          %539 = vst.msk [vmem:[%s538] sm:$0xff] %vm202, %v536
          %540 = vst.msk [vmem:[%s538 + $0x8] sm:$0xff] %vm202, %v537
          %s541 = scalar_lea.vmem %s191, 344
          %v542 = vld [vmem:[%s541] sm:$0xf]
          %v543 = vld [vmem:[%s541 + $0x4] sm:$0xf]
          %v544 = vunpack.c.l.bf16 %v542
          %v545 = vunpack.c.l.bf16 %v543
          %s546 = scalar_lea.vmem [#allocation2], 688
          %547 = vst.msk [vmem:[%s546] sm:$0xff] %vm202, %v544
          %548 = vst.msk [vmem:[%s546 + $0x8] sm:$0xff] %vm202, %v545
          %s549 = scalar_lea.vmem %s191, 352
          %v550 = vld [vmem:[%s549] sm:$0xf]
          %v551 = vld [vmem:[%s549 + $0x4] sm:$0xf]
          %v552 = vunpack.c.l.bf16 %v550
          %v553 = vunpack.c.l.bf16 %v551
          %s554 = scalar_lea.vmem [#allocation2], 704
          %555 = vst.msk [vmem:[%s554] sm:$0xff] %vm202, %v552
          %556 = vst.msk [vmem:[%s554 + $0x8] sm:$0xff] %vm202, %v553
          %s557 = scalar_lea.vmem %s191, 360
          %v558 = vld [vmem:[%s557] sm:$0xf]
          %v559 = vld [vmem:[%s557 + $0x4] sm:$0xf]
          %v560 = vunpack.c.l.bf16 %v558
          %v561 = vunpack.c.l.bf16 %v559
          %s562 = scalar_lea.vmem [#allocation2], 720
          %563 = vst.msk [vmem:[%s562] sm:$0xff] %vm202, %v560
          %564 = vst.msk [vmem:[%s562 + $0x8] sm:$0xff] %vm202, %v561
          %s565 = scalar_lea.vmem %s191, 368
          %v566 = vld [vmem:[%s565] sm:$0xf]
          %v567 = vld [vmem:[%s565 + $0x4] sm:$0xf]
          %v568 = vunpack.c.l.bf16 %v566
          %v569 = vunpack.c.l.bf16 %v567
          %s570 = scalar_lea.vmem [#allocation2], 736
          %571 = vst.msk [vmem:[%s570] sm:$0xff] %vm202, %v568
          %572 = vst.msk [vmem:[%s570 + $0x8] sm:$0xff] %vm202, %v569
          %s573 = scalar_lea.vmem %s191, 376
          %v574 = vld [vmem:[%s573] sm:$0xf]
          %v575 = vld [vmem:[%s573 + $0x4] sm:$0xf]
          %v576 = vunpack.c.l.bf16 %v574
          %v577 = vunpack.c.l.bf16 %v575
          %s578 = scalar_lea.vmem [#allocation2], 752
          %579 = vst.msk [vmem:[%s578] sm:$0xff] %vm202, %v576
          %580 = vst.msk [vmem:[%s578 + $0x8] sm:$0xff] %vm202, %v577
          %s581 = scalar_lea.vmem %s191, 384
          %v582 = vld [vmem:[%s581] sm:$0xf]
          %v583 = vld [vmem:[%s581 + $0x4] sm:$0xf]
          %v584 = vunpack.c.l.bf16 %v582
          %v585 = vunpack.c.l.bf16 %v583
          %s586 = scalar_lea.vmem [#allocation2], 768
          %587 = vst.msk [vmem:[%s586] sm:$0xff] %vm202, %v584
          %588 = vst.msk [vmem:[%s586 + $0x8] sm:$0xff] %vm202, %v585
        $region32: #{tpu_custom_call.1} parent=27 // pred_fallthru
          _
        %v589 = vld [vmem:[%s184] sm:$0xff]
        %v590 = vld [vmem:[%s184 + $0x8] sm:$0xff]
        %v591 = vld [vmem:[#allocation2] sm:$0xff]
        %v592 = vld [vmem:[#allocation2 + $0x8] sm:$0xff]
        %v593 = vmul.f32 %v589, %v591
        %v594 = vmul.f32 %v590, %v592
        %v595 = vadd.f32 %v593, 0.0
        %v596 = vadd.f32 %v594, 0.0
        %597 = vrot.lane.b32.xlu0 %v589, 127
        %v598 = vpop.permute.xlu0 %597
        %599 = vrot.lane.b32.xlu0 %v590, 127
        %v600 = vpop.permute.xlu0 %599
        %s601 = scalar_lea.vmem [#allocation2], 16
        %v602 = vld [vmem:[%s601] sm:$0xff]
        %v603 = vld [vmem:[%s601 + $0x8] sm:$0xff]
        %v604 = vmul.f32 %v598, %v602
        %v605 = vmul.f32 %v600, %v603
        %v606 = vadd.f32 %v604, 0.0
        %v607 = vadd.f32 %v605, 0.0
        %608 = vrot.lane.b32.xlu0 %v589, 126
        %v609 = vpop.permute.xlu0 %608
        %610 = vrot.lane.b32.xlu0 %v590, 126
        %v611 = vpop.permute.xlu0 %610
        %s612 = scalar_lea.vmem [#allocation2], 32
        %v613 = vld [vmem:[%s612] sm:$0xff]
        %v614 = vld [vmem:[%s612 + $0x8] sm:$0xff]
        %v615 = vmul.f32 %v609, %v613
        %v616 = vmul.f32 %v611, %v614
        %v617 = vadd.f32 %v615, 0.0
        %v618 = vadd.f32 %v616, 0.0
        %619 = vrot.lane.b32.xlu0 %v589, 125
        %v620 = vpop.permute.xlu0 %619
        %621 = vrot.lane.b32.xlu0 %v590, 125
        %v622 = vpop.permute.xlu0 %621
        %s623 = scalar_lea.vmem [#allocation2], 48
        %v624 = vld [vmem:[%s623] sm:$0xff]
        %v625 = vld [vmem:[%s623 + $0x8] sm:$0xff]
        %v626 = vmul.f32 %v620, %v624
        %v627 = vmul.f32 %v622, %v625
        %v628 = vadd.f32 %v626, 0.0
        %v629 = vadd.f32 %v627, 0.0
        %630 = vrot.lane.b32.xlu0 %v589, 124
        %v631 = vpop.permute.xlu0 %630
        %632 = vrot.lane.b32.xlu0 %v590, 124
        %v633 = vpop.permute.xlu0 %632
        %s634 = scalar_lea.vmem [#allocation2], 64
        %v635 = vld [vmem:[%s634] sm:$0xff]
        %v636 = vld [vmem:[%s634 + $0x8] sm:$0xff]
        %v637 = vmul.f32 %v631, %v635
        %v638 = vmul.f32 %v633, %v636
        %v639 = vadd.f32 %v595, %v637
        %v640 = vadd.f32 %v596, %v638
        %641 = vrot.lane.b32.xlu0 %v589, 123
        %v642 = vpop.permute.xlu0 %641
        %643 = vrot.lane.b32.xlu0 %v590, 123
        %v644 = vpop.permute.xlu0 %643
        %s645 = scalar_lea.vmem [#allocation2], 80
        %v646 = vld [vmem:[%s645] sm:$0xff]
        %v647 = vld [vmem:[%s645 + $0x8] sm:$0xff]
        %v648 = vmul.f32 %v642, %v646
        %v649 = vmul.f32 %v644, %v647
        %v650 = vadd.f32 %v606, %v648
        %v651 = vadd.f32 %v607, %v649
        %652 = vrot.lane.b32.xlu0 %v589, 122
        %v653 = vpop.permute.xlu0 %652
        %654 = vrot.lane.b32.xlu0 %v590, 122
        %v655 = vpop.permute.xlu0 %654
        %s656 = scalar_lea.vmem [#allocation2], 96
        %v657 = vld [vmem:[%s656] sm:$0xff]
        %v658 = vld [vmem:[%s656 + $0x8] sm:$0xff]
        %v659 = vmul.f32 %v653, %v657
        %v660 = vmul.f32 %v655, %v658
        %v661 = vadd.f32 %v617, %v659
        %v662 = vadd.f32 %v618, %v660
        %v663 = vld [vmem:[%s184 + $0x1] sm:$0xff]
        %v664 = vld [vmem:[%s184 + $0x9] sm:$0xff]
        %s665 = scalar_lea.vmem [#allocation2], 112
        %v666 = vld [vmem:[%s665] sm:$0xff]
        %v667 = vld [vmem:[%s665 + $0x8] sm:$0xff]
        %v668 = vmul.f32 %v663, %v666
        %v669 = vmul.f32 %v664, %v667
        %v670 = vadd.f32 %v628, %v668
        %v671 = vadd.f32 %v629, %v669
        %672 = vrot.lane.b32.xlu0 %v663, 127
        %v673 = vpop.permute.xlu0 %672
        %674 = vrot.lane.b32.xlu0 %v664, 127
        %v675 = vpop.permute.xlu0 %674
        %s676 = scalar_lea.vmem [#allocation2], 128
        %v677 = vld [vmem:[%s676] sm:$0xff]
        %v678 = vld [vmem:[%s676 + $0x8] sm:$0xff]
        %v679 = vmul.f32 %v673, %v677
        %v680 = vmul.f32 %v675, %v678
        %v681 = vadd.f32 %v639, %v679
        %v682 = vadd.f32 %v640, %v680
        %683 = vrot.lane.b32.xlu0 %v663, 126
        %v684 = vpop.permute.xlu0 %683
        %685 = vrot.lane.b32.xlu0 %v664, 126
        %v686 = vpop.permute.xlu0 %685
        %s687 = scalar_lea.vmem [#allocation2], 144
        %v688 = vld [vmem:[%s687] sm:$0xff]
        %v689 = vld [vmem:[%s687 + $0x8] sm:$0xff]
        %v690 = vmul.f32 %v684, %v688
        %v691 = vmul.f32 %v686, %v689
        %v692 = vadd.f32 %v650, %v690
        %v693 = vadd.f32 %v651, %v691
        %694 = vrot.lane.b32.xlu0 %v663, 125
        %v695 = vpop.permute.xlu0 %694
        %696 = vrot.lane.b32.xlu0 %v664, 125
        %v697 = vpop.permute.xlu0 %696
        %s698 = scalar_lea.vmem [#allocation2], 160
        %v699 = vld [vmem:[%s698] sm:$0xff]
        %v700 = vld [vmem:[%s698 + $0x8] sm:$0xff]
        %v701 = vmul.f32 %v695, %v699
        %v702 = vmul.f32 %v697, %v700
        %v703 = vadd.f32 %v661, %v701
        %v704 = vadd.f32 %v662, %v702
        %705 = vrot.lane.b32.xlu0 %v663, 124
        %v706 = vpop.permute.xlu0 %705
        %707 = vrot.lane.b32.xlu0 %v664, 124
        %v708 = vpop.permute.xlu0 %707
        %s709 = scalar_lea.vmem [#allocation2], 176
        %v710 = vld [vmem:[%s709] sm:$0xff]
        %v711 = vld [vmem:[%s709 + $0x8] sm:$0xff]
        %v712 = vmul.f32 %v706, %v710
        %v713 = vmul.f32 %v708, %v711
        %v714 = vadd.f32 %v670, %v712
        %v715 = vadd.f32 %v671, %v713
        %716 = vrot.lane.b32.xlu0 %v663, 123
        %v717 = vpop.permute.xlu0 %716
        %718 = vrot.lane.b32.xlu0 %v664, 123
        %v719 = vpop.permute.xlu0 %718
        %s720 = scalar_lea.vmem [#allocation2], 192
        %v721 = vld [vmem:[%s720] sm:$0xff]
        %v722 = vld [vmem:[%s720 + $0x8] sm:$0xff]
        %v723 = vmul.f32 %v717, %v721
        %v724 = vmul.f32 %v719, %v722
        %v725 = vadd.f32 %v681, %v723
        %v726 = vadd.f32 %v682, %v724
        %727 = vrot.lane.b32.xlu0 %v663, 122
        %v728 = vpop.permute.xlu0 %727
        %729 = vrot.lane.b32.xlu0 %v664, 122
        %v730 = vpop.permute.xlu0 %729
        %s731 = scalar_lea.vmem [#allocation2], 208
        %v732 = vld [vmem:[%s731] sm:$0xff]
        %v733 = vld [vmem:[%s731 + $0x8] sm:$0xff]
        %v734 = vmul.f32 %v728, %v732
        %v735 = vmul.f32 %v730, %v733
        %v736 = vadd.f32 %v692, %v734
        %v737 = vadd.f32 %v693, %v735
        %v738 = vld [vmem:[%s184 + $0x2] sm:$0xff]
        %v739 = vld [vmem:[%s184 + $0xa] sm:$0xff]
        %s740 = scalar_lea.vmem [#allocation2], 224
        %v741 = vld [vmem:[%s740] sm:$0xff]
        %v742 = vld [vmem:[%s740 + $0x8] sm:$0xff]
        %v743 = vmul.f32 %v738, %v741
        %v744 = vmul.f32 %v739, %v742
        %v745 = vadd.f32 %v703, %v743
        %v746 = vadd.f32 %v704, %v744
        %747 = vrot.lane.b32.xlu0 %v738, 127
        %v748 = vpop.permute.xlu0 %747
        %749 = vrot.lane.b32.xlu0 %v739, 127
        %v750 = vpop.permute.xlu0 %749
        %s751 = scalar_lea.vmem [#allocation2], 240
        %v752 = vld [vmem:[%s751] sm:$0xff]
        %v753 = vld [vmem:[%s751 + $0x8] sm:$0xff]
        %v754 = vmul.f32 %v748, %v752
        %v755 = vmul.f32 %v750, %v753
        %v756 = vadd.f32 %v714, %v754
        %v757 = vadd.f32 %v715, %v755
        %758 = vrot.lane.b32.xlu0 %v738, 126
        %v759 = vpop.permute.xlu0 %758
        %760 = vrot.lane.b32.xlu0 %v739, 126
        %v761 = vpop.permute.xlu0 %760
        %s762 = scalar_lea.vmem [#allocation2], 256
        %v763 = vld [vmem:[%s762] sm:$0xff]
        %v764 = vld [vmem:[%s762 + $0x8] sm:$0xff]
        %v765 = vmul.f32 %v759, %v763
        %v766 = vmul.f32 %v761, %v764
        %v767 = vadd.f32 %v725, %v765
        %v768 = vadd.f32 %v726, %v766
        %769 = vrot.lane.b32.xlu0 %v738, 125
        %v770 = vpop.permute.xlu0 %769
        %771 = vrot.lane.b32.xlu0 %v739, 125
        %v772 = vpop.permute.xlu0 %771
        %s773 = scalar_lea.vmem [#allocation2], 272
        %v774 = vld [vmem:[%s773] sm:$0xff]
        %v775 = vld [vmem:[%s773 + $0x8] sm:$0xff]
        %v776 = vmul.f32 %v770, %v774
        %v777 = vmul.f32 %v772, %v775
        %v778 = vadd.f32 %v736, %v776
        %v779 = vadd.f32 %v737, %v777
        %780 = vrot.lane.b32.xlu0 %v738, 124
        %v781 = vpop.permute.xlu0 %780
        %782 = vrot.lane.b32.xlu0 %v739, 124
        %v783 = vpop.permute.xlu0 %782
        %s784 = scalar_lea.vmem [#allocation2], 288
        %v785 = vld [vmem:[%s784] sm:$0xff]
        %v786 = vld [vmem:[%s784 + $0x8] sm:$0xff]
        %v787 = vmul.f32 %v781, %v785
        %v788 = vmul.f32 %v783, %v786
        %v789 = vadd.f32 %v745, %v787
        %v790 = vadd.f32 %v746, %v788
        %791 = vrot.lane.b32.xlu0 %v738, 123
        %v792 = vpop.permute.xlu0 %791
        %793 = vrot.lane.b32.xlu0 %v739, 123
        %v794 = vpop.permute.xlu0 %793
        %s795 = scalar_lea.vmem [#allocation2], 304
        %v796 = vld [vmem:[%s795] sm:$0xff]
        %v797 = vld [vmem:[%s795 + $0x8] sm:$0xff]
        %v798 = vmul.f32 %v792, %v796
        %v799 = vmul.f32 %v794, %v797
        %v800 = vadd.f32 %v756, %v798
        %v801 = vadd.f32 %v757, %v799
        %802 = vrot.lane.b32.xlu0 %v738, 122
        %v803 = vpop.permute.xlu0 %802
        %804 = vrot.lane.b32.xlu0 %v739, 122
        %v805 = vpop.permute.xlu0 %804
        %s806 = scalar_lea.vmem [#allocation2], 320
        %v807 = vld [vmem:[%s806] sm:$0xff]
        %v808 = vld [vmem:[%s806 + $0x8] sm:$0xff]
        %v809 = vmul.f32 %v803, %v807
        %v810 = vmul.f32 %v805, %v808
        %v811 = vadd.f32 %v767, %v809
        %v812 = vadd.f32 %v768, %v810
        %v813 = vld [vmem:[%s184 + $0x3] sm:$0xff]
        %v814 = vld [vmem:[%s184 + $0xb] sm:$0xff]
        %s815 = scalar_lea.vmem [#allocation2], 336
        %v816 = vld [vmem:[%s815] sm:$0xff]
        %v817 = vld [vmem:[%s815 + $0x8] sm:$0xff]
        %v818 = vmul.f32 %v813, %v816
        %v819 = vmul.f32 %v814, %v817
        %v820 = vadd.f32 %v778, %v818
        %v821 = vadd.f32 %v779, %v819
        %822 = vrot.lane.b32.xlu0 %v813, 127
        %v823 = vpop.permute.xlu0 %822
        %824 = vrot.lane.b32.xlu0 %v814, 127
        %v825 = vpop.permute.xlu0 %824
        %s826 = scalar_lea.vmem [#allocation2], 352
        %v827 = vld [vmem:[%s826] sm:$0xff]
        %v828 = vld [vmem:[%s826 + $0x8] sm:$0xff]
        %v829 = vmul.f32 %v823, %v827
        %v830 = vmul.f32 %v825, %v828
        %v831 = vadd.f32 %v789, %v829
        %v832 = vadd.f32 %v790, %v830
        %833 = vrot.lane.b32.xlu0 %v813, 126
        %v834 = vpop.permute.xlu0 %833
        %835 = vrot.lane.b32.xlu0 %v814, 126
        %v836 = vpop.permute.xlu0 %835
        %s837 = scalar_lea.vmem [#allocation2], 368
        %v838 = vld [vmem:[%s837] sm:$0xff]
        %v839 = vld [vmem:[%s837 + $0x8] sm:$0xff]
        %v840 = vmul.f32 %v834, %v838
        %v841 = vmul.f32 %v836, %v839
        %v842 = vadd.f32 %v800, %v840
        %v843 = vadd.f32 %v801, %v841
        %844 = vrot.lane.b32.xlu0 %v813, 125
        %v845 = vpop.permute.xlu0 %844
        %846 = vrot.lane.b32.xlu0 %v814, 125
        %v847 = vpop.permute.xlu0 %846
        %s848 = scalar_lea.vmem [#allocation2], 384
        %v849 = vld [vmem:[%s848] sm:$0xff]
        %v850 = vld [vmem:[%s848 + $0x8] sm:$0xff]
        %v851 = vmul.f32 %v845, %v849
        %v852 = vmul.f32 %v847, %v850
        %v853 = vadd.f32 %v811, %v851
        %v854 = vadd.f32 %v812, %v852
        %855 = vrot.lane.b32.xlu0 %v813, 124
        %v856 = vpop.permute.xlu0 %855
        %857 = vrot.lane.b32.xlu0 %v814, 124
        %v858 = vpop.permute.xlu0 %857
        %s859 = scalar_lea.vmem [#allocation2], 400
        %v860 = vld [vmem:[%s859] sm:$0xff]
        %v861 = vld [vmem:[%s859 + $0x8] sm:$0xff]
        %v862 = vmul.f32 %v856, %v860
        %v863 = vmul.f32 %v858, %v861
        %v864 = vadd.f32 %v820, %v862
        %v865 = vadd.f32 %v821, %v863
        %866 = vrot.lane.b32.xlu0 %v813, 123
        %v867 = vpop.permute.xlu0 %866
        %868 = vrot.lane.b32.xlu0 %v814, 123
        %v869 = vpop.permute.xlu0 %868
        %s870 = scalar_lea.vmem [#allocation2], 416
        %v871 = vld [vmem:[%s870] sm:$0xff]
        %v872 = vld [vmem:[%s870 + $0x8] sm:$0xff]
        %v873 = vmul.f32 %v867, %v871
        %v874 = vmul.f32 %v869, %v872
        %v875 = vadd.f32 %v831, %v873
        %v876 = vadd.f32 %v832, %v874
        %877 = vrot.lane.b32.xlu0 %v813, 122
        %v878 = vpop.permute.xlu0 %877
        %879 = vrot.lane.b32.xlu0 %v814, 122
        %v880 = vpop.permute.xlu0 %879
        %s881 = scalar_lea.vmem [#allocation2], 432
        %v882 = vld [vmem:[%s881] sm:$0xff]
        %v883 = vld [vmem:[%s881 + $0x8] sm:$0xff]
        %v884 = vmul.f32 %v878, %v882
        %v885 = vmul.f32 %v880, %v883
        %v886 = vadd.f32 %v842, %v884
        %v887 = vadd.f32 %v843, %v885
        %v888 = vld [vmem:[%s184 + $0x4] sm:$0xff]
        %v889 = vld [vmem:[%s184 + $0xc] sm:$0xff]
        %s890 = scalar_lea.vmem [#allocation2], 448
        %v891 = vld [vmem:[%s890] sm:$0xff]
        %v892 = vld [vmem:[%s890 + $0x8] sm:$0xff]
        %v893 = vmul.f32 %v888, %v891
        %v894 = vmul.f32 %v889, %v892
        %v895 = vadd.f32 %v853, %v893
        %v896 = vadd.f32 %v854, %v894
        %897 = vrot.lane.b32.xlu0 %v888, 127
        %v898 = vpop.permute.xlu0 %897
        %899 = vrot.lane.b32.xlu0 %v889, 127
        %v900 = vpop.permute.xlu0 %899
        %s901 = scalar_lea.vmem [#allocation2], 464
        %v902 = vld [vmem:[%s901] sm:$0xff]
        %v903 = vld [vmem:[%s901 + $0x8] sm:$0xff]
        %v904 = vmul.f32 %v898, %v902
        %v905 = vmul.f32 %v900, %v903
        %v906 = vadd.f32 %v864, %v904
        %v907 = vadd.f32 %v865, %v905
        %908 = vrot.lane.b32.xlu0 %v888, 126
        %v909 = vpop.permute.xlu0 %908
        %910 = vrot.lane.b32.xlu0 %v889, 126
        %v911 = vpop.permute.xlu0 %910
        %s912 = scalar_lea.vmem [#allocation2], 480
        %v913 = vld [vmem:[%s912] sm:$0xff]
        %v914 = vld [vmem:[%s912 + $0x8] sm:$0xff]
        %v915 = vmul.f32 %v909, %v913
        %v916 = vmul.f32 %v911, %v914
        %v917 = vadd.f32 %v875, %v915
        %v918 = vadd.f32 %v876, %v916
        %919 = vrot.lane.b32.xlu0 %v888, 125
        %v920 = vpop.permute.xlu0 %919
        %921 = vrot.lane.b32.xlu0 %v889, 125
        %v922 = vpop.permute.xlu0 %921
        %s923 = scalar_lea.vmem [#allocation2], 496
        %v924 = vld [vmem:[%s923] sm:$0xff]
        %v925 = vld [vmem:[%s923 + $0x8] sm:$0xff]
        %v926 = vmul.f32 %v920, %v924
        %v927 = vmul.f32 %v922, %v925
        %v928 = vadd.f32 %v886, %v926
        %v929 = vadd.f32 %v887, %v927
        %930 = vrot.lane.b32.xlu0 %v888, 124
        %v931 = vpop.permute.xlu0 %930
        %932 = vrot.lane.b32.xlu0 %v889, 124
        %v933 = vpop.permute.xlu0 %932
        %s934 = scalar_lea.vmem [#allocation2], 512
        %v935 = vld [vmem:[%s934] sm:$0xff]
        %v936 = vld [vmem:[%s934 + $0x8] sm:$0xff]
        %v937 = vmul.f32 %v931, %v935
        %v938 = vmul.f32 %v933, %v936
        %v939 = vadd.f32 %v895, %v937
        %v940 = vadd.f32 %v896, %v938
        %941 = vrot.lane.b32.xlu0 %v888, 123
        %v942 = vpop.permute.xlu0 %941
        %943 = vrot.lane.b32.xlu0 %v889, 123
        %v944 = vpop.permute.xlu0 %943
        %s945 = scalar_lea.vmem [#allocation2], 528
        %v946 = vld [vmem:[%s945] sm:$0xff]
        %v947 = vld [vmem:[%s945 + $0x8] sm:$0xff]
        %v948 = vmul.f32 %v942, %v946
        %v949 = vmul.f32 %v944, %v947
        %v950 = vadd.f32 %v906, %v948
        %v951 = vadd.f32 %v907, %v949
        %952 = vrot.lane.b32.xlu0 %v888, 122
        %v953 = vpop.permute.xlu0 %952
        %954 = vrot.lane.b32.xlu0 %v889, 122
        %v955 = vpop.permute.xlu0 %954
        %s956 = scalar_lea.vmem [#allocation2], 544
        %v957 = vld [vmem:[%s956] sm:$0xff]
        %v958 = vld [vmem:[%s956 + $0x8] sm:$0xff]
        %v959 = vmul.f32 %v953, %v957
        %v960 = vmul.f32 %v955, %v958
        %v961 = vadd.f32 %v917, %v959
        %v962 = vadd.f32 %v918, %v960
        %v963 = vld [vmem:[%s184 + $0x5] sm:$0xff]
        %v964 = vld [vmem:[%s184 + $0xd] sm:$0xff]
        %s965 = scalar_lea.vmem [#allocation2], 560
        %v966 = vld [vmem:[%s965] sm:$0xff]
        %v967 = vld [vmem:[%s965 + $0x8] sm:$0xff]
        %v968 = vmul.f32 %v963, %v966
        %v969 = vmul.f32 %v964, %v967
        %v970 = vadd.f32 %v928, %v968
        %v971 = vadd.f32 %v929, %v969
        %972 = vrot.lane.b32.xlu0 %v963, 127
        %v973 = vpop.permute.xlu0 %972
        %974 = vrot.lane.b32.xlu0 %v964, 127
        %v975 = vpop.permute.xlu0 %974
        %s976 = scalar_lea.vmem [#allocation2], 576
        %v977 = vld [vmem:[%s976] sm:$0xff]
        %v978 = vld [vmem:[%s976 + $0x8] sm:$0xff]
        %v979 = vmul.f32 %v973, %v977
        %v980 = vmul.f32 %v975, %v978
        %v981 = vadd.f32 %v939, %v979
        %v982 = vadd.f32 %v940, %v980
        %983 = vrot.lane.b32.xlu0 %v963, 126
        %v984 = vpop.permute.xlu0 %983
        %985 = vrot.lane.b32.xlu0 %v964, 126
        %v986 = vpop.permute.xlu0 %985
        %s987 = scalar_lea.vmem [#allocation2], 592
        %v988 = vld [vmem:[%s987] sm:$0xff]
        %v989 = vld [vmem:[%s987 + $0x8] sm:$0xff]
        %v990 = vmul.f32 %v984, %v988
        %v991 = vmul.f32 %v986, %v989
        %v992 = vadd.f32 %v950, %v990
        %v993 = vadd.f32 %v951, %v991
        %994 = vrot.lane.b32.xlu0 %v963, 125
        %v995 = vpop.permute.xlu0 %994
        %996 = vrot.lane.b32.xlu0 %v964, 125
        %v997 = vpop.permute.xlu0 %996
        %s998 = scalar_lea.vmem [#allocation2], 608
        %v999 = vld [vmem:[%s998] sm:$0xff]
        %v1000 = vld [vmem:[%s998 + $0x8] sm:$0xff]
        %v1001 = vmul.f32 %v995, %v999
        %v1002 = vmul.f32 %v997, %v1000
        %v1003 = vadd.f32 %v961, %v1001
        %v1004 = vadd.f32 %v962, %v1002
        %1005 = vrot.lane.b32.xlu0 %v963, 124
        %v1006 = vpop.permute.xlu0 %1005
        %1007 = vrot.lane.b32.xlu0 %v964, 124
        %v1008 = vpop.permute.xlu0 %1007
        %s1009 = scalar_lea.vmem [#allocation2], 624
        %v1010 = vld [vmem:[%s1009] sm:$0xff]
        %v1011 = vld [vmem:[%s1009 + $0x8] sm:$0xff]
        %v1012 = vmul.f32 %v1006, %v1010
        %v1013 = vmul.f32 %v1008, %v1011
        %v1014 = vadd.f32 %v970, %v1012
        %v1015 = vadd.f32 %v971, %v1013
        %1016 = vrot.lane.b32.xlu0 %v963, 123
        %v1017 = vpop.permute.xlu0 %1016
        %1018 = vrot.lane.b32.xlu0 %v964, 123
        %v1019 = vpop.permute.xlu0 %1018
        %s1020 = scalar_lea.vmem [#allocation2], 640
        %v1021 = vld [vmem:[%s1020] sm:$0xff]
        %v1022 = vld [vmem:[%s1020 + $0x8] sm:$0xff]
        %v1023 = vmul.f32 %v1017, %v1021
        %v1024 = vmul.f32 %v1019, %v1022
        %v1025 = vadd.f32 %v981, %v1023
        %v1026 = vadd.f32 %v982, %v1024
        %1027 = vrot.lane.b32.xlu0 %v963, 122
        %v1028 = vpop.permute.xlu0 %1027
        %1029 = vrot.lane.b32.xlu0 %v964, 122
        %v1030 = vpop.permute.xlu0 %1029
        %s1031 = scalar_lea.vmem [#allocation2], 656
        %v1032 = vld [vmem:[%s1031] sm:$0xff]
        %v1033 = vld [vmem:[%s1031 + $0x8] sm:$0xff]
        %v1034 = vmul.f32 %v1028, %v1032
        %v1035 = vmul.f32 %v1030, %v1033
        %v1036 = vadd.f32 %v992, %v1034
        %v1037 = vadd.f32 %v993, %v1035
        %v1038 = vld [vmem:[%s184 + $0x6] sm:$0xff]
        %v1039 = vld [vmem:[%s184 + $0xe] sm:$0xff]
        %s1040 = scalar_lea.vmem [#allocation2], 672
        %v1041 = vld [vmem:[%s1040] sm:$0xff]
        %v1042 = vld [vmem:[%s1040 + $0x8] sm:$0xff]
        %v1043 = vmul.f32 %v1038, %v1041
        %v1044 = vmul.f32 %v1039, %v1042
        %v1045 = vadd.f32 %v1003, %v1043
        %v1046 = vadd.f32 %v1004, %v1044
        %1047 = vrot.lane.b32.xlu0 %v1038, 127
        %v1048 = vpop.permute.xlu0 %1047
        %1049 = vrot.lane.b32.xlu0 %v1039, 127
        %v1050 = vpop.permute.xlu0 %1049
        %s1051 = scalar_lea.vmem [#allocation2], 688
        %v1052 = vld [vmem:[%s1051] sm:$0xff]
        %v1053 = vld [vmem:[%s1051 + $0x8] sm:$0xff]
        %v1054 = vmul.f32 %v1048, %v1052
        %v1055 = vmul.f32 %v1050, %v1053
        %v1056 = vadd.f32 %v1014, %v1054
        %v1057 = vadd.f32 %v1015, %v1055
        %1058 = vrot.lane.b32.xlu0 %v1038, 126
        %v1059 = vpop.permute.xlu0 %1058
        %1060 = vrot.lane.b32.xlu0 %v1039, 126
        %v1061 = vpop.permute.xlu0 %1060
        %s1062 = scalar_lea.vmem [#allocation2], 704
        %v1063 = vld [vmem:[%s1062] sm:$0xff]
        %v1064 = vld [vmem:[%s1062 + $0x8] sm:$0xff]
        %v1065 = vmul.f32 %v1059, %v1063
        %v1066 = vmul.f32 %v1061, %v1064
        %v1067 = vadd.f32 %v1025, %v1065
        %v1068 = vadd.f32 %v1026, %v1066
        %1069 = vrot.lane.b32.xlu0 %v1038, 125
        %v1070 = vpop.permute.xlu0 %1069
        %1071 = vrot.lane.b32.xlu0 %v1039, 125
        %v1072 = vpop.permute.xlu0 %1071
        %s1073 = scalar_lea.vmem [#allocation2], 720
        %v1074 = vld [vmem:[%s1073] sm:$0xff]
        %v1075 = vld [vmem:[%s1073 + $0x8] sm:$0xff]
        %v1076 = vmul.f32 %v1070, %v1074
        %v1077 = vmul.f32 %v1072, %v1075
        %v1078 = vadd.f32 %v1036, %v1076
        %v1079 = vadd.f32 %v1037, %v1077
        %1080 = vrot.lane.b32.xlu0 %v1038, 124
        %v1081 = vpop.permute.xlu0 %1080
        %1082 = vrot.lane.b32.xlu0 %v1039, 124
        %v1083 = vpop.permute.xlu0 %1082
        %s1084 = scalar_lea.vmem [#allocation2], 736
        %v1085 = vld [vmem:[%s1084] sm:$0xff]
        %v1086 = vld [vmem:[%s1084 + $0x8] sm:$0xff]
        %v1087 = vmul.f32 %v1081, %v1085
        %v1088 = vmul.f32 %v1083, %v1086
        %v1089 = vadd.f32 %v1045, %v1087
        %v1090 = vadd.f32 %v1046, %v1088
        %1091 = vrot.lane.b32.xlu0 %v1038, 123
        %v1092 = vpop.permute.xlu0 %1091
        %1093 = vrot.lane.b32.xlu0 %v1039, 123
        %v1094 = vpop.permute.xlu0 %1093
        %s1095 = scalar_lea.vmem [#allocation2], 752
        %v1096 = vld [vmem:[%s1095] sm:$0xff]
        %v1097 = vld [vmem:[%s1095 + $0x8] sm:$0xff]
        %v1098 = vmul.f32 %v1092, %v1096
        %v1099 = vmul.f32 %v1094, %v1097
        %v1100 = vadd.f32 %v1056, %v1098
        %v1101 = vadd.f32 %v1057, %v1099
        %1102 = vrot.lane.b32.xlu0 %v1038, 122
        %v1103 = vpop.permute.xlu0 %1102
        %1104 = vrot.lane.b32.xlu0 %v1039, 122
        %v1105 = vpop.permute.xlu0 %1104
        %s1106 = scalar_lea.vmem [#allocation2], 768
        %v1107 = vld [vmem:[%s1106] sm:$0xff]
        %v1108 = vld [vmem:[%s1106 + $0x8] sm:$0xff]
        %v1109 = vmul.f32 %v1103, %v1107
        %v1110 = vmul.f32 %v1105, %v1108
        %v1111 = vadd.f32 %v1067, %v1109
        %v1112 = vadd.f32 %v1068, %v1110
        %v1113 = vadd.f32 %v1111, %v1078
        %v1114 = vadd.f32 %v1112, %v1079
        %v1115 = vadd.f32 %v1089, %v1100
        %v1116 = vadd.f32 %v1090, %v1101
        %v1117 = vadd.f32 %v1113, %v1115
        %v1118 = vadd.f32 %v1114, %v1116
        %vm1119 = vcmask 130048
        %1120 = vst.msk [vmem:[%s177] sm:$0xff] %vm1119, %v1117
        %1121 = vst.msk [vmem:[%s177 + $0x8] sm:$0xff] %vm1119, %v1118
        %s1122 = sand.u32 %s96, 1
        %s1123 = scalar_lea.sflag [#allocation4], %s1122
        %s1124 = sand.u32 %s96, 1
        %s1125 = smul.addr %s1124, 16
        %s1126 = scalar_lea.vmem [#allocation3], %s1125
        // Predicated region
        $region33: #{tpu_custom_call.1} parent=27 // pred_check
          %p1127 = pneg %p106
        $region34: #{tpu_custom_call.1} parent=27 // pred_check_branch
          %1129 = sbr.rel (%p1127) target = $region36
        $region35: #{tpu_custom_call.1} parent=27 // pred_region
          %s1130 = smul.u32 %s21, 2
          %s1131 = sadd.s32 %s20, %s1130
          %s1133 = ssub.s32 256, 256
          %1134 = vsyncadd %s1123, %s1133
          %s1135 = smul.addr %s1131, 2
          %s1136 = smul.addr %s1135, 128
          %s1137 = scalar_lea.hbm %s2, %s1136
          %s1138 = sshll.u32 %s1126, 4
          %s1139 = int_to_ptr.vmem [resolvable:$true] %s1138
          %1144 = dma.vmem_to_hbm [thread:$0]  %s1139, 256, %s1137, %s1123, 128, 128, 8
        $region36: #{tpu_custom_call.1} parent=27 // pred_fallthru
          _
      $region28: #{tpu_custom_call.1} parent=5 // pred_fallthru
        _
      %p1145 = scmp.le.s32.totalorder 2, %s11
      // Predicated region
      $region37: #{tpu_custom_call.1} parent=5 // pred_check
        %p1146 = pneg %p1145
      $region38: #{tpu_custom_call.1} parent=5 // pred_check_branch
        %1148 = sbr.rel (%p1146) target = $region40
      $region39: #{tpu_custom_call.1} parent=5 // pred_region
        %s1149 = ssub.s32 %s11, 2
        // Predicated region
        $region41: #{tpu_custom_call.1} parent=39 // pred_check
          %p1150 = pneg %p112
        $region42: #{tpu_custom_call.1} parent=39 // pred_check_branch
          %1152 = sbr.rel (%p1150) target = $region44
        $region43: #{tpu_custom_call.1} parent=39 // pred_region
          %s1153 = sand.u32 %s97, 1
          %s1154 = scalar_lea.sflag [#allocation4], %s1153
          %s1155 = sand.u32 %s97, 1
          %s1156 = smul.addr %s1155, 16
          %s1157 = scalar_lea.vmem [#allocation3], %s1156
          %1158 = dma.done %s1154, 256
        $region44: #{tpu_custom_call.1} parent=39 // pred_fallthru
          _
      $region40: #{tpu_custom_call.1} parent=5 // pred_fallthru
        _
    $region6: #{tpu_custom_call.1} parent=1 // loop_footer
      %s15 = sadd.s32 1, %s11
    $region7: #{tpu_custom_call.1} parent=1 // loop_footer_branch
      %10 = sbr.rel target = $region3
    $region8: #{tpu_custom_call.1} parent=1 // loop_exit
      _
    %1159 = vsyncpa [#allocation4], 1
    %s1160 = scalar_lea.sflag [#allocation4], 1
    %1161 = vsyncpa %s1160, 1

</llo_original>
